<compile_context>
chip_gen: v6e
topology: v6e:2x2x1
jax: 0.10.0
libtpu: 0.0.40
codegen_flags: <defaults>
</compile_context>

<pallas_src>
from functools import partial

import jax
import jax.numpy as jnp
from jax.experimental import pallas as pl
from jax.experimental.pallas import tpu as pltpu


# ----------------------------------------------------------------------------
# Tiling helper
# ----------------------------------------------------------------------------
def _pick_tm(M, tm_max=1024):
    """M-tile size: big enough to amortize the ~0.35us per-grid-step overhead,
    but keep >= 2 grid steps when M allows (v7x has 2 TensorCores and the
    'parallel' grid axis is what shards across them).  Multiples of 256 keep
    the MXU cadence and bf16 (16,128) sublane packing clean."""
    if M >= 2 * tm_max:
        return tm_max
    if M >= 512:
        return max(256, (M // 2) // 256 * 256)
    # tiny M: a single tile rounded up to the bf16 sublane tile (16 rows);
    # the partial tail is masked by Pallas.
    return min(max(16, pl.cdiv(M, 16) * 16), tm_max)


# ----------------------------------------------------------------------------
# Fused kernel:  o = ((x @ w1 + b1) @ w2 + b2)   -- two 1x1 convs, one pass
# ----------------------------------------------------------------------------
_HIDDEN_CHUNK = 512  # chunk of the 2048-wide hidden axis kept live at a time


def _fused_conv1x1_kernel(x_ref, w1_ref, b1_ref, w2_ref, b2_ref, o_ref):
    """One M tile of conv2(conv1(x)).  The (tm, hidden) intermediate lives
    only in VMEM/vregs; it is never written back to HBM."""
    x = x_ref[...]                                    # (tm, C_in) bf16
    hidden = w1_ref.shape[1]
    chunk = _HIDDEN_CHUNK if hidden % _HIDDEN_CHUNK == 0 else hidden
    acc = jnp.zeros(o_ref.shape, jnp.float32)         # (tm, C_out) f32
    for c in range(hidden // chunk):                  # short static loop (4 iters)
        hs = pl.ds(c * chunk, chunk)
        h = jnp.dot(x, w1_ref[:, hs], preferred_element_type=jnp.float32)
        h = (h + b1_ref[:, hs]).astype(jnp.bfloat16)  # layer4 chunk, bf16 in VMEM
        acc = acc + jnp.dot(h, w2_ref[hs, :], preferred_element_type=jnp.float32)
    o_ref[...] = (acc + b2_ref[...]).astype(o_ref.dtype)


def fused_double_conv1x1(x2d, w1_t, b1_2d, w2_t, b2_2d, *, tm=None,
                         out_dtype=jnp.float32):
    """y = (x @ w1 + b1) @ w2 + b2 on a flattened (M, C_in) NHWC activation.

    Implements Conv2d(C_in, hidden, 1) followed by Conv2d(hidden, C_out, 1)
    without materializing the (M, hidden) intermediate in HBM."""
    M, C_in = x2d.shape
    hidden = w1_t.shape[1]
    C_out = w2_t.shape[1]

    if tm is None:
        tm = _pick_tm(M)
    grid = (pl.cdiv(M, tm),)           # no explicit pad: tail block is masked

    xb = x2d.astype(jnp.bfloat16)

    return pl.pallas_call(
        _fused_conv1x1_kernel,
        out_shape=jax.ShapeDtypeStruct((M, C_out), out_dtype),
        grid_spec=pltpu.PrefetchScalarGridSpec(
            num_scalar_prefetch=0,
            grid=grid,
            in_specs=[
                pl.BlockSpec((tm, C_in), lambda i: (i, 0)),       # X streamed over M
                pl.BlockSpec((C_in, hidden), lambda i: (0, 0)),   # W1 resident
                pl.BlockSpec((1, hidden), lambda i: (0, 0)),      # b1 resident
                pl.BlockSpec((hidden, C_out), lambda i: (0, 0)),  # W2 resident
                pl.BlockSpec((1, C_out), lambda i: (0, 0)),       # b2 resident
            ],
            out_specs=pl.BlockSpec((tm, C_out), lambda i: (i, 0)),
        ),
        compiler_params=pltpu.CompilerParams(
            # Independent M tiles: shard across TensorCores (load-bearing on v7x).
            dimension_semantics=("parallel",),
        ),
    )(xb, w1_t, b1_2d, w2_t, b2_2d)


# ----------------------------------------------------------------------------
# Standalone 1x1-conv kernel (fallback when fusion does not apply)
# ----------------------------------------------------------------------------
def _conv1x1_kernel(x_ref, w_ref, b_ref, o_ref):
    acc = jnp.dot(x_ref[...], w_ref[...], preferred_element_type=jnp.float32)
    o_ref[...] = (acc + b_ref[...]).astype(o_ref.dtype)


def conv1x1_pallas_2d(x2d, w_t, b_2d, *, tm=None, out_dtype=jnp.float32):
    """nn.Conv2d(C_in, C_out, 1, 1) on a flattened (M, C_in) NHWC activation."""
    M, C_in = x2d.shape
    C_out = w_t.shape[1]
    if tm is None:
        tm = _pick_tm(M)
    grid = (pl.cdiv(M, tm),)
    xb = x2d.astype(jnp.bfloat16)
    return pl.pallas_call(
        _conv1x1_kernel,
        out_shape=jax.ShapeDtypeStruct((M, C_out), out_dtype),
        grid_spec=pltpu.PrefetchScalarGridSpec(
            num_scalar_prefetch=0,
            grid=grid,
            in_specs=[
                pl.BlockSpec((tm, C_in), lambda i: (i, 0)),
                pl.BlockSpec((C_in, C_out), lambda i: (0, 0)),
                pl.BlockSpec((1, C_out), lambda i: (0, 0)),
            ],
            out_specs=pl.BlockSpec((tm, C_out), lambda i: (i, 0)),
        ),
        compiler_params=pltpu.CompilerParams(dimension_semantics=("parallel",)),
    )(xb, w_t, b_2d)


# ----------------------------------------------------------------------------
# Parameters
# ----------------------------------------------------------------------------
def make_params(key, c_in, attention_channel, num_classes=10):
    k1, k2, k3, k4, k5, k6 = jax.random.split(key, 6)
    s = 0.02
    return {
        # synthetic submodule stand-in ("layer4" producing 2048 channels, "fc")
        "layer4_w": s * jax.random.normal(k1, (2048, c_in), jnp.float32),
        "layer4_b": s * jax.random.normal(k2, (2048,), jnp.float32),
        "fc_w": s * jax.random.normal(k3, (num_classes, 2048), jnp.float32),
        "fc_b": s * jax.random.normal(k4, (num_classes,), jnp.float32),
        # FeatureExtractor_v2.conv : Conv2d(2048, attention_channel, 1, 1)
        "conv_w": s * jax.random.normal(k5, (attention_channel, 2048), jnp.float32),
        "conv_b": s * jax.random.normal(k6, (attention_channel,), jnp.float32),
    }


def prepare_kernel_params(params):
    """One-time weight prep: transpose to (C_in, C_out), cast to bf16, reshape
    biases to (1, C) f32 — so no per-call transpose/cast passes on the hot path."""
    return {
        "layer4_wT": jnp.transpose(params["layer4_w"]).astype(jnp.bfloat16),
        "layer4_b2d": params["layer4_b"].reshape(1, -1).astype(jnp.float32),
        "conv_wT": jnp.transpose(params["conv_w"]).astype(jnp.bfloat16),
        "conv_b2d": params["conv_b"].reshape(1, -1).astype(jnp.float32),
        "fc_w": params["fc_w"],
        "fc_b": params["fc_b"],
    }


# ----------------------------------------------------------------------------
# Forward (mirrors FeatureExtractor_v2.forward)
# ----------------------------------------------------------------------------
def _feature_extractor_v2_forward(kparams, x, extracted_layers=("layer4",)):
    """Activations stay in (M, C) = (N*H*W, C) NHWC-flat layout internally;
    NCHW transposes happen only once at each model boundary."""
    N, C_in, H, W = x.shape
    M = N * H * W
    x2d = jnp.transpose(x, (0, 2, 3, 1)).reshape(M, C_in)

    # TODO(synk): the real `submodule` is an arbitrary user-supplied network
    # (e.g. a ResNet); it is modeled by a deterministic stand-in whose
    # extracted layer yields the 2048-channel map `self.conv` expects.
    def layer4(t2d):
        # Unfused copy of the stand-in layer.  It only feeds the (unused)
        # avgpool/fc tail of the loop below and is DCE'd under jit; the hot
        # copy is fused into the Pallas kernel that produces the return value.
        return t2d @ kparams["layer4_wT"].astype(jnp.float32) + kparams["layer4_b2d"]

    def avgpool(t2d):
        return t2d.reshape(N, H * W, -1).mean(axis=1)

    def fc(t):
        return t @ kparams["fc_w"].T + kparams["fc_b"]

    named_modules = (("layer4", layer4), ("avgpool", avgpool), ("fc", fc))

    outputs = []
    cur = x2d
    for name, module in named_modules:
        if name == "fc":
            cur = cur.reshape(N, -1)
        cur = module(cur)
        if name in extracted_layers:
            outputs.append(cur)

    # outputs = self.conv(outputs[0])
    if extracted_layers and extracted_layers[0] == "layer4":
        # Hot path: outputs[0] == layer4(x2d), so self.conv is evaluated fused
        # with layer4 in one Pallas kernel — the (M, 2048) map never hits HBM.
        out2d = fused_double_conv1x1(
            x2d,
            kparams["layer4_wT"], kparams["layer4_b2d"],
            kparams["conv_wT"], kparams["conv_b2d"],
        )
    else:
        out2d = conv1x1_pallas_2d(outputs[0], kparams["conv_wT"], kparams["conv_b2d"])

    C_out = out2d.shape[1]
    return jnp.transpose(out2d.reshape(N, H, W, C_out), (0, 3, 1, 2))


feature_extractor_v2_forward = jax.jit(
    _feature_extractor_v2_forward, static_argnames=("extracted_layers",))


# ----------------------------------------------------------------------------
if __name__ == "__main__":
    key = jax.random.PRNGKey(0)
    kx, kp = jax.random.split(key)

    # Small input consistent with the module: NCHW; stand-in submodule lifts
    # 4 channels -> 2048 channels before the extracted 1x1 conv.
    N, C_in, H, W = 2, 4, 16, 16
    attention_channel = 128
    x = jax.random.normal(kx, (N, C_in, H, W), jnp.float32)

    params = make_params(kp, C_in, attention_channel)
    kparams = prepare_kernel_params(params)

    out = feature_extractor_v2_forward(kparams, x, extracted_layers=("layer4",))
    out = jax.block_until_ready(out)
    assert out.shape == (N, attention_channel, H, W), out.shape

    # Reference check in plain f32 JAX.  Kernel operands are bf16 with f32
    # accumulation (intermediate held bf16 in VMEM), so tolerance is loosened.
    feat = jnp.einsum("oc,nchw->nohw", params["layer4_w"], x) \
        + params["layer4_b"][None, :, None, None]
    ref = jnp.einsum("oc,nchw->nohw", params["conv_w"], feat) \
        + params["conv_b"][None, :, None, None]
    assert jnp.allclose(out, ref, atol=1e-2, rtol=5e-2), \
        float(jnp.max(jnp.abs(out - ref)))

    print("KERNEL_OK")
</pallas_src>

<mosaic_0001>
module attributes {stable_mosaic.version = 11 : i64} {
  func.func @_fused_conv1x1_kernel(%arg0: i32, %arg1: memref<256x4xbf16, #tpu.memory_space<vmem>>, %arg2: memref<4x2048xbf16, #tpu.memory_space<vmem>>, %arg3: memref<1x2048xf32, #tpu.memory_space<vmem>>, %arg4: memref<2048x128xbf16, #tpu.memory_space<vmem>>, %arg5: memref<1x128xf32, #tpu.memory_space<vmem>>, %arg6: memref<256x128xf32, #tpu.memory_space<vmem>>) attributes {dimension_semantics = [#tpu.dimension_semantics<parallel>], iteration_bounds = array<i64: 2>, scalar_prefetch = 0 : i64, scratch_operands = 0 : i64, tpu.core_type = #tpu.core_type<tc>, window_params = [{transform_indices = @transform_0, window_bounds = array<i64: 256, 4>}, {pipeline_mode = #tpu.pipeline_mode<synchronous>, transform_indices = @transform_1, window_bounds = array<i64: 4, 2048>}, {pipeline_mode = #tpu.pipeline_mode<synchronous>, transform_indices = @transform_2, window_bounds = array<i64: 1, 2048>}, {pipeline_mode = #tpu.pipeline_mode<synchronous>, transform_indices = @transform_3, window_bounds = array<i64: 2048, 128>}, {pipeline_mode = #tpu.pipeline_mode<synchronous>, transform_indices = @transform_4, window_bounds = array<i64: 1, 128>}, {transform_indices = @transform_5, window_bounds = array<i64: 256, 128>}]} {
    %c0 = arith.constant 0 : index
    %c0_0 = arith.constant 0 : index
    %0 = vector.load %arg1[%c0, %c0_0] : memref<256x4xbf16, #tpu.memory_space<vmem>>, vector<256x4xbf16>
    %cst = arith.constant 0.000000e+00 : f32
    %1 = vector.broadcast %cst : f32 to vector<256x128xf32>
    %c0_1 = arith.constant 0 : index
    %c0_2 = arith.constant 0 : index
    %2 = vector.load %arg2[%c0_1, %c0_2] : memref<4x2048xbf16, #tpu.memory_space<vmem>>, vector<4x512xbf16>
    %cst_3 = arith.constant dense<0.000000e+00> : vector<256x512xf32>
    %3 = tpu.matmul %0, %2, %cst_3 {dimension_numbers = #tpu.dot_dimension_numbers<[1], [0], [0], [1], [0, 0, 1, 1], [], []>} : vector<256x4xbf16>, vector<4x512xbf16>, vector<256x512xf32> -> vector<256x512xf32>
    %c0_4 = arith.constant 0 : index
    %c0_5 = arith.constant 0 : index
    %4 = vector.load %arg3[%c0_4, %c0_5] : memref<1x2048xf32, #tpu.memory_space<vmem>>, vector<1x512xf32>
    %5 = vector.broadcast %4 : vector<1x512xf32> to vector<256x512xf32>
    %6 = arith.addf %3, %5 : vector<256x512xf32>
    %7 = arith.truncf %6 : vector<256x512xf32> to vector<256x512xbf16>
    %c0_6 = arith.constant 0 : index
    %c0_7 = arith.constant 0 : index
    %8 = vector.load %arg4[%c0_6, %c0_7] : memref<2048x128xbf16, #tpu.memory_space<vmem>>, vector<512x128xbf16>
    %cst_8 = arith.constant dense<0.000000e+00> : vector<256x128xf32>
    %9 = tpu.matmul %7, %8, %cst_8 {dimension_numbers = #tpu.dot_dimension_numbers<[1], [0], [0], [1], [0, 0, 1, 1], [], []>} : vector<256x512xbf16>, vector<512x128xbf16>, vector<256x128xf32> -> vector<256x128xf32>
    %10 = arith.addf %1, %9 : vector<256x128xf32>
    %c0_9 = arith.constant 0 : index
    %c512 = arith.constant 512 : index
    %11 = vector.load %arg2[%c0_9, %c512] : memref<4x2048xbf16, #tpu.memory_space<vmem>>, vector<4x512xbf16>
    %cst_10 = arith.constant dense<0.000000e+00> : vector<256x512xf32>
    %12 = tpu.matmul %0, %11, %cst_10 {dimension_numbers = #tpu.dot_dimension_numbers<[1], [0], [0], [1], [0, 0, 1, 1], [], []>} : vector<256x4xbf16>, vector<4x512xbf16>, vector<256x512xf32> -> vector<256x512xf32>
    %c0_11 = arith.constant 0 : index
    %c512_12 = arith.constant 512 : index
    %13 = vector.load %arg3[%c0_11, %c512_12] : memref<1x2048xf32, #tpu.memory_space<vmem>>, vector<1x512xf32>
    %14 = vector.broadcast %13 : vector<1x512xf32> to vector<256x512xf32>
    %15 = arith.addf %12, %14 : vector<256x512xf32>
    %16 = arith.truncf %15 : vector<256x512xf32> to vector<256x512xbf16>
    %c512_13 = arith.constant 512 : index
    %c0_14 = arith.constant 0 : index
    %17 = vector.load %arg4[%c512_13, %c0_14] : memref<2048x128xbf16, #tpu.memory_space<vmem>>, vector<512x128xbf16>
    %cst_15 = arith.constant dense<0.000000e+00> : vector<256x128xf32>
    %18 = tpu.matmul %16, %17, %cst_15 {dimension_numbers = #tpu.dot_dimension_numbers<[1], [0], [0], [1], [0, 0, 1, 1], [], []>} : vector<256x512xbf16>, vector<512x128xbf16>, vector<256x128xf32> -> vector<256x128xf32>
    %19 = arith.addf %10, %18 : vector<256x128xf32>
    %c0_16 = arith.constant 0 : index
    %c1024 = arith.constant 1024 : index
    %20 = vector.load %arg2[%c0_16, %c1024] : memref<4x2048xbf16, #tpu.memory_space<vmem>>, vector<4x512xbf16>
    %cst_17 = arith.constant dense<0.000000e+00> : vector<256x512xf32>
    %21 = tpu.matmul %0, %20, %cst_17 {dimension_numbers = #tpu.dot_dimension_numbers<[1], [0], [0], [1], [0, 0, 1, 1], [], []>} : vector<256x4xbf16>, vector<4x512xbf16>, vector<256x512xf32> -> vector<256x512xf32>
    %c0_18 = arith.constant 0 : index
    %c1024_19 = arith.constant 1024 : index
    %22 = vector.load %arg3[%c0_18, %c1024_19] : memref<1x2048xf32, #tpu.memory_space<vmem>>, vector<1x512xf32>
    %23 = vector.broadcast %22 : vector<1x512xf32> to vector<256x512xf32>
    %24 = arith.addf %21, %23 : vector<256x512xf32>
    %25 = arith.truncf %24 : vector<256x512xf32> to vector<256x512xbf16>
    %c1024_20 = arith.constant 1024 : index
    %c0_21 = arith.constant 0 : index
    %26 = vector.load %arg4[%c1024_20, %c0_21] : memref<2048x128xbf16, #tpu.memory_space<vmem>>, vector<512x128xbf16>
    %cst_22 = arith.constant dense<0.000000e+00> : vector<256x128xf32>
    %27 = tpu.matmul %25, %26, %cst_22 {dimension_numbers = #tpu.dot_dimension_numbers<[1], [0], [0], [1], [0, 0, 1, 1], [], []>} : vector<256x512xbf16>, vector<512x128xbf16>, vector<256x128xf32> -> vector<256x128xf32>
    %28 = arith.addf %19, %27 : vector<256x128xf32>
    %c0_23 = arith.constant 0 : index
    %c1536 = arith.constant 1536 : index
    %29 = vector.load %arg2[%c0_23, %c1536] : memref<4x2048xbf16, #tpu.memory_space<vmem>>, vector<4x512xbf16>
    %cst_24 = arith.constant dense<0.000000e+00> : vector<256x512xf32>
    %30 = tpu.matmul %0, %29, %cst_24 {dimension_numbers = #tpu.dot_dimension_numbers<[1], [0], [0], [1], [0, 0, 1, 1], [], []>} : vector<256x4xbf16>, vector<4x512xbf16>, vector<256x512xf32> -> vector<256x512xf32>
    %c0_25 = arith.constant 0 : index
    %c1536_26 = arith.constant 1536 : index
    %31 = vector.load %arg3[%c0_25, %c1536_26] : memref<1x2048xf32, #tpu.memory_space<vmem>>, vector<1x512xf32>
    %32 = vector.broadcast %31 : vector<1x512xf32> to vector<256x512xf32>
    %33 = arith.addf %30, %32 : vector<256x512xf32>
    %34 = arith.truncf %33 : vector<256x512xf32> to vector<256x512xbf16>
    %c1536_27 = arith.constant 1536 : index
    %c0_28 = arith.constant 0 : index
    %35 = vector.load %arg4[%c1536_27, %c0_28] : memref<2048x128xbf16, #tpu.memory_space<vmem>>, vector<512x128xbf16>
    %cst_29 = arith.constant dense<0.000000e+00> : vector<256x128xf32>
    %36 = tpu.matmul %34, %35, %cst_29 {dimension_numbers = #tpu.dot_dimension_numbers<[1], [0], [0], [1], [0, 0, 1, 1], [], []>} : vector<256x512xbf16>, vector<512x128xbf16>, vector<256x128xf32> -> vector<256x128xf32>
    %37 = arith.addf %28, %36 : vector<256x128xf32>
    %c0_30 = arith.constant 0 : index
    %c0_31 = arith.constant 0 : index
    %38 = vector.load %arg5[%c0_30, %c0_31] : memref<1x128xf32, #tpu.memory_space<vmem>>, vector<1x128xf32>
    %39 = vector.broadcast %38 : vector<1x128xf32> to vector<256x128xf32>
    %40 = arith.addf %37, %39 : vector<256x128xf32>
    %c0_32 = arith.constant 0 : index
    %c0_33 = arith.constant 0 : index
    %41 = vector.load %arg6[%c0_32, %c0_33] : memref<256x128xf32, #tpu.memory_space<vmem>>, vector<256x128xf32>
    tpu.vector_store %arg6[%c0_32, %c0_33], %40 {strides = array<i32>} : memref<256x128xf32, #tpu.memory_space<vmem>>, vector<256x128xf32>,
    return
  }
  func.func @transform_0(%arg0: i32) -> (i32, i32) {
    %c0_i32 = arith.constant 0 : i32
    %c0_i32_0 = arith.constant 0 : i32
    return %arg0, %c0_i32 : i32, i32
  }
  func.func @transform_1(%arg0: i32) -> (i32, i32) {
    %c0_i32 = arith.constant 0 : i32
    %c0_i32_0 = arith.constant 0 : i32
    %c0_i32_1 = arith.constant 0 : i32
    return %c0_i32, %c0_i32_0 : i32, i32
  }
  func.func @transform_2(%arg0: i32) -> (i32, i32) {
    %c0_i32 = arith.constant 0 : i32
    %c0_i32_0 = arith.constant 0 : i32
    %c0_i32_1 = arith.constant 0 : i32
    return %c0_i32, %c0_i32_0 : i32, i32
  }
  func.func @transform_3(%arg0: i32) -> (i32, i32) {
    %c0_i32 = arith.constant 0 : i32
    %c0_i32_0 = arith.constant 0 : i32
    %c0_i32_1 = arith.constant 0 : i32
    return %c0_i32, %c0_i32_0 : i32, i32
  }
  func.func @transform_4(%arg0: i32) -> (i32, i32) {
    %c0_i32 = arith.constant 0 : i32
    %c0_i32_0 = arith.constant 0 : i32
    %c0_i32_1 = arith.constant 0 : i32
    return %c0_i32, %c0_i32_0 : i32, i32
  }
  func.func @transform_5(%arg0: i32) -> (i32, i32) {
    %c0_i32 = arith.constant 0 : i32
    %c0_i32_0 = arith.constant 0 : i32
    return %arg0, %c0_i32 : i32, i32
  }
}

</mosaic_0001>

<llo_original>
// kernel: _feature_extractor_v2_forward.1
$region0: #{_feature_extractor_v2_forward.1}
  #allocation0 [shape = 'u32[]', space=smem, size = 0x4, offset = 0x4, fixed_abs, tag = 'smem constant byte address 0x4 - core index']
  #allocation1 [shape = 'u32[144,128]{1,0:T(1,128)}', space=vmem, size = 0x12000, scoped, tag = 'internal scratch']
  %s0 = inlined_call_operand.vmem [shape: bf16[512,4], index: 0, kind: input, shape index: {}]
  %s1 = inlined_call_operand.vmem [shape: bf16[4,2048], index: 1, kind: input, shape index: {}]
  %s2 = inlined_call_operand.vmem [shape: f32[1,2048], index: 2, kind: input, shape index: {}]
  %s3 = inlined_call_operand.hbm [shape: bf16[2048,128], index: 3, kind: input, shape index: {}]
  %s4 = inlined_call_operand.vmem [shape: f32[1,128], index: 4, kind: input, shape index: {}]
  %s5 = inlined_call_operand.hbm [shape: f32[512,128], index: 5, kind: output, shape index: {}]
  %s6 = sld [smem:[#allocation0]]
  $region57: #{_feature_extractor_v2_forward.1} parent=0
    _
  %s8 = ssub.s32 1, %s6
  %s9 = scalar_select 0, %s8, %s6
  $region1: #{_feature_extractor_v2_forward.1} parent=0
    #allocation2 [shape = 'u8[524288]{0}', space=vmem, size = 0x80000, scoped, tag = 'input window, operand 3, single buffered']
    #allocation3 [shape = 's32[2]{0}', space=sflag, size = 0x8, scoped, tag = 'scoped memory for _feature_extractor_v2_forward.1']
    #allocation4 [shape = 's32[2]{0}', space=sflag, size = 0x8, scoped, tag = 'scoped memory for _feature_extractor_v2_forward.1']
    #allocation5 [shape = 'u8[262144]{0}', space=vmem, size = 0x40000, scoped, tag = 'output window, operand 0']
    %10 = vsyncpa [#allocation3], 0
    %11 = vsyncpa [#allocation4], 0
    %s12 = scalar_lea.sflag [#allocation4], 1
    %13 = vsyncpa %s12, 0
    loop: start=0, step=1, limit=4
    $region2: #{_feature_extractor_v2_forward.1} parent=1 // loop_pre_header
      _
    $region3: #{_feature_extractor_v2_forward.1} parent=1 // loop_header
      %s15 = sphi 0, %s19
      %p16 = scmp.ge.s32.totalorder %s15, 4
      %s25 = sphi 0, %s27
      %s28 = sphi 0, %s25
      %s29 = sphi 0, %s28
      %s45 = sphi 0, %s29
      %s49 = sphi 0, %s49
      %s51 = sphi 0, %s49
      %s52 = sphi 0, %s51
      %s66 = sphi 0, %s52
      %s70 = sphi 0, %s70
      %s72 = sphi 0, %s70
      %s73 = sphi 0, %s72
      %s87 = sphi 0, %s73
      %s91 = sphi 0, %s91
      %s93 = sphi 0, %s91
      %s94 = sphi 0, %s93
      %s108 = sphi 0, %s94
      %s112 = sphi 0, %s112
      %s114 = sphi 0, %s112
      %s115 = sphi 0, %s114
      %s129 = sphi 0, %s115
      %s135 = sphi 0, %s137
      %s138 = sphi 0, %s135
      %s139 = sphi 0, %s138
      %s155 = sphi 0, %s139
    $region4: #{_feature_extractor_v2_forward.1} parent=1 // loop_header_branch
      %18 = sbr.rel (%p16) target = $region8
    $region5: #{_feature_extractor_v2_forward.1} parent=1 // loop_body
      %s20 = ssub.s32 %s15, 1
      %s21 = ssub.s32 %s15, 2
      %s22 = sadd.s32 %s15, 1
      %s23 = ssub.s32 %s15, %s22
      %p24 = scmp.eq.s32.totalorder %s23, 0
      %s26 = sadd.s32 %s25, 1
      %s27 = scalar_select %p24, %s25, %s26
      %p30 = pneg %p24
      %p31 = scmp.eq.s32.totalorder %s15, 1
      %p32 = por %p30, %p31
      %p33 = scmp.ne.s32.totalorder %s25, %s28
      %p34 = scmp.eq.s32.totalorder %s15, 0
      %p35 = por %p33, %p34
      %p36 = scmp.ne.s32.totalorder %s25, %s28
      %p37 = scmp.eq.s32.totalorder %s20, 1
      %p38 = por %p36, %p37
      %p39 = scmp.ne.s32.totalorder %s28, %s29
      %p40 = scmp.eq.s32.totalorder %s20, 0
      %p41 = por %p39, %p40
      %p42 = scmp.ne.s32.totalorder %s28, %s29
      %p43 = scmp.eq.s32.totalorder %s21, 1
      %p44 = por %p42, %p43
      %p46 = scmp.ne.s32.totalorder %s29, %s45
      %p47 = scmp.eq.s32.totalorder %s21, 0
      %p48 = por %p46, %p47
      %s50 = sadd.s32 %s49, 1
      %p53 = scmp.eq.s32.totalorder %s15, 1
      %p54 = scmp.ne.s32.totalorder %s49, %s51
      %p55 = scmp.eq.s32.totalorder %s15, 0
      %p56 = por %p54, %p55
      %p57 = scmp.ne.s32.totalorder %s49, %s51
      %p58 = scmp.eq.s32.totalorder %s20, 1
      %p59 = por %p57, %p58
      %p60 = scmp.ne.s32.totalorder %s51, %s52
      %p61 = scmp.eq.s32.totalorder %s20, 0
      %p62 = por %p60, %p61
      %p63 = scmp.ne.s32.totalorder %s51, %s52
      %p64 = scmp.eq.s32.totalorder %s21, 1
      %p65 = por %p63, %p64
      %p67 = scmp.ne.s32.totalorder %s52, %s66
      %p68 = scmp.eq.s32.totalorder %s21, 0
      %p69 = por %p67, %p68
      %s71 = sadd.s32 %s70, 1
      %p74 = scmp.eq.s32.totalorder %s15, 1
      %p75 = scmp.ne.s32.totalorder %s70, %s72
      %p76 = scmp.eq.s32.totalorder %s15, 0
      %p77 = por %p75, %p76
      %p78 = scmp.ne.s32.totalorder %s70, %s72
      %p79 = scmp.eq.s32.totalorder %s20, 1
      %p80 = por %p78, %p79
      %p81 = scmp.ne.s32.totalorder %s72, %s73
      %p82 = scmp.eq.s32.totalorder %s20, 0
      %p83 = por %p81, %p82
      %p84 = scmp.ne.s32.totalorder %s72, %s73
      %p85 = scmp.eq.s32.totalorder %s21, 1
      %p86 = por %p84, %p85
      %p88 = scmp.ne.s32.totalorder %s73, %s87
      %p89 = scmp.eq.s32.totalorder %s21, 0
      %p90 = por %p88, %p89
      %s92 = sadd.s32 %s91, 1
      %p95 = scmp.eq.s32.totalorder %s15, 1
      %p96 = scmp.ne.s32.totalorder %s91, %s93
      %p97 = scmp.eq.s32.totalorder %s15, 0
      %p98 = por %p96, %p97
      %p99 = scmp.ne.s32.totalorder %s91, %s93
      %p100 = scmp.eq.s32.totalorder %s20, 1
      %p101 = por %p99, %p100
      %p102 = scmp.ne.s32.totalorder %s93, %s94
      %p103 = scmp.eq.s32.totalorder %s20, 0
      %p104 = por %p102, %p103
      %p105 = scmp.ne.s32.totalorder %s93, %s94
      %p106 = scmp.eq.s32.totalorder %s21, 1
      %p107 = por %p105, %p106
      %p109 = scmp.ne.s32.totalorder %s94, %s108
      %p110 = scmp.eq.s32.totalorder %s21, 0
      %p111 = por %p109, %p110
      %s113 = sadd.s32 %s112, 1
      %p116 = scmp.eq.s32.totalorder %s15, 1
      %p117 = scmp.ne.s32.totalorder %s112, %s114
      %p118 = scmp.eq.s32.totalorder %s15, 0
      %p119 = por %p117, %p118
      %p120 = scmp.ne.s32.totalorder %s112, %s114
      %p121 = scmp.eq.s32.totalorder %s20, 1
      %p122 = por %p120, %p121
      %p123 = scmp.ne.s32.totalorder %s114, %s115
      %p124 = scmp.eq.s32.totalorder %s20, 0
      %p125 = por %p123, %p124
      %p126 = scmp.ne.s32.totalorder %s114, %s115
      %p127 = scmp.eq.s32.totalorder %s21, 1
      %p128 = por %p126, %p127
      %p130 = scmp.ne.s32.totalorder %s115, %s129
      %p131 = scmp.eq.s32.totalorder %s21, 0
      %p132 = por %p130, %p131
      %s133 = ssub.s32 %s15, %s22
      %p134 = scmp.eq.s32.totalorder %s133, 0
      %s136 = sadd.s32 %s135, 1
      %s137 = scalar_select %p134, %s135, %s136
      %p140 = pneg %p134
      %p141 = scmp.eq.s32.totalorder %s15, 1
      %p142 = por %p140, %p141
      %p143 = scmp.ne.s32.totalorder %s135, %s138
      %p144 = scmp.eq.s32.totalorder %s15, 0
      %p145 = por %p143, %p144
      %p146 = scmp.ne.s32.totalorder %s135, %s138
      %p147 = scmp.eq.s32.totalorder %s20, 1
      %p148 = por %p146, %p147
      %p149 = scmp.ne.s32.totalorder %s138, %s139
      %p150 = scmp.eq.s32.totalorder %s20, 0
      %p151 = por %p149, %p150
      %p152 = scmp.ne.s32.totalorder %s138, %s139
      %p153 = scmp.eq.s32.totalorder %s21, 1
      %p154 = por %p152, %p153
      %p156 = scmp.ne.s32.totalorder %s139, %s155
      %p157 = scmp.eq.s32.totalorder %s21, 0
      %p158 = por %p156, %p157
      %p159 = scmp.le.s32.totalorder 1, %s15
      %p160 = scmp.lt.s32.totalorder %s15, 3
      %p161 = pnand %p159, %p160
      %p162 = pneg %p161
      // Predicated region
      $region9: #{_feature_extractor_v2_forward.1} parent=5 // pred_check
        _
      $region10: #{_feature_extractor_v2_forward.1} parent=5 // pred_check_branch
        %164 = sbr.rel (%p161) target = $region12
      $region11: #{_feature_extractor_v2_forward.1} parent=5 // pred_region
        %s165 = ssub.s32 %s15, 1
        // Predicated region
        $region13: #{_feature_extractor_v2_forward.1} parent=11 // pred_check
          %p166 = pneg %p62
        $region14: #{_feature_extractor_v2_forward.1} parent=11 // pred_check_branch
          %168 = sbr.rel (%p166) target = $region16
        $region15: #{_feature_extractor_v2_forward.1} parent=11 // pred_region
          _
        $region16: #{_feature_extractor_v2_forward.1} parent=11 // pred_fallthru
          _
        // Predicated region
        $region17: #{_feature_extractor_v2_forward.1} parent=11 // pred_check
          %p169 = pneg %p83
        $region18: #{_feature_extractor_v2_forward.1} parent=11 // pred_check_branch
          %171 = sbr.rel (%p169) target = $region20
        $region19: #{_feature_extractor_v2_forward.1} parent=11 // pred_region
          _
        $region20: #{_feature_extractor_v2_forward.1} parent=11 // pred_fallthru
          _
        // Predicated region
        $region21: #{_feature_extractor_v2_forward.1} parent=11 // pred_check
          %p172 = pneg %p104
        $region22: #{_feature_extractor_v2_forward.1} parent=11 // pred_check_branch
          %174 = sbr.rel (%p172) target = $region24
        $region23: #{_feature_extractor_v2_forward.1} parent=11 // pred_region
          %s176 = ssub.s32 16384, 16384
          %177 = vsyncadd [#allocation3], %s176
          %s178 = sshll.u32 [#allocation2], 4
          %s179 = int_to_ptr.vmem [resolvable:$true] %s178
          %184 = dma.hbm_to_vmem [thread:$0]  %s3, 16384, %s179, [#allocation3], 64, 64, 4
        $region24: #{_feature_extractor_v2_forward.1} parent=11 // pred_fallthru
          _
        // Predicated region
        $region25: #{_feature_extractor_v2_forward.1} parent=11 // pred_check
          %p185 = pneg %p125
        $region26: #{_feature_extractor_v2_forward.1} parent=11 // pred_check_branch
          %187 = sbr.rel (%p185) target = $region28
        $region27: #{_feature_extractor_v2_forward.1} parent=11 // pred_region
          _
        $region28: #{_feature_extractor_v2_forward.1} parent=11 // pred_fallthru
          _
      $region12: #{_feature_extractor_v2_forward.1} parent=5 // pred_fallthru
        _
      %p188 = scmp.lt.s32.totalorder %s15, 2
      // Predicated region
      $region29: #{_feature_extractor_v2_forward.1} parent=5 // pred_check
        %p189 = pneg %p188
      $region30: #{_feature_extractor_v2_forward.1} parent=5 // pred_check_branch
        %191 = sbr.rel (%p189) target = $region32
      $region31: #{_feature_extractor_v2_forward.1} parent=5 // pred_region
        // Predicated region
        $region33: #{_feature_extractor_v2_forward.1} parent=31 // pred_check
          %p192 = pneg %p35
        $region34: #{_feature_extractor_v2_forward.1} parent=31 // pred_check_branch
          %194 = sbr.rel (%p192) target = $region36
        $region35: #{_feature_extractor_v2_forward.1} parent=31 // pred_region
          %s195 = smul.u32 32, %s15
          %p196 = scmp.lt.s32.totalorder %s195, 63
          %s197 = scalar_select %p196, %s195, 63
          %s198 = smul.addr %s197, 4
          %s199 = scalar_lea.vmem %s0, %s198
          %s200 = smul.u32 32, %s15
        $region36: #{_feature_extractor_v2_forward.1} parent=31 // pred_fallthru
          _
      $region32: #{_feature_extractor_v2_forward.1} parent=5 // pred_fallthru
        _
      %p201 = scmp.le.s32.totalorder 1, %s15
      %p202 = scmp.lt.s32.totalorder %s15, 3
      %p203 = pnand %p201, %p202
      %p204 = pneg %p203
      // Predicated region
      $region37: #{_feature_extractor_v2_forward.1} parent=5 // pred_check
        _
      $region38: #{_feature_extractor_v2_forward.1} parent=5 // pred_check_branch
        %206 = sbr.rel (%p203) target = $region40
      $region39: #{_feature_extractor_v2_forward.1} parent=5 // pred_region
        %s207 = ssub.s32 %s15, 1
        // Predicated region
        $region41: #{_feature_extractor_v2_forward.1} parent=39 // pred_check
          %p208 = pneg %p104
        $region42: #{_feature_extractor_v2_forward.1} parent=39 // pred_check_branch
          %210 = sbr.rel (%p208) target = $region44
        $region43: #{_feature_extractor_v2_forward.1} parent=39 // pred_region
          %211 = dma.done [#allocation3], 16384
        $region44: #{_feature_extractor_v2_forward.1} parent=39 // pred_fallthru
          _
        %s212 = smul.u32 32, %s20
        %p213 = scmp.lt.s32.totalorder %s212, 63
        %s214 = scalar_select %p213, %s212, 63
        %s215 = smul.addr %s214, 4
        %s216 = scalar_lea.vmem %s0, %s215
        %p217 = pneg %p41
        %p218 = pneg %p38
        %p219 = pneg %p62
        %p220 = pneg %p59
        %p221 = pneg %p83
        %p222 = pneg %p80
        %p223 = pneg %p104
        %p224 = pneg %p101
        %p225 = pneg %p125
        %p226 = pneg %p122
        %p227 = pneg %p151
        %p228 = pneg %p148
        %s229 = sand.u32 %s138, 1
        %s230 = scalar_lea.sflag [#allocation4], %s229
        %s231 = sand.u32 %s138, 1
        %s232 = smul.addr %s231, 256
        %s233 = scalar_lea.vmem [#allocation5], %s232
        %s234 = smul.u32 32, %s20
        %p235 = scmp.lt.s32.totalorder %s234, 63
        %s236 = scalar_select %p235, %s234, 63
        %s237 = smul.addr %s236, 4
        %s238 = scalar_lea.vmem %s0, %s237
        %s239 = smul.u32 32, %s20
        %s240 = smul.u32 32, %s20
        %v242 = vld [vmem:[%s238] sm:$0xf]
        %v243 = vld [vmem:[%s238 + $0x4] sm:$0xf]
        %v244 = vld [vmem:[%s238 + $0x8] sm:$0xf]
        %v245 = vld [vmem:[%s238 + $0xc] sm:$0xf]
        %v246 = vld [vmem:[%s238 + $0x10] sm:$0xf]
        %v247 = vld [vmem:[%s238 + $0x14] sm:$0xf]
        %v248 = vld [vmem:[%s238 + $0x18] sm:$0xf]
        %v249 = vld [vmem:[%s238 + $0x1c] sm:$0xf]
        %v250 = vld [vmem:[%s238 + $0x20] sm:$0xf]
        %v251 = vld [vmem:[%s238 + $0x24] sm:$0xf]
        %v252 = vld [vmem:[%s238 + $0x28] sm:$0xf]
        %v253 = vld [vmem:[%s238 + $0x2c] sm:$0xf]
        %v254 = vld [vmem:[%s238 + $0x30] sm:$0xf]
        %v255 = vld [vmem:[%s238 + $0x34] sm:$0xf]
        %v256 = vld [vmem:[%s238 + $0x38] sm:$0xf]
        %v257 = vld [vmem:[%s238 + $0x3c] sm:$0xf]
        %v258 = vld [vmem:[%s238 + $0x40] sm:$0xf]
        %v259 = vld [vmem:[%s238 + $0x44] sm:$0xf]
        %v260 = vld [vmem:[%s238 + $0x48] sm:$0xf]
        %v261 = vld [vmem:[%s238 + $0x4c] sm:$0xf]
        %v262 = vld [vmem:[%s238 + $0x50] sm:$0xf]
        %v263 = vld [vmem:[%s238 + $0x54] sm:$0xf]
        %v264 = vld [vmem:[%s238 + $0x58] sm:$0xf]
        %v265 = vld [vmem:[%s238 + $0x5c] sm:$0xf]
        %v266 = vld [vmem:[%s238 + $0x60] sm:$0xf]
        %v267 = vld [vmem:[%s238 + $0x64] sm:$0xf]
        %v268 = vld [vmem:[%s238 + $0x68] sm:$0xf]
        %v269 = vld [vmem:[%s238 + $0x6c] sm:$0xf]
        %v270 = vld [vmem:[%s238 + $0x70] sm:$0xf]
        %v271 = vld [vmem:[%s238 + $0x74] sm:$0xf]
        %v272 = vld [vmem:[%s238 + $0x78] sm:$0xf]
        %v273 = vld [vmem:[%s238 + $0x7c] sm:$0xf]
        %v274 = vld [vmem:[%s1] sm:$0xff]
        %v275 = vld [vmem:[%s2] sm:$0xf]
        %v277 = vlaneseq
        %v278 = vshrl.u32 %v277, 7
        %v279 = vsub.s32 0, %v278
        %v280 = vrot.slane %v275, %v279
        %v281 = vlaneseq
        %v282 = vshrl.u32 %v281, 7
        %v283 = vsub.s32 1, %v282
        %v284 = vrot.slane %v275, %v283
        %v285 = vlaneseq
        %v286 = vshrl.u32 %v285, 7
        %v287 = vsub.s32 2, %v286
        %v288 = vrot.slane %v275, %v287
        %v289 = vlaneseq
        %v290 = vshrl.u32 %v289, 7
        %v291 = vsub.s32 3, %v290
        %v292 = vrot.slane %v275, %v291
        %v329 = vunpack.c.l.b16 %v242
        %v330 = vunpack.c.l.b16 %v243
        %v331 = vunpack.c.l.b16 %v244
        %v332 = vunpack.c.l.b16 %v245
        %v333 = vunpack.c.l.b16 %v246
        %v334 = vunpack.c.l.b16 %v247
        %v335 = vunpack.c.l.b16 %v248
        %v336 = vunpack.c.l.b16 %v249
        %v337 = vunpack.c.l.b16 %v250
        %v338 = vunpack.c.l.b16 %v251
        %v339 = vunpack.c.l.b16 %v252
        %v340 = vunpack.c.l.b16 %v253
        %v341 = vunpack.c.l.b16 %v254
        %v342 = vunpack.c.l.b16 %v255
        %v343 = vunpack.c.l.b16 %v256
        %v344 = vunpack.c.l.b16 %v257
        %v345 = vunpack.c.l.b16 %v258
        %v346 = vunpack.c.l.b16 %v259
        %v347 = vunpack.c.l.b16 %v260
        %v348 = vunpack.c.l.b16 %v261
        %v349 = vunpack.c.l.b16 %v262
        %v350 = vunpack.c.l.b16 %v263
        %v351 = vunpack.c.l.b16 %v264
        %v352 = vunpack.c.l.b16 %v265
        %v353 = vunpack.c.l.b16 %v266
        %v354 = vunpack.c.l.b16 %v267
        %v355 = vunpack.c.l.b16 %v268
        %v356 = vunpack.c.l.b16 %v269
        %v357 = vunpack.c.l.b16 %v270
        %v358 = vunpack.c.l.b16 %v271
        %v359 = vunpack.c.l.b16 %v272
        %v360 = vunpack.c.l.b16 %v273
        %v361 = vpack.c.b16 %v330, %v329
        %v362 = vpack.c.b16 %v332, %v331
        %v363 = vpack.c.b16 %v334, %v333
        %v364 = vpack.c.b16 %v336, %v335
        %v365 = vpack.c.b16 %v338, %v337
        %v366 = vpack.c.b16 %v340, %v339
        %v367 = vpack.c.b16 %v342, %v341
        %v368 = vpack.c.b16 %v344, %v343
        %v369 = vpack.c.b16 %v346, %v345
        %v370 = vpack.c.b16 %v348, %v347
        %v371 = vpack.c.b16 %v350, %v349
        %v372 = vpack.c.b16 %v352, %v351
        %v373 = vpack.c.b16 %v354, %v353
        %v374 = vpack.c.b16 %v356, %v355
        %v375 = vpack.c.b16 %v358, %v357
        %v376 = vpack.c.b16 %v360, %v359
        %v378 = vcombine.high %v274, %v274
        %v380 = vunpack.c.l.s4 1983009808
        %v381 = vunpack.c.0.s8 %v380
        %v382 = vlaneseq
        %v383 = vshrl.u32 %v382, 7
        %v384 = vsub.s32 %v381, %v383
        %v385 = vrot.slane %v274, %v384
        %v387 = vunpack.c.l.s4 1983009808
        %v388 = vunpack.c.0.s8 %v387
        %v389 = vlaneseq
        %v390 = vshrl.u32 %v389, 7
        %v391 = vsub.s32 %v388, %v390
        %v392 = vrot.slane %v378, %v391
        %v393 = vcombine.high %v385, %v385
        %v394 = vcombine.high %v392, %v392
        %vm395 = vcmask 31744
        %v397 = vsel %vm395, %v361, 0
        %v400 = vsel %vm395, %v362, 0
        %v403 = vsel %vm395, %v363, 0
        %v406 = vsel %vm395, %v364, 0
        %v409 = vsel %vm395, %v365, 0
        %v412 = vsel %vm395, %v366, 0
        %v415 = vsel %vm395, %v367, 0
        %v418 = vsel %vm395, %v368, 0
        %v421 = vsel %vm395, %v369, 0
        %v424 = vsel %vm395, %v370, 0
        %v427 = vsel %vm395, %v371, 0
        %v430 = vsel %vm395, %v372, 0
        %v433 = vsel %vm395, %v373, 0
        %v436 = vsel %vm395, %v374, 0
        %v439 = vsel %vm395, %v375, 0
        %v442 = vsel %vm395, %v376, 0
        %vm444 = vcmask 1041408
        %v446 = vsel %vm444, %v385, 0
        %v449 = vsel %vm444, %v393, 0
        %v452 = vsel %vm444, %v392, 0
        %v455 = vsel %vm444, %v394, 0
        %457 = vmatprep.subr.bf16.mxu0 0
        %458 = vmatpush1.bf16.msra.mxu0 0
        %459 = vmatprep.subr.bf16.mxu0 0
        %460 = vmatpush1.bf16.msra.mxu0 0
        %461 = vmatprep.subr.bf16.mxu0 0
        %462 = vmatpush1.bf16.msra.mxu0 0
        %463 = vmatprep.subr.bf16.mxu0 0
        %464 = vmatpush1.bf16.msra.mxu0 0
        %465 = vmatprep.subr.bf16.mxu0 0
        %466 = vmatpush1.bf16.msra.mxu0 0
        %467 = vmatprep.subr.bf16.mxu0 0
        %468 = vmatpush1.bf16.msra.mxu0 0
        %469 = vmatprep.subr.bf16.mxu0 0
        %470 = vmatpush1.bf16.msra.mxu0 0
        %471 = vmatprep.subr.bf16.mxu0 %v449
        %472 = vmatpush1.bf16.msra.mxu0 %v446
        %473 = vmatprep.subr.bf16.mxu0 0
        %474 = vmatpush2.bf16.msra.mxu0 0
        %475 = vmatprep.subr.bf16.mxu0 0
        %476 = vmatpush2.bf16.msra.mxu0 0
        %477 = vmatprep.subr.bf16.mxu0 0
        %478 = vmatpush2.bf16.msra.mxu0 0
        %479 = vmatprep.subr.bf16.mxu0 0
        %480 = vmatpush2.bf16.msra.mxu0 0
        %481 = vmatprep.subr.bf16.mxu0 0
        %482 = vmatpush2.bf16.msra.mxu0 0
        %483 = vmatprep.subr.bf16.mxu0 0
        %484 = vmatpush2.bf16.msra.mxu0 0
        %485 = vmatprep.subr.bf16.mxu0 0
        %486 = vmatpush2.bf16.msra.mxu0 0
        %487 = vmatprep.subr.bf16.mxu0 0
        %488 = vmatpush2.bf16.msra.mxu0 0
        %489 = vmatprep.mubr.bf16.mxu0 0
        %490 = vmatmul.mubr.bf16.gmra.mxu0 %v397
        %v491 = vpop.f32.mrf.mxu0
        %v492 = vadd.f32 %v280, %v491
        %v493 = vpop.f32.mrf.mxu0
        %v494 = vadd.f32 %v284, %v493
        %v495 = vpop.f32.mrf.mxu0
        %v496 = vadd.f32 %v280, %v495
        %v497 = vpop.f32.mrf.mxu0
        %v498 = vadd.f32 %v284, %v497
        %499 = vmatprep.mubr.bf16.mxu0 0
        %500 = vmatmul.mubr.bf16.gmra.mxu0 %v400
        %v501 = vpop.f32.mrf.mxu0
        %v502 = vadd.f32 %v280, %v501
        %v503 = vpop.f32.mrf.mxu0
        %v504 = vadd.f32 %v284, %v503
        %v505 = vpop.f32.mrf.mxu0
        %v506 = vadd.f32 %v280, %v505
        %v507 = vpop.f32.mrf.mxu0
        %v508 = vadd.f32 %v284, %v507
        %509 = vmatprep.mubr.bf16.mxu0 0
        %510 = vmatmul.mubr.bf16.gmra.mxu0 %v403
        %v511 = vpop.f32.mrf.mxu0
        %v512 = vadd.f32 %v280, %v511
        %v513 = vpop.f32.mrf.mxu0
        %v514 = vadd.f32 %v284, %v513
        %v515 = vpop.f32.mrf.mxu0
        %v516 = vadd.f32 %v280, %v515
        %v517 = vpop.f32.mrf.mxu0
        %v518 = vadd.f32 %v284, %v517
        %519 = vmatprep.mubr.bf16.mxu0 0
        %520 = vmatmul.mubr.bf16.gmra.mxu0 %v406
        %v521 = vpop.f32.mrf.mxu0
        %v522 = vadd.f32 %v280, %v521
        %v523 = vpop.f32.mrf.mxu0
        %v524 = vadd.f32 %v284, %v523
        %v525 = vpop.f32.mrf.mxu0
        %v526 = vadd.f32 %v280, %v525
        %v527 = vpop.f32.mrf.mxu0
        %v528 = vadd.f32 %v284, %v527
        %529 = vmatprep.mubr.bf16.mxu0 0
        %530 = vmatmul.mubr.bf16.gmra.mxu0 %v409
        %v531 = vpop.f32.mrf.mxu0
        %v532 = vadd.f32 %v280, %v531
        %v533 = vpop.f32.mrf.mxu0
        %v534 = vadd.f32 %v284, %v533
        %v535 = vpop.f32.mrf.mxu0
        %v536 = vadd.f32 %v280, %v535
        %v537 = vpop.f32.mrf.mxu0
        %v538 = vadd.f32 %v284, %v537
        %539 = vmatprep.mubr.bf16.mxu0 0
        %540 = vmatmul.mubr.bf16.gmra.mxu0 %v412
        %v541 = vpop.f32.mrf.mxu0
        %v542 = vadd.f32 %v280, %v541
        %v543 = vpop.f32.mrf.mxu0
        %v544 = vadd.f32 %v284, %v543
        %v545 = vpop.f32.mrf.mxu0
        %v546 = vadd.f32 %v280, %v545
        %v547 = vpop.f32.mrf.mxu0
        %v548 = vadd.f32 %v284, %v547
        %549 = vmatprep.mubr.bf16.mxu0 0
        %550 = vmatmul.mubr.bf16.gmra.mxu0 %v415
        %v551 = vpop.f32.mrf.mxu0
        %v552 = vadd.f32 %v280, %v551
        %v553 = vpop.f32.mrf.mxu0
        %v554 = vadd.f32 %v284, %v553
        %v555 = vpop.f32.mrf.mxu0
        %v556 = vadd.f32 %v280, %v555
        %v557 = vpop.f32.mrf.mxu0
        %v558 = vadd.f32 %v284, %v557
        %559 = vmatprep.mubr.bf16.mxu0 0
        %560 = vmatmul.mubr.bf16.gmra.mxu0 %v418
        %v561 = vpop.f32.mrf.mxu0
        %v562 = vadd.f32 %v280, %v561
        %v563 = vpop.f32.mrf.mxu0
        %v564 = vadd.f32 %v284, %v563
        %v565 = vpop.f32.mrf.mxu0
        %v566 = vadd.f32 %v280, %v565
        %v567 = vpop.f32.mrf.mxu0
        %v568 = vadd.f32 %v284, %v567
        %569 = vmatprep.mubr.bf16.mxu0 0
        %570 = vmatmul.mubr.bf16.gmra.mxu0 %v421
        %v571 = vpop.f32.mrf.mxu0
        %v572 = vadd.f32 %v280, %v571
        %v573 = vpop.f32.mrf.mxu0
        %v574 = vadd.f32 %v284, %v573
        %v575 = vpop.f32.mrf.mxu0
        %v576 = vadd.f32 %v280, %v575
        %v577 = vpop.f32.mrf.mxu0
        %v578 = vadd.f32 %v284, %v577
        %579 = vmatprep.mubr.bf16.mxu0 0
        %580 = vmatmul.mubr.bf16.gmra.mxu0 %v424
        %v581 = vpop.f32.mrf.mxu0
        %v582 = vadd.f32 %v280, %v581
        %v583 = vpop.f32.mrf.mxu0
        %v584 = vadd.f32 %v284, %v583
        %v585 = vpop.f32.mrf.mxu0
        %v586 = vadd.f32 %v280, %v585
        %v587 = vpop.f32.mrf.mxu0
        %v588 = vadd.f32 %v284, %v587
        %589 = vmatprep.mubr.bf16.mxu0 0
        %590 = vmatmul.mubr.bf16.gmra.mxu0 %v427
        %v591 = vpop.f32.mrf.mxu0
        %v592 = vadd.f32 %v280, %v591
        %v593 = vpop.f32.mrf.mxu0
        %v594 = vadd.f32 %v284, %v593
        %v595 = vpop.f32.mrf.mxu0
        %v596 = vadd.f32 %v280, %v595
        %v597 = vpop.f32.mrf.mxu0
        %v598 = vadd.f32 %v284, %v597
        %599 = vmatprep.mubr.bf16.mxu0 0
        %600 = vmatmul.mubr.bf16.gmra.mxu0 %v430
        %v601 = vpop.f32.mrf.mxu0
        %v602 = vadd.f32 %v280, %v601
        %v603 = vpop.f32.mrf.mxu0
        %v604 = vadd.f32 %v284, %v603
        %v605 = vpop.f32.mrf.mxu0
        %v606 = vadd.f32 %v280, %v605
        %v607 = vpop.f32.mrf.mxu0
        %v608 = vadd.f32 %v284, %v607
        %609 = vmatprep.mubr.bf16.mxu0 0
        %610 = vmatmul.mubr.bf16.gmra.mxu0 %v433
        %v611 = vpop.f32.mrf.mxu0
        %v612 = vadd.f32 %v280, %v611
        %v613 = vpop.f32.mrf.mxu0
        %v614 = vadd.f32 %v284, %v613
        %v615 = vpop.f32.mrf.mxu0
        %v616 = vadd.f32 %v280, %v615
        %v617 = vpop.f32.mrf.mxu0
        %v618 = vadd.f32 %v284, %v617
        %619 = vmatprep.mubr.bf16.mxu0 0
        %620 = vmatmul.mubr.bf16.gmra.mxu0 %v436
        %v621 = vpop.f32.mrf.mxu0
        %v622 = vadd.f32 %v280, %v621
        %v623 = vpop.f32.mrf.mxu0
        %v624 = vadd.f32 %v284, %v623
        %v625 = vpop.f32.mrf.mxu0
        %v626 = vadd.f32 %v280, %v625
        %v627 = vpop.f32.mrf.mxu0
        %v628 = vadd.f32 %v284, %v627
        %629 = vmatprep.mubr.bf16.mxu0 0
        %630 = vmatmul.mubr.bf16.gmra.mxu0 %v439
        %v631 = vpop.f32.mrf.mxu0
        %v632 = vadd.f32 %v280, %v631
        %v633 = vpop.f32.mrf.mxu0
        %v634 = vadd.f32 %v284, %v633
        %v635 = vpop.f32.mrf.mxu0
        %v636 = vadd.f32 %v280, %v635
        %v637 = vpop.f32.mrf.mxu0
        %v638 = vadd.f32 %v284, %v637
        %639 = vmatprep.mubr.bf16.mxu0 0
        %640 = vmatmul.mubr.bf16.gmra.mxu0 %v442
        %v641 = vpop.f32.mrf.mxu0
        %v642 = vadd.f32 %v280, %v641
        %v643 = vpop.f32.mrf.mxu0
        %v644 = vadd.f32 %v284, %v643
        %v645 = vpop.f32.mrf.mxu0
        %v646 = vadd.f32 %v280, %v645
        %v647 = vpop.f32.mrf.mxu0
        %v648 = vadd.f32 %v284, %v647
        %649 = vdwg.mxu0
        %650 = vmatprep.subr.bf16.mxu0 0
        %651 = vmatpush1.bf16.msra.mxu0 0
        %652 = vmatprep.subr.bf16.mxu0 0
        %653 = vmatpush1.bf16.msra.mxu0 0
        %654 = vmatprep.subr.bf16.mxu0 0
        %655 = vmatpush1.bf16.msra.mxu0 0
        %656 = vmatprep.subr.bf16.mxu0 0
        %657 = vmatpush1.bf16.msra.mxu0 0
        %658 = vmatprep.subr.bf16.mxu0 0
        %659 = vmatpush1.bf16.msra.mxu0 0
        %660 = vmatprep.subr.bf16.mxu0 0
        %661 = vmatpush1.bf16.msra.mxu0 0
        %662 = vmatprep.subr.bf16.mxu0 0
        %663 = vmatpush1.bf16.msra.mxu0 0
        %664 = vmatprep.subr.bf16.mxu0 %v455
        %665 = vmatpush1.bf16.msra.mxu0 %v452
        %666 = vmatprep.subr.bf16.mxu0 0
        %667 = vmatpush2.bf16.msra.mxu0 0
        %668 = vmatprep.subr.bf16.mxu0 0
        %669 = vmatpush2.bf16.msra.mxu0 0
        %670 = vmatprep.subr.bf16.mxu0 0
        %671 = vmatpush2.bf16.msra.mxu0 0
        %672 = vmatprep.subr.bf16.mxu0 0
        %673 = vmatpush2.bf16.msra.mxu0 0
        %674 = vmatprep.subr.bf16.mxu0 0
        %675 = vmatpush2.bf16.msra.mxu0 0
        %676 = vmatprep.subr.bf16.mxu0 0
        %677 = vmatpush2.bf16.msra.mxu0 0
        %678 = vmatprep.subr.bf16.mxu0 0
        %679 = vmatpush2.bf16.msra.mxu0 0
        %680 = vmatprep.subr.bf16.mxu0 0
        %681 = vmatpush2.bf16.msra.mxu0 0
        %682 = vmatprep.mubr.bf16.mxu0 0
        %683 = vmatmul.mubr.bf16.gmra.mxu0 %v397
        %v684 = vpop.f32.mrf.mxu0
        %v685 = vadd.f32 %v288, %v684
        %v686 = vpop.f32.mrf.mxu0
        %v687 = vadd.f32 %v292, %v686
        %v688 = vpop.f32.mrf.mxu0
        %v689 = vadd.f32 %v288, %v688
        %v690 = vpop.f32.mrf.mxu0
        %v691 = vadd.f32 %v292, %v690
        %692 = vmatprep.mubr.bf16.mxu0 0
        %693 = vmatmul.mubr.bf16.gmra.mxu0 %v400
        %v694 = vpop.f32.mrf.mxu0
        %v695 = vadd.f32 %v288, %v694
        %v696 = vpop.f32.mrf.mxu0
        %v697 = vadd.f32 %v292, %v696
        %v698 = vpop.f32.mrf.mxu0
        %v699 = vadd.f32 %v288, %v698
        %v700 = vpop.f32.mrf.mxu0
        %v701 = vadd.f32 %v292, %v700
        %702 = vmatprep.mubr.bf16.mxu0 0
        %703 = vmatmul.mubr.bf16.gmra.mxu0 %v403
        %v704 = vpop.f32.mrf.mxu0
        %v705 = vadd.f32 %v288, %v704
        %v706 = vpop.f32.mrf.mxu0
        %v707 = vadd.f32 %v292, %v706
        %v708 = vpop.f32.mrf.mxu0
        %v709 = vadd.f32 %v288, %v708
        %v710 = vpop.f32.mrf.mxu0
        %v711 = vadd.f32 %v292, %v710
        %712 = vmatprep.mubr.bf16.mxu0 0
        %713 = vmatmul.mubr.bf16.gmra.mxu0 %v406
        %v714 = vpop.f32.mrf.mxu0
        %v715 = vadd.f32 %v288, %v714
        %v716 = vpop.f32.mrf.mxu0
        %v717 = vadd.f32 %v292, %v716
        %v718 = vpop.f32.mrf.mxu0
        %v719 = vadd.f32 %v288, %v718
        %v720 = vpop.f32.mrf.mxu0
        %v721 = vadd.f32 %v292, %v720
        %722 = vmatprep.mubr.bf16.mxu0 0
        %723 = vmatmul.mubr.bf16.gmra.mxu0 %v409
        %v724 = vpop.f32.mrf.mxu0
        %v725 = vadd.f32 %v288, %v724
        %v726 = vpop.f32.mrf.mxu0
        %v727 = vadd.f32 %v292, %v726
        %v728 = vpop.f32.mrf.mxu0
        %v729 = vadd.f32 %v288, %v728
        %v730 = vpop.f32.mrf.mxu0
        %v731 = vadd.f32 %v292, %v730
        %732 = vmatprep.mubr.bf16.mxu0 0
        %733 = vmatmul.mubr.bf16.gmra.mxu0 %v412
        %v734 = vpop.f32.mrf.mxu0
        %v735 = vadd.f32 %v288, %v734
        %v736 = vpop.f32.mrf.mxu0
        %v737 = vadd.f32 %v292, %v736
        %v738 = vpop.f32.mrf.mxu0
        %v739 = vadd.f32 %v288, %v738
        %v740 = vpop.f32.mrf.mxu0
        %v741 = vadd.f32 %v292, %v740
        %742 = vmatprep.mubr.bf16.mxu0 0
        %743 = vmatmul.mubr.bf16.gmra.mxu0 %v415
        %v744 = vpop.f32.mrf.mxu0
        %v745 = vadd.f32 %v288, %v744
        %v746 = vpop.f32.mrf.mxu0
        %v747 = vadd.f32 %v292, %v746
        %v748 = vpop.f32.mrf.mxu0
        %v749 = vadd.f32 %v288, %v748
        %v750 = vpop.f32.mrf.mxu0
        %v751 = vadd.f32 %v292, %v750
        %752 = vmatprep.mubr.bf16.mxu0 0
        %753 = vmatmul.mubr.bf16.gmra.mxu0 %v418
        %v754 = vpop.f32.mrf.mxu0
        %v755 = vadd.f32 %v288, %v754
        %v756 = vpop.f32.mrf.mxu0
        %v757 = vadd.f32 %v292, %v756
        %v758 = vpop.f32.mrf.mxu0
        %v759 = vadd.f32 %v288, %v758
        %v760 = vpop.f32.mrf.mxu0
        %v761 = vadd.f32 %v292, %v760
        %762 = vmatprep.mubr.bf16.mxu0 0
        %763 = vmatmul.mubr.bf16.gmra.mxu0 %v421
        %v764 = vpop.f32.mrf.mxu0
        %v765 = vadd.f32 %v288, %v764
        %v766 = vpop.f32.mrf.mxu0
        %v767 = vadd.f32 %v292, %v766
        %v768 = vpop.f32.mrf.mxu0
        %v769 = vadd.f32 %v288, %v768
        %v770 = vpop.f32.mrf.mxu0
        %v771 = vadd.f32 %v292, %v770
        %772 = vmatprep.mubr.bf16.mxu0 0
        %773 = vmatmul.mubr.bf16.gmra.mxu0 %v424
        %v774 = vpop.f32.mrf.mxu0
        %v775 = vadd.f32 %v288, %v774
        %v776 = vpop.f32.mrf.mxu0
        %v777 = vadd.f32 %v292, %v776
        %v778 = vpop.f32.mrf.mxu0
        %v779 = vadd.f32 %v288, %v778
        %v780 = vpop.f32.mrf.mxu0
        %v781 = vadd.f32 %v292, %v780
        %782 = vmatprep.mubr.bf16.mxu0 0
        %783 = vmatmul.mubr.bf16.gmra.mxu0 %v427
        %v784 = vpop.f32.mrf.mxu0
        %v785 = vadd.f32 %v288, %v784
        %v786 = vpop.f32.mrf.mxu0
        %v787 = vadd.f32 %v292, %v786
        %v788 = vpop.f32.mrf.mxu0
        %v789 = vadd.f32 %v288, %v788
        %v790 = vpop.f32.mrf.mxu0
        %v791 = vadd.f32 %v292, %v790
        %792 = vmatprep.mubr.bf16.mxu0 0
        %793 = vmatmul.mubr.bf16.gmra.mxu0 %v430
        %v794 = vpop.f32.mrf.mxu0
        %v795 = vadd.f32 %v288, %v794
        %v796 = vpop.f32.mrf.mxu0
        %v797 = vadd.f32 %v292, %v796
        %v798 = vpop.f32.mrf.mxu0
        %v799 = vadd.f32 %v288, %v798
        %v800 = vpop.f32.mrf.mxu0
        %v801 = vadd.f32 %v292, %v800
        %802 = vmatprep.mubr.bf16.mxu0 0
        %803 = vmatmul.mubr.bf16.gmra.mxu0 %v433
        %v804 = vpop.f32.mrf.mxu0
        %v805 = vadd.f32 %v288, %v804
        %v806 = vpop.f32.mrf.mxu0
        %v807 = vadd.f32 %v292, %v806
        %v808 = vpop.f32.mrf.mxu0
        %v809 = vadd.f32 %v288, %v808
        %v810 = vpop.f32.mrf.mxu0
        %v811 = vadd.f32 %v292, %v810
        %812 = vmatprep.mubr.bf16.mxu0 0
        %813 = vmatmul.mubr.bf16.gmra.mxu0 %v436
        %v814 = vpop.f32.mrf.mxu0
        %v815 = vadd.f32 %v288, %v814
        %v816 = vpop.f32.mrf.mxu0
        %v817 = vadd.f32 %v292, %v816
        %v818 = vpop.f32.mrf.mxu0
        %v819 = vadd.f32 %v288, %v818
        %v820 = vpop.f32.mrf.mxu0
        %v821 = vadd.f32 %v292, %v820
        %822 = vmatprep.mubr.bf16.mxu0 0
        %823 = vmatmul.mubr.bf16.gmra.mxu0 %v439
        %v824 = vpop.f32.mrf.mxu0
        %v825 = vadd.f32 %v288, %v824
        %v826 = vpop.f32.mrf.mxu0
        %v827 = vadd.f32 %v292, %v826
        %v828 = vpop.f32.mrf.mxu0
        %v829 = vadd.f32 %v288, %v828
        %v830 = vpop.f32.mrf.mxu0
        %v831 = vadd.f32 %v292, %v830
        %832 = vmatprep.mubr.bf16.mxu0 0
        %833 = vmatmul.mubr.bf16.gmra.mxu0 %v442
        %v834 = vpop.f32.mrf.mxu0
        %v835 = vadd.f32 %v288, %v834
        %v836 = vpop.f32.mrf.mxu0
        %v837 = vadd.f32 %v292, %v836
        %v838 = vpop.f32.mrf.mxu0
        %v839 = vadd.f32 %v288, %v838
        %v840 = vpop.f32.mrf.mxu0
        %v841 = vadd.f32 %v292, %v840
        %842 = vdwg.mxu0
        %v843 = vpack.c.bf16 %v496, %v492
        %v844 = vpack.c.bf16 %v498, %v494
        %v845 = vpack.c.bf16 %v689, %v685
        %v846 = vpack.c.bf16 %v691, %v687
        %v847 = vpack.c.bf16 %v506, %v502
        %v848 = vpack.c.bf16 %v508, %v504
        %v849 = vpack.c.bf16 %v699, %v695
        %v850 = vpack.c.bf16 %v701, %v697
        %v851 = vpack.c.bf16 %v516, %v512
        %v852 = vpack.c.bf16 %v518, %v514
        %v853 = vpack.c.bf16 %v709, %v705
        %v854 = vpack.c.bf16 %v711, %v707
        %v855 = vpack.c.bf16 %v526, %v522
        %v856 = vpack.c.bf16 %v528, %v524
        %v857 = vpack.c.bf16 %v719, %v715
        %v858 = vpack.c.bf16 %v721, %v717
        %v859 = vpack.c.bf16 %v536, %v532
        %v860 = vpack.c.bf16 %v538, %v534
        %v861 = vpack.c.bf16 %v729, %v725
        %v862 = vpack.c.bf16 %v731, %v727
        %v863 = vpack.c.bf16 %v546, %v542
        %v864 = vpack.c.bf16 %v548, %v544
        %v865 = vpack.c.bf16 %v739, %v735
        %v866 = vpack.c.bf16 %v741, %v737
        %v867 = vpack.c.bf16 %v556, %v552
        %v868 = vpack.c.bf16 %v558, %v554
        %v869 = vpack.c.bf16 %v749, %v745
        %v870 = vpack.c.bf16 %v751, %v747
        %v871 = vpack.c.bf16 %v566, %v562
        %v872 = vpack.c.bf16 %v568, %v564
        %v873 = vpack.c.bf16 %v759, %v755
        %v874 = vpack.c.bf16 %v761, %v757
        %v875 = vpack.c.bf16 %v576, %v572
        %v876 = vpack.c.bf16 %v578, %v574
        %v877 = vpack.c.bf16 %v769, %v765
        %v878 = vpack.c.bf16 %v771, %v767
        %v879 = vpack.c.bf16 %v586, %v582
        %v880 = vpack.c.bf16 %v588, %v584
        %v881 = vpack.c.bf16 %v779, %v775
        %v882 = vpack.c.bf16 %v781, %v777
        %v883 = vpack.c.bf16 %v596, %v592
        %v884 = vpack.c.bf16 %v598, %v594
        %v885 = vpack.c.bf16 %v789, %v785
        %v886 = vpack.c.bf16 %v791, %v787
        %v887 = vpack.c.bf16 %v606, %v602
        %v888 = vpack.c.bf16 %v608, %v604
        %v889 = vpack.c.bf16 %v799, %v795
        %v890 = vpack.c.bf16 %v801, %v797
        %v891 = vpack.c.bf16 %v616, %v612
        %v892 = vpack.c.bf16 %v618, %v614
        %v893 = vpack.c.bf16 %v809, %v805
        %v894 = vpack.c.bf16 %v811, %v807
        %v895 = vpack.c.bf16 %v626, %v622
        %v896 = vpack.c.bf16 %v628, %v624
        %v897 = vpack.c.bf16 %v819, %v815
        %v898 = vpack.c.bf16 %v821, %v817
        %v899 = vpack.c.bf16 %v636, %v632
        %v900 = vpack.c.bf16 %v638, %v634
        %v901 = vpack.c.bf16 %v829, %v825
        %v902 = vpack.c.bf16 %v831, %v827
        %v903 = vpack.c.bf16 %v646, %v642
        %v904 = vpack.c.bf16 %v648, %v644
        %v905 = vpack.c.bf16 %v839, %v835
        %v906 = vpack.c.bf16 %v841, %v837
        %v907 = vld [vmem:[#allocation2] sm:$0xf]
        %v908 = vld [vmem:[#allocation2 + $0x4] sm:$0xf]
        %v909 = vld [vmem:[#allocation2 + $0x8] sm:$0xf]
        %v910 = vld [vmem:[#allocation2 + $0xc] sm:$0xf]
        %v911 = vld [vmem:[#allocation2 + $0x10] sm:$0xf]
        %v912 = vld [vmem:[#allocation2 + $0x14] sm:$0xf]
        %v913 = vld [vmem:[#allocation2 + $0x18] sm:$0xf]
        %v914 = vld [vmem:[#allocation2 + $0x1c] sm:$0xf]
        %v915 = vld [vmem:[#allocation2 + $0x20] sm:$0xf]
        %v916 = vld [vmem:[#allocation2 + $0x24] sm:$0xf]
        %v917 = vld [vmem:[#allocation2 + $0x28] sm:$0xf]
        %v918 = vld [vmem:[#allocation2 + $0x2c] sm:$0xf]
        %v919 = vld [vmem:[#allocation2 + $0x30] sm:$0xf]
        %v920 = vld [vmem:[#allocation2 + $0x34] sm:$0xf]
        %v921 = vld [vmem:[#allocation2 + $0x38] sm:$0xf]
        %v922 = vld [vmem:[#allocation2 + $0x3c] sm:$0xf]
        %v923 = vld [vmem:[#allocation2 + $0x40] sm:$0xf]
        %v924 = vld [vmem:[#allocation2 + $0x44] sm:$0xf]
        %v925 = vld [vmem:[#allocation2 + $0x48] sm:$0xf]
        %v926 = vld [vmem:[#allocation2 + $0x4c] sm:$0xf]
        %v927 = vld [vmem:[#allocation2 + $0x50] sm:$0xf]
        %v928 = vld [vmem:[#allocation2 + $0x54] sm:$0xf]
        %v929 = vld [vmem:[#allocation2 + $0x58] sm:$0xf]
        %v930 = vld [vmem:[#allocation2 + $0x5c] sm:$0xf]
        %v931 = vld [vmem:[#allocation2 + $0x60] sm:$0xf]
        %v932 = vld [vmem:[#allocation2 + $0x64] sm:$0xf]
        %v933 = vld [vmem:[#allocation2 + $0x68] sm:$0xf]
        %v934 = vld [vmem:[#allocation2 + $0x6c] sm:$0xf]
        %v935 = vld [vmem:[#allocation2 + $0x70] sm:$0xf]
        %v936 = vld [vmem:[#allocation2 + $0x74] sm:$0xf]
        %v937 = vld [vmem:[#allocation2 + $0x78] sm:$0xf]
        %v938 = vld [vmem:[#allocation2 + $0x7c] sm:$0xf]
        %v939 = vld [vmem:[#allocation2 + $0x80] sm:$0xf]
        %v940 = vld [vmem:[#allocation2 + $0x84] sm:$0xf]
        %v941 = vld [vmem:[#allocation2 + $0x88] sm:$0xf]
        %v942 = vld [vmem:[#allocation2 + $0x8c] sm:$0xf]
        %v943 = vld [vmem:[#allocation2 + $0x90] sm:$0xf]
        %v944 = vld [vmem:[#allocation2 + $0x94] sm:$0xf]
        %v945 = vld [vmem:[#allocation2 + $0x98] sm:$0xf]
        %v946 = vld [vmem:[#allocation2 + $0x9c] sm:$0xf]
        %v947 = vld [vmem:[#allocation2 + $0xa0] sm:$0xf]
        %v948 = vld [vmem:[#allocation2 + $0xa4] sm:$0xf]
        %v949 = vld [vmem:[#allocation2 + $0xa8] sm:$0xf]
        %v950 = vld [vmem:[#allocation2 + $0xac] sm:$0xf]
        %v951 = vld [vmem:[#allocation2 + $0xb0] sm:$0xf]
        %v952 = vld [vmem:[#allocation2 + $0xb4] sm:$0xf]
        %v953 = vld [vmem:[#allocation2 + $0xb8] sm:$0xf]
        %v954 = vld [vmem:[#allocation2 + $0xbc] sm:$0xf]
        %v955 = vld [vmem:[#allocation2 + $0xc0] sm:$0xf]
        %v956 = vld [vmem:[#allocation2 + $0xc4] sm:$0xf]
        %v957 = vld [vmem:[#allocation2 + $0xc8] sm:$0xf]
        %v958 = vld [vmem:[#allocation2 + $0xcc] sm:$0xf]
        %v959 = vld [vmem:[#allocation2 + $0xd0] sm:$0xf]
        %v960 = vld [vmem:[#allocation2 + $0xd4] sm:$0xf]
        %v961 = vld [vmem:[#allocation2 + $0xd8] sm:$0xf]
        %v962 = vld [vmem:[#allocation2 + $0xdc] sm:$0xf]
        %v963 = vld [vmem:[#allocation2 + $0xe0] sm:$0xf]
        %v964 = vld [vmem:[#allocation2 + $0xe4] sm:$0xf]
        %v965 = vld [vmem:[#allocation2 + $0xe8] sm:$0xf]
        %v966 = vld [vmem:[#allocation2 + $0xec] sm:$0xf]
        %v967 = vld [vmem:[#allocation2 + $0xf0] sm:$0xf]
        %v968 = vld [vmem:[#allocation2 + $0xf4] sm:$0xf]
        %v969 = vld [vmem:[#allocation2 + $0xf8] sm:$0xf]
        %v970 = vld [vmem:[#allocation2 + $0xfc] sm:$0xf]
        %v971 = vld [vmem:[%s1 + $0x8] sm:$0xff]
        %v972 = vld [vmem:[%s2 + $0x4] sm:$0xf]
        %v974 = vlaneseq
        %v975 = vshrl.u32 %v974, 7
        %v976 = vsub.s32 0, %v975
        %v977 = vrot.slane %v972, %v976
        %v978 = vlaneseq
        %v979 = vshrl.u32 %v978, 7
        %v980 = vsub.s32 1, %v979
        %v981 = vrot.slane %v972, %v980
        %v982 = vlaneseq
        %v983 = vshrl.u32 %v982, 7
        %v984 = vsub.s32 2, %v983
        %v985 = vrot.slane %v972, %v984
        %v986 = vlaneseq
        %v987 = vshrl.u32 %v986, 7
        %v988 = vsub.s32 3, %v987
        %v989 = vrot.slane %v972, %v988
        %v995 = vcombine.high %v971, %v971
        %v997 = vunpack.c.l.s4 1983009808
        %v998 = vunpack.c.0.s8 %v997
        %v999 = vlaneseq
        %v1000 = vshrl.u32 %v999, 7
        %v1001 = vsub.s32 %v998, %v1000
        %v1002 = vrot.slane %v971, %v1001
        %v1004 = vunpack.c.l.s4 1983009808
        %v1005 = vunpack.c.0.s8 %v1004
        %v1006 = vlaneseq
        %v1007 = vshrl.u32 %v1006, 7
        %v1008 = vsub.s32 %v1005, %v1007
        %v1009 = vrot.slane %v995, %v1008
        %v1010 = vcombine.high %v1002, %v1002
        %v1011 = vcombine.high %v1009, %v1009
        %v1013 = vsel %vm444, %v1002, 0
        %v1016 = vsel %vm444, %v1010, 0
        %v1019 = vsel %vm444, %v1009, 0
        %v1022 = vsel %vm444, %v1011, 0
        %1024 = vmatprep.subr.bf16.mxu0 0
        %1025 = vmatpush1.bf16.msra.mxu0 0
        %1026 = vmatprep.subr.bf16.mxu0 0
        %1027 = vmatpush1.bf16.msra.mxu0 0
        %1028 = vmatprep.subr.bf16.mxu0 0
        %1029 = vmatpush1.bf16.msra.mxu0 0
        %1030 = vmatprep.subr.bf16.mxu0 0
        %1031 = vmatpush1.bf16.msra.mxu0 0
        %1032 = vmatprep.subr.bf16.mxu0 0
        %1033 = vmatpush1.bf16.msra.mxu0 0
        %1034 = vmatprep.subr.bf16.mxu0 0
        %1035 = vmatpush1.bf16.msra.mxu0 0
        %1036 = vmatprep.subr.bf16.mxu0 0
        %1037 = vmatpush1.bf16.msra.mxu0 0
        %1038 = vmatprep.subr.bf16.mxu0 %v1016
        %1039 = vmatpush1.bf16.msra.mxu0 %v1013
        %1040 = vmatprep.subr.bf16.mxu0 0
        %1041 = vmatpush2.bf16.msra.mxu0 0
        %1042 = vmatprep.subr.bf16.mxu0 0
        %1043 = vmatpush2.bf16.msra.mxu0 0
        %1044 = vmatprep.subr.bf16.mxu0 0
        %1045 = vmatpush2.bf16.msra.mxu0 0
        %1046 = vmatprep.subr.bf16.mxu0 0
        %1047 = vmatpush2.bf16.msra.mxu0 0
        %1048 = vmatprep.subr.bf16.mxu0 0
        %1049 = vmatpush2.bf16.msra.mxu0 0
        %1050 = vmatprep.subr.bf16.mxu0 0
        %1051 = vmatpush2.bf16.msra.mxu0 0
        %1052 = vmatprep.subr.bf16.mxu0 0
        %1053 = vmatpush2.bf16.msra.mxu0 0
        %1054 = vmatprep.subr.bf16.mxu0 0
        %1055 = vmatpush2.bf16.msra.mxu0 0
        %1056 = vmatprep.mubr.bf16.mxu0 0
        %1057 = vmatmul.mubr.bf16.gmra.mxu0 %v397
        %v1058 = vpop.f32.mrf.mxu0
        %v1059 = vadd.f32 %v977, %v1058
        %v1060 = vpop.f32.mrf.mxu0
        %v1061 = vadd.f32 %v981, %v1060
        %v1062 = vpop.f32.mrf.mxu0
        %v1063 = vadd.f32 %v977, %v1062
        %v1064 = vpop.f32.mrf.mxu0
        %v1065 = vadd.f32 %v981, %v1064
        %1066 = vmatprep.mubr.bf16.mxu0 0
        %1067 = vmatmul.mubr.bf16.gmra.mxu0 %v400
        %v1068 = vpop.f32.mrf.mxu0
        %v1069 = vadd.f32 %v977, %v1068
        %v1070 = vpop.f32.mrf.mxu0
        %v1071 = vadd.f32 %v981, %v1070
        %v1072 = vpop.f32.mrf.mxu0
        %v1073 = vadd.f32 %v977, %v1072
        %v1074 = vpop.f32.mrf.mxu0
        %v1075 = vadd.f32 %v981, %v1074
        %1076 = vmatprep.mubr.bf16.mxu0 0
        %1077 = vmatmul.mubr.bf16.gmra.mxu0 %v403
        %v1078 = vpop.f32.mrf.mxu0
        %v1079 = vadd.f32 %v977, %v1078
        %v1080 = vpop.f32.mrf.mxu0
        %v1081 = vadd.f32 %v981, %v1080
        %v1082 = vpop.f32.mrf.mxu0
        %v1083 = vadd.f32 %v977, %v1082
        %v1084 = vpop.f32.mrf.mxu0
        %v1085 = vadd.f32 %v981, %v1084
        %1086 = vmatprep.mubr.bf16.mxu0 0
        %1087 = vmatmul.mubr.bf16.gmra.mxu0 %v406
        %v1088 = vpop.f32.mrf.mxu0
        %v1089 = vadd.f32 %v977, %v1088
        %v1090 = vpop.f32.mrf.mxu0
        %v1091 = vadd.f32 %v981, %v1090
        %v1092 = vpop.f32.mrf.mxu0
        %v1093 = vadd.f32 %v977, %v1092
        %v1094 = vpop.f32.mrf.mxu0
        %v1095 = vadd.f32 %v981, %v1094
        %1096 = vmatprep.mubr.bf16.mxu0 0
        %1097 = vmatmul.mubr.bf16.gmra.mxu0 %v409
        %v1098 = vpop.f32.mrf.mxu0
        %v1099 = vadd.f32 %v977, %v1098
        %v1100 = vpop.f32.mrf.mxu0
        %v1101 = vadd.f32 %v981, %v1100
        %v1102 = vpop.f32.mrf.mxu0
        %v1103 = vadd.f32 %v977, %v1102
        %v1104 = vpop.f32.mrf.mxu0
        %v1105 = vadd.f32 %v981, %v1104
        %1106 = vmatprep.mubr.bf16.mxu0 0
        %1107 = vmatmul.mubr.bf16.gmra.mxu0 %v412
        %v1108 = vpop.f32.mrf.mxu0
        %v1109 = vadd.f32 %v977, %v1108
        %v1110 = vpop.f32.mrf.mxu0
        %v1111 = vadd.f32 %v981, %v1110
        %v1112 = vpop.f32.mrf.mxu0
        %v1113 = vadd.f32 %v977, %v1112
        %v1114 = vpop.f32.mrf.mxu0
        %v1115 = vadd.f32 %v981, %v1114
        %1116 = vmatprep.mubr.bf16.mxu0 0
        %1117 = vmatmul.mubr.bf16.gmra.mxu0 %v415
        %v1118 = vpop.f32.mrf.mxu0
        %v1119 = vadd.f32 %v977, %v1118
        %v1120 = vpop.f32.mrf.mxu0
        %v1121 = vadd.f32 %v981, %v1120
        %v1122 = vpop.f32.mrf.mxu0
        %v1123 = vadd.f32 %v977, %v1122
        %v1124 = vpop.f32.mrf.mxu0
        %v1125 = vadd.f32 %v981, %v1124
        %1126 = vmatprep.mubr.bf16.mxu0 0
        %1127 = vmatmul.mubr.bf16.gmra.mxu0 %v418
        %v1128 = vpop.f32.mrf.mxu0
        %v1129 = vadd.f32 %v977, %v1128
        %v1130 = vpop.f32.mrf.mxu0
        %v1131 = vadd.f32 %v981, %v1130
        %v1132 = vpop.f32.mrf.mxu0
        %v1133 = vadd.f32 %v977, %v1132
        %v1134 = vpop.f32.mrf.mxu0
        %v1135 = vadd.f32 %v981, %v1134
        %1136 = vmatprep.mubr.bf16.mxu0 0
        %1137 = vmatmul.mubr.bf16.gmra.mxu0 %v421
        %v1138 = vpop.f32.mrf.mxu0
        %v1139 = vadd.f32 %v977, %v1138
        %v1140 = vpop.f32.mrf.mxu0
        %v1141 = vadd.f32 %v981, %v1140
        %v1142 = vpop.f32.mrf.mxu0
        %v1143 = vadd.f32 %v977, %v1142
        %v1144 = vpop.f32.mrf.mxu0
        %v1145 = vadd.f32 %v981, %v1144
        %1146 = vmatprep.mubr.bf16.mxu0 0
        %1147 = vmatmul.mubr.bf16.gmra.mxu0 %v424
        %v1148 = vpop.f32.mrf.mxu0
        %v1149 = vadd.f32 %v977, %v1148
        %v1150 = vpop.f32.mrf.mxu0
        %v1151 = vadd.f32 %v981, %v1150
        %v1152 = vpop.f32.mrf.mxu0
        %v1153 = vadd.f32 %v977, %v1152
        %v1154 = vpop.f32.mrf.mxu0
        %v1155 = vadd.f32 %v981, %v1154
        %1156 = vmatprep.mubr.bf16.mxu0 0
        %1157 = vmatmul.mubr.bf16.gmra.mxu0 %v427
        %v1158 = vpop.f32.mrf.mxu0
        %v1159 = vadd.f32 %v977, %v1158
        %v1160 = vpop.f32.mrf.mxu0
        %v1161 = vadd.f32 %v981, %v1160
        %v1162 = vpop.f32.mrf.mxu0
        %v1163 = vadd.f32 %v977, %v1162
        %v1164 = vpop.f32.mrf.mxu0
        %v1165 = vadd.f32 %v981, %v1164
        %1166 = vmatprep.mubr.bf16.mxu0 0
        %1167 = vmatmul.mubr.bf16.gmra.mxu0 %v430
        %v1168 = vpop.f32.mrf.mxu0
        %v1169 = vadd.f32 %v977, %v1168
        %v1170 = vpop.f32.mrf.mxu0
        %v1171 = vadd.f32 %v981, %v1170
        %v1172 = vpop.f32.mrf.mxu0
        %v1173 = vadd.f32 %v977, %v1172
        %v1174 = vpop.f32.mrf.mxu0
        %v1175 = vadd.f32 %v981, %v1174
        %1176 = vmatprep.mubr.bf16.mxu0 0
        %1177 = vmatmul.mubr.bf16.gmra.mxu0 %v433
        %v1178 = vpop.f32.mrf.mxu0
        %v1179 = vadd.f32 %v977, %v1178
        %v1180 = vpop.f32.mrf.mxu0
        %v1181 = vadd.f32 %v981, %v1180
        %v1182 = vpop.f32.mrf.mxu0
        %v1183 = vadd.f32 %v977, %v1182
        %v1184 = vpop.f32.mrf.mxu0
        %v1185 = vadd.f32 %v981, %v1184
        %1186 = vmatprep.mubr.bf16.mxu0 0
        %1187 = vmatmul.mubr.bf16.gmra.mxu0 %v436
        %v1188 = vpop.f32.mrf.mxu0
        %v1189 = vadd.f32 %v977, %v1188
        %v1190 = vpop.f32.mrf.mxu0
        %v1191 = vadd.f32 %v981, %v1190
        %v1192 = vpop.f32.mrf.mxu0
        %v1193 = vadd.f32 %v977, %v1192
        %v1194 = vpop.f32.mrf.mxu0
        %v1195 = vadd.f32 %v981, %v1194
        %1196 = vmatprep.mubr.bf16.mxu0 0
        %1197 = vmatmul.mubr.bf16.gmra.mxu0 %v439
        %v1198 = vpop.f32.mrf.mxu0
        %v1199 = vadd.f32 %v977, %v1198
        %v1200 = vpop.f32.mrf.mxu0
        %v1201 = vadd.f32 %v981, %v1200
        %v1202 = vpop.f32.mrf.mxu0
        %v1203 = vadd.f32 %v977, %v1202
        %v1204 = vpop.f32.mrf.mxu0
        %v1205 = vadd.f32 %v981, %v1204
        %1206 = vmatprep.mubr.bf16.mxu0 0
        %1207 = vmatmul.mubr.bf16.gmra.mxu0 %v442
        %v1208 = vpop.f32.mrf.mxu0
        %v1209 = vadd.f32 %v977, %v1208
        %v1210 = vpop.f32.mrf.mxu0
        %v1211 = vadd.f32 %v981, %v1210
        %v1212 = vpop.f32.mrf.mxu0
        %v1213 = vadd.f32 %v977, %v1212
        %v1214 = vpop.f32.mrf.mxu0
        %v1215 = vadd.f32 %v981, %v1214
        %1216 = vdwg.mxu0
        %1217 = vmatprep.subr.bf16.mxu0 0
        %1218 = vmatpush1.bf16.msra.mxu0 0
        %1219 = vmatprep.subr.bf16.mxu0 0
        %1220 = vmatpush1.bf16.msra.mxu0 0
        %1221 = vmatprep.subr.bf16.mxu0 0
        %1222 = vmatpush1.bf16.msra.mxu0 0
        %1223 = vmatprep.subr.bf16.mxu0 0
        %1224 = vmatpush1.bf16.msra.mxu0 0
        %1225 = vmatprep.subr.bf16.mxu0 0
        %1226 = vmatpush1.bf16.msra.mxu0 0
        %1227 = vmatprep.subr.bf16.mxu0 0
        %1228 = vmatpush1.bf16.msra.mxu0 0
        %1229 = vmatprep.subr.bf16.mxu0 0
        %1230 = vmatpush1.bf16.msra.mxu0 0
        %1231 = vmatprep.subr.bf16.mxu0 %v1022
        %1232 = vmatpush1.bf16.msra.mxu0 %v1019
        %1233 = vmatprep.subr.bf16.mxu0 0
        %1234 = vmatpush2.bf16.msra.mxu0 0
        %1235 = vmatprep.subr.bf16.mxu0 0
        %1236 = vmatpush2.bf16.msra.mxu0 0
        %1237 = vmatprep.subr.bf16.mxu0 0
        %1238 = vmatpush2.bf16.msra.mxu0 0
        %1239 = vmatprep.subr.bf16.mxu0 0
        %1240 = vmatpush2.bf16.msra.mxu0 0
        %1241 = vmatprep.subr.bf16.mxu0 0
        %1242 = vmatpush2.bf16.msra.mxu0 0
        %1243 = vmatprep.subr.bf16.mxu0 0
        %1244 = vmatpush2.bf16.msra.mxu0 0
        %1245 = vmatprep.subr.bf16.mxu0 0
        %1246 = vmatpush2.bf16.msra.mxu0 0
        %1247 = vmatprep.subr.bf16.mxu0 0
        %1248 = vmatpush2.bf16.msra.mxu0 0
        %1249 = vmatprep.mubr.bf16.mxu0 0
        %1250 = vmatmul.mubr.bf16.gmra.mxu0 %v397
        %v1251 = vpop.f32.mrf.mxu0
        %v1252 = vadd.f32 %v985, %v1251
        %v1253 = vpop.f32.mrf.mxu0
        %v1254 = vadd.f32 %v989, %v1253
        %v1255 = vpop.f32.mrf.mxu0
        %v1256 = vadd.f32 %v985, %v1255
        %v1257 = vpop.f32.mrf.mxu0
        %v1258 = vadd.f32 %v989, %v1257
        %1259 = vmatprep.mubr.bf16.mxu0 0
        %1260 = vmatmul.mubr.bf16.gmra.mxu0 %v400
        %v1261 = vpop.f32.mrf.mxu0
        %v1262 = vadd.f32 %v985, %v1261
        %v1263 = vpop.f32.mrf.mxu0
        %v1264 = vadd.f32 %v989, %v1263
        %v1265 = vpop.f32.mrf.mxu0
        %v1266 = vadd.f32 %v985, %v1265
        %v1267 = vpop.f32.mrf.mxu0
        %v1268 = vadd.f32 %v989, %v1267
        %1269 = vmatprep.mubr.bf16.mxu0 0
        %1270 = vmatmul.mubr.bf16.gmra.mxu0 %v403
        %v1271 = vpop.f32.mrf.mxu0
        %v1272 = vadd.f32 %v985, %v1271
        %v1273 = vpop.f32.mrf.mxu0
        %v1274 = vadd.f32 %v989, %v1273
        %v1275 = vpop.f32.mrf.mxu0
        %v1276 = vadd.f32 %v985, %v1275
        %v1277 = vpop.f32.mrf.mxu0
        %v1278 = vadd.f32 %v989, %v1277
        %1279 = vmatprep.mubr.bf16.mxu0 0
        %1280 = vmatmul.mubr.bf16.gmra.mxu0 %v406
        %v1281 = vpop.f32.mrf.mxu0
        %v1282 = vadd.f32 %v985, %v1281
        %v1283 = vpop.f32.mrf.mxu0
        %v1284 = vadd.f32 %v989, %v1283
        %v1285 = vpop.f32.mrf.mxu0
        %v1286 = vadd.f32 %v985, %v1285
        %v1287 = vpop.f32.mrf.mxu0
        %v1288 = vadd.f32 %v989, %v1287
        %1289 = vmatprep.mubr.bf16.mxu0 0
        %1290 = vmatmul.mubr.bf16.gmra.mxu0 %v409
        %v1291 = vpop.f32.mrf.mxu0
        %v1292 = vadd.f32 %v985, %v1291
        %v1293 = vpop.f32.mrf.mxu0
        %v1294 = vadd.f32 %v989, %v1293
        %v1295 = vpop.f32.mrf.mxu0
        %v1296 = vadd.f32 %v985, %v1295
        %v1297 = vpop.f32.mrf.mxu0
        %v1298 = vadd.f32 %v989, %v1297
        %1299 = vmatprep.mubr.bf16.mxu0 0
        %1300 = vmatmul.mubr.bf16.gmra.mxu0 %v412
        %v1301 = vpop.f32.mrf.mxu0
        %v1302 = vadd.f32 %v985, %v1301
        %v1303 = vpop.f32.mrf.mxu0
        %v1304 = vadd.f32 %v989, %v1303
        %v1305 = vpop.f32.mrf.mxu0
        %v1306 = vadd.f32 %v985, %v1305
        %v1307 = vpop.f32.mrf.mxu0
        %v1308 = vadd.f32 %v989, %v1307
        %1309 = vmatprep.mubr.bf16.mxu0 0
        %1310 = vmatmul.mubr.bf16.gmra.mxu0 %v415
        %v1311 = vpop.f32.mrf.mxu0
        %v1312 = vadd.f32 %v985, %v1311
        %v1313 = vpop.f32.mrf.mxu0
        %v1314 = vadd.f32 %v989, %v1313
        %v1315 = vpop.f32.mrf.mxu0
        %v1316 = vadd.f32 %v985, %v1315
        %v1317 = vpop.f32.mrf.mxu0
        %v1318 = vadd.f32 %v989, %v1317
        %1319 = vmatprep.mubr.bf16.mxu0 0
        %1320 = vmatmul.mubr.bf16.gmra.mxu0 %v418
        %v1321 = vpop.f32.mrf.mxu0
        %v1322 = vadd.f32 %v985, %v1321
        %v1323 = vpop.f32.mrf.mxu0
        %v1324 = vadd.f32 %v989, %v1323
        %v1325 = vpop.f32.mrf.mxu0
        %v1326 = vadd.f32 %v985, %v1325
        %v1327 = vpop.f32.mrf.mxu0
        %v1328 = vadd.f32 %v989, %v1327
        %1329 = vmatprep.mubr.bf16.mxu0 0
        %1330 = vmatmul.mubr.bf16.gmra.mxu0 %v421
        %v1331 = vpop.f32.mrf.mxu0
        %v1332 = vadd.f32 %v985, %v1331
        %v1333 = vpop.f32.mrf.mxu0
        %v1334 = vadd.f32 %v989, %v1333
        %v1335 = vpop.f32.mrf.mxu0
        %v1336 = vadd.f32 %v985, %v1335
        %v1337 = vpop.f32.mrf.mxu0
        %v1338 = vadd.f32 %v989, %v1337
        %1339 = vmatprep.mubr.bf16.mxu0 0
        %1340 = vmatmul.mubr.bf16.gmra.mxu0 %v424
        %v1341 = vpop.f32.mrf.mxu0
        %v1342 = vadd.f32 %v985, %v1341
        %v1343 = vpop.f32.mrf.mxu0
        %v1344 = vadd.f32 %v989, %v1343
        %v1345 = vpop.f32.mrf.mxu0
        %v1346 = vadd.f32 %v985, %v1345
        %v1347 = vpop.f32.mrf.mxu0
        %v1348 = vadd.f32 %v989, %v1347
        %1349 = vmatprep.mubr.bf16.mxu0 0
        %1350 = vmatmul.mubr.bf16.gmra.mxu0 %v427
        %v1351 = vpop.f32.mrf.mxu0
        %v1352 = vadd.f32 %v985, %v1351
        %v1353 = vpop.f32.mrf.mxu0
        %v1354 = vadd.f32 %v989, %v1353
        %v1355 = vpop.f32.mrf.mxu0
        %v1356 = vadd.f32 %v985, %v1355
        %v1357 = vpop.f32.mrf.mxu0
        %v1358 = vadd.f32 %v989, %v1357
        %1359 = vmatprep.mubr.bf16.mxu0 0
        %1360 = vmatmul.mubr.bf16.gmra.mxu0 %v430
        %v1361 = vpop.f32.mrf.mxu0
        %v1362 = vadd.f32 %v985, %v1361
        %v1363 = vpop.f32.mrf.mxu0
        %v1364 = vadd.f32 %v989, %v1363
        %v1365 = vpop.f32.mrf.mxu0
        %v1366 = vadd.f32 %v985, %v1365
        %v1367 = vpop.f32.mrf.mxu0
        %v1368 = vadd.f32 %v989, %v1367
        %1369 = vmatprep.mubr.bf16.mxu0 0
        %1370 = vmatmul.mubr.bf16.gmra.mxu0 %v433
        %v1371 = vpop.f32.mrf.mxu0
        %v1372 = vadd.f32 %v985, %v1371
        %v1373 = vpop.f32.mrf.mxu0
        %v1374 = vadd.f32 %v989, %v1373
        %v1375 = vpop.f32.mrf.mxu0
        %v1376 = vadd.f32 %v985, %v1375
        %v1377 = vpop.f32.mrf.mxu0
        %v1378 = vadd.f32 %v989, %v1377
        %1379 = vmatprep.mubr.bf16.mxu0 0
        %1380 = vmatmul.mubr.bf16.gmra.mxu0 %v436
        %v1381 = vpop.f32.mrf.mxu0
        %v1382 = vadd.f32 %v985, %v1381
        %v1383 = vpop.f32.mrf.mxu0
        %v1384 = vadd.f32 %v989, %v1383
        %v1385 = vpop.f32.mrf.mxu0
        %v1386 = vadd.f32 %v985, %v1385
        %v1387 = vpop.f32.mrf.mxu0
        %v1388 = vadd.f32 %v989, %v1387
        %1389 = vmatprep.mubr.bf16.mxu0 0
        %1390 = vmatmul.mubr.bf16.gmra.mxu0 %v439
        %v1391 = vpop.f32.mrf.mxu0
        %v1392 = vadd.f32 %v985, %v1391
        %v1393 = vpop.f32.mrf.mxu0
        %v1394 = vadd.f32 %v989, %v1393
        %v1395 = vpop.f32.mrf.mxu0
        %v1396 = vadd.f32 %v985, %v1395
        %v1397 = vpop.f32.mrf.mxu0
        %v1398 = vadd.f32 %v989, %v1397
        %1399 = vmatprep.mubr.bf16.mxu0 0
        %1400 = vmatmul.mubr.bf16.gmra.mxu0 %v442
        %v1401 = vpop.f32.mrf.mxu0
        %v1402 = vadd.f32 %v985, %v1401
        %v1403 = vpop.f32.mrf.mxu0
        %v1404 = vadd.f32 %v989, %v1403
        %v1405 = vpop.f32.mrf.mxu0
        %v1406 = vadd.f32 %v985, %v1405
        %v1407 = vpop.f32.mrf.mxu0
        %v1408 = vadd.f32 %v989, %v1407
        %1409 = vdwg.mxu0
        %v1410 = vpack.c.bf16 %v1063, %v1059
        %v1411 = vpack.c.bf16 %v1065, %v1061
        %v1412 = vpack.c.bf16 %v1256, %v1252
        %v1413 = vpack.c.bf16 %v1258, %v1254
        %v1414 = vpack.c.bf16 %v1073, %v1069
        %v1415 = vpack.c.bf16 %v1075, %v1071
        %v1416 = vpack.c.bf16 %v1266, %v1262
        %v1417 = vpack.c.bf16 %v1268, %v1264
        %v1418 = vpack.c.bf16 %v1083, %v1079
        %v1419 = vpack.c.bf16 %v1085, %v1081
        %v1420 = vpack.c.bf16 %v1276, %v1272
        %v1421 = vpack.c.bf16 %v1278, %v1274
        %v1422 = vpack.c.bf16 %v1093, %v1089
        %v1423 = vpack.c.bf16 %v1095, %v1091
        %v1424 = vpack.c.bf16 %v1286, %v1282
        %v1425 = vpack.c.bf16 %v1288, %v1284
        %v1426 = vpack.c.bf16 %v1103, %v1099
        %v1427 = vpack.c.bf16 %v1105, %v1101
        %v1428 = vpack.c.bf16 %v1296, %v1292
        %v1429 = vpack.c.bf16 %v1298, %v1294
        %v1430 = vpack.c.bf16 %v1113, %v1109
        %v1431 = vpack.c.bf16 %v1115, %v1111
        %v1432 = vpack.c.bf16 %v1306, %v1302
        %v1433 = vpack.c.bf16 %v1308, %v1304
        %v1434 = vpack.c.bf16 %v1123, %v1119
        %v1435 = vpack.c.bf16 %v1125, %v1121
        %v1436 = vpack.c.bf16 %v1316, %v1312
        %v1437 = vpack.c.bf16 %v1318, %v1314
        %v1438 = vpack.c.bf16 %v1133, %v1129
        %v1439 = vpack.c.bf16 %v1135, %v1131
        %v1440 = vpack.c.bf16 %v1326, %v1322
        %v1441 = vpack.c.bf16 %v1328, %v1324
        %v1442 = vpack.c.bf16 %v1143, %v1139
        %v1443 = vpack.c.bf16 %v1145, %v1141
        %v1444 = vpack.c.bf16 %v1336, %v1332
        %v1445 = vpack.c.bf16 %v1338, %v1334
        %v1446 = vpack.c.bf16 %v1153, %v1149
        %v1447 = vpack.c.bf16 %v1155, %v1151
        %v1448 = vpack.c.bf16 %v1346, %v1342
        %v1449 = vpack.c.bf16 %v1348, %v1344
        %v1450 = vpack.c.bf16 %v1163, %v1159
        %v1451 = vpack.c.bf16 %v1165, %v1161
        %v1452 = vpack.c.bf16 %v1356, %v1352
        %v1453 = vpack.c.bf16 %v1358, %v1354
        %v1454 = vpack.c.bf16 %v1173, %v1169
        %v1455 = vpack.c.bf16 %v1175, %v1171
        %v1456 = vpack.c.bf16 %v1366, %v1362
        %v1457 = vpack.c.bf16 %v1368, %v1364
        %v1458 = vpack.c.bf16 %v1183, %v1179
        %v1459 = vpack.c.bf16 %v1185, %v1181
        %v1460 = vpack.c.bf16 %v1376, %v1372
        %v1461 = vpack.c.bf16 %v1378, %v1374
        %v1462 = vpack.c.bf16 %v1193, %v1189
        %v1463 = vpack.c.bf16 %v1195, %v1191
        %v1464 = vpack.c.bf16 %v1386, %v1382
        %v1465 = vpack.c.bf16 %v1388, %v1384
        %v1466 = vpack.c.bf16 %v1203, %v1199
        %v1467 = vpack.c.bf16 %v1205, %v1201
        %v1468 = vpack.c.bf16 %v1396, %v1392
        %v1469 = vpack.c.bf16 %v1398, %v1394
        %v1470 = vpack.c.bf16 %v1213, %v1209
        %v1471 = vpack.c.bf16 %v1215, %v1211
        %v1472 = vpack.c.bf16 %v1406, %v1402
        %v1473 = vpack.c.bf16 %v1408, %v1404
        %v1474 = vld [vmem:[#allocation2 + $0x100] sm:$0xf]
        %v1475 = vld [vmem:[#allocation2 + $0x104] sm:$0xf]
        %v1476 = vld [vmem:[#allocation2 + $0x108] sm:$0xf]
        %v1477 = vld [vmem:[#allocation2 + $0x10c] sm:$0xf]
        %v1478 = vld [vmem:[#allocation2 + $0x110] sm:$0xf]
        %v1479 = vld [vmem:[#allocation2 + $0x114] sm:$0xf]
        %v1480 = vld [vmem:[#allocation2 + $0x118] sm:$0xf]
        %v1481 = vld [vmem:[#allocation2 + $0x11c] sm:$0xf]
        %v1482 = vld [vmem:[#allocation2 + $0x120] sm:$0xf]
        %v1483 = vld [vmem:[#allocation2 + $0x124] sm:$0xf]
        %v1484 = vld [vmem:[#allocation2 + $0x128] sm:$0xf]
        %v1485 = vld [vmem:[#allocation2 + $0x12c] sm:$0xf]
        %v1486 = vld [vmem:[#allocation2 + $0x130] sm:$0xf]
        %v1487 = vld [vmem:[#allocation2 + $0x134] sm:$0xf]
        %v1488 = vld [vmem:[#allocation2 + $0x138] sm:$0xf]
        %v1489 = vld [vmem:[#allocation2 + $0x13c] sm:$0xf]
        %v1490 = vld [vmem:[#allocation2 + $0x140] sm:$0xf]
        %v1491 = vld [vmem:[#allocation2 + $0x144] sm:$0xf]
        %v1492 = vld [vmem:[#allocation2 + $0x148] sm:$0xf]
        %v1493 = vld [vmem:[#allocation2 + $0x14c] sm:$0xf]
        %v1494 = vld [vmem:[#allocation2 + $0x150] sm:$0xf]
        %v1495 = vld [vmem:[#allocation2 + $0x154] sm:$0xf]
        %v1496 = vld [vmem:[#allocation2 + $0x158] sm:$0xf]
        %v1497 = vld [vmem:[#allocation2 + $0x15c] sm:$0xf]
        %v1498 = vld [vmem:[#allocation2 + $0x160] sm:$0xf]
        %v1499 = vld [vmem:[#allocation2 + $0x164] sm:$0xf]
        %v1500 = vld [vmem:[#allocation2 + $0x168] sm:$0xf]
        %v1501 = vld [vmem:[#allocation2 + $0x16c] sm:$0xf]
        %v1502 = vld [vmem:[#allocation2 + $0x170] sm:$0xf]
        %v1503 = vld [vmem:[#allocation2 + $0x174] sm:$0xf]
        %v1504 = vld [vmem:[#allocation2 + $0x178] sm:$0xf]
        %v1505 = vld [vmem:[#allocation2 + $0x17c] sm:$0xf]
        %v1506 = vld [vmem:[#allocation2 + $0x180] sm:$0xf]
        %v1507 = vld [vmem:[#allocation2 + $0x184] sm:$0xf]
        %v1508 = vld [vmem:[#allocation2 + $0x188] sm:$0xf]
        %v1509 = vld [vmem:[#allocation2 + $0x18c] sm:$0xf]
        %v1510 = vld [vmem:[#allocation2 + $0x190] sm:$0xf]
        %v1511 = vld [vmem:[#allocation2 + $0x194] sm:$0xf]
        %v1512 = vld [vmem:[#allocation2 + $0x198] sm:$0xf]
        %v1513 = vld [vmem:[#allocation2 + $0x19c] sm:$0xf]
        %v1514 = vld [vmem:[#allocation2 + $0x1a0] sm:$0xf]
        %v1515 = vld [vmem:[#allocation2 + $0x1a4] sm:$0xf]
        %v1516 = vld [vmem:[#allocation2 + $0x1a8] sm:$0xf]
        %v1517 = vld [vmem:[#allocation2 + $0x1ac] sm:$0xf]
        %v1518 = vld [vmem:[#allocation2 + $0x1b0] sm:$0xf]
        %v1519 = vld [vmem:[#allocation2 + $0x1b4] sm:$0xf]
        %v1520 = vld [vmem:[#allocation2 + $0x1b8] sm:$0xf]
        %v1521 = vld [vmem:[#allocation2 + $0x1bc] sm:$0xf]
        %v1522 = vld [vmem:[#allocation2 + $0x1c0] sm:$0xf]
        %v1523 = vld [vmem:[#allocation2 + $0x1c4] sm:$0xf]
        %v1524 = vld [vmem:[#allocation2 + $0x1c8] sm:$0xf]
        %v1525 = vld [vmem:[#allocation2 + $0x1cc] sm:$0xf]
        %v1526 = vld [vmem:[#allocation2 + $0x1d0] sm:$0xf]
        %v1527 = vld [vmem:[#allocation2 + $0x1d4] sm:$0xf]
        %v1528 = vld [vmem:[#allocation2 + $0x1d8] sm:$0xf]
        %v1529 = vld [vmem:[#allocation2 + $0x1dc] sm:$0xf]
        %v1530 = vld [vmem:[#allocation2 + $0x1e0] sm:$0xf]
        %v1531 = vld [vmem:[#allocation2 + $0x1e4] sm:$0xf]
        %v1532 = vld [vmem:[#allocation2 + $0x1e8] sm:$0xf]
        %v1533 = vld [vmem:[#allocation2 + $0x1ec] sm:$0xf]
        %v1534 = vld [vmem:[#allocation2 + $0x1f0] sm:$0xf]
        %v1535 = vld [vmem:[#allocation2 + $0x1f4] sm:$0xf]
        %v1536 = vld [vmem:[#allocation2 + $0x1f8] sm:$0xf]
        %v1537 = vld [vmem:[#allocation2 + $0x1fc] sm:$0xf]
        %v1602 = vunpack.c.l.b16 %v1474
        %v1603 = vunpack.c.l.b16 %v1475
        %v1604 = vunpack.c.l.b16 %v1476
        %v1605 = vunpack.c.l.b16 %v1477
        %v1606 = vunpack.c.l.b16 %v1478
        %v1607 = vunpack.c.l.b16 %v1479
        %v1608 = vunpack.c.l.b16 %v1480
        %v1609 = vunpack.c.l.b16 %v1481
        %v1610 = vunpack.c.l.b16 %v1482
        %v1611 = vunpack.c.l.b16 %v1483
        %v1612 = vunpack.c.l.b16 %v1484
        %v1613 = vunpack.c.l.b16 %v1485
        %v1614 = vunpack.c.l.b16 %v1486
        %v1615 = vunpack.c.l.b16 %v1487
        %v1616 = vunpack.c.l.b16 %v1488
        %v1617 = vunpack.c.l.b16 %v1489
        %v1618 = vunpack.c.l.b16 %v1490
        %v1619 = vunpack.c.l.b16 %v1491
        %v1620 = vunpack.c.l.b16 %v1492
        %v1621 = vunpack.c.l.b16 %v1493
        %v1622 = vunpack.c.l.b16 %v1494
        %v1623 = vunpack.c.l.b16 %v1495
        %v1624 = vunpack.c.l.b16 %v1496
        %v1625 = vunpack.c.l.b16 %v1497
        %v1626 = vunpack.c.l.b16 %v1498
        %v1627 = vunpack.c.l.b16 %v1499
        %v1628 = vunpack.c.l.b16 %v1500
        %v1629 = vunpack.c.l.b16 %v1501
        %v1630 = vunpack.c.l.b16 %v1502
        %v1631 = vunpack.c.l.b16 %v1503
        %v1632 = vunpack.c.l.b16 %v1504
        %v1633 = vunpack.c.l.b16 %v1505
        %v1634 = vunpack.c.l.b16 %v1506
        %v1635 = vunpack.c.l.b16 %v1507
        %v1636 = vunpack.c.l.b16 %v1508
        %v1637 = vunpack.c.l.b16 %v1509
        %v1638 = vunpack.c.l.b16 %v1510
        %v1639 = vunpack.c.l.b16 %v1511
        %v1640 = vunpack.c.l.b16 %v1512
        %v1641 = vunpack.c.l.b16 %v1513
        %v1642 = vunpack.c.l.b16 %v1514
        %v1643 = vunpack.c.l.b16 %v1515
        %v1644 = vunpack.c.l.b16 %v1516
        %v1645 = vunpack.c.l.b16 %v1517
        %v1646 = vunpack.c.l.b16 %v1518
        %v1647 = vunpack.c.l.b16 %v1519
        %v1648 = vunpack.c.l.b16 %v1520
        %v1649 = vunpack.c.l.b16 %v1521
        %v1650 = vunpack.c.l.b16 %v1522
        %v1651 = vunpack.c.l.b16 %v1523
        %v1652 = vunpack.c.l.b16 %v1524
        %v1653 = vunpack.c.l.b16 %v1525
        %v1654 = vunpack.c.l.b16 %v1526
        %v1655 = vunpack.c.l.b16 %v1527
        %v1656 = vunpack.c.l.b16 %v1528
        %v1657 = vunpack.c.l.b16 %v1529
        %v1658 = vunpack.c.l.b16 %v1530
        %v1659 = vunpack.c.l.b16 %v1531
        %v1660 = vunpack.c.l.b16 %v1532
        %v1661 = vunpack.c.l.b16 %v1533
        %v1662 = vunpack.c.l.b16 %v1534
        %v1663 = vunpack.c.l.b16 %v1535
        %v1664 = vunpack.c.l.b16 %v1536
        %v1665 = vunpack.c.l.b16 %v1537
        %v1666 = vpack.c.b16 %v1603, %v1602
        %v1667 = vpack.c.b16 %v1605, %v1604
        %v1668 = vpack.c.b16 %v1607, %v1606
        %v1669 = vpack.c.b16 %v1609, %v1608
        %v1670 = vpack.c.b16 %v1611, %v1610
        %v1671 = vpack.c.b16 %v1613, %v1612
        %v1672 = vpack.c.b16 %v1615, %v1614
        %v1673 = vpack.c.b16 %v1617, %v1616
        %v1674 = vpack.c.b16 %v1619, %v1618
        %v1675 = vpack.c.b16 %v1621, %v1620
        %v1676 = vpack.c.b16 %v1623, %v1622
        %v1677 = vpack.c.b16 %v1625, %v1624
        %v1678 = vpack.c.b16 %v1627, %v1626
        %v1679 = vpack.c.b16 %v1629, %v1628
        %v1680 = vpack.c.b16 %v1631, %v1630
        %v1681 = vpack.c.b16 %v1633, %v1632
        %v1682 = vpack.c.b16 %v1635, %v1634
        %v1683 = vpack.c.b16 %v1637, %v1636
        %v1684 = vpack.c.b16 %v1639, %v1638
        %v1685 = vpack.c.b16 %v1641, %v1640
        %v1686 = vpack.c.b16 %v1643, %v1642
        %v1687 = vpack.c.b16 %v1645, %v1644
        %v1688 = vpack.c.b16 %v1647, %v1646
        %v1689 = vpack.c.b16 %v1649, %v1648
        %v1690 = vpack.c.b16 %v1651, %v1650
        %v1691 = vpack.c.b16 %v1653, %v1652
        %v1692 = vpack.c.b16 %v1655, %v1654
        %v1693 = vpack.c.b16 %v1657, %v1656
        %v1694 = vpack.c.b16 %v1659, %v1658
        %v1695 = vpack.c.b16 %v1661, %v1660
        %v1696 = vpack.c.b16 %v1663, %v1662
        %v1697 = vpack.c.b16 %v1665, %v1664
        %1730 = vmatprep.subr.bf16.mxu0 0
        %1731 = vmatpush1.bf16.msra.mxu0 %v1673
        %1732 = vmatprep.subr.bf16.mxu0 0
        %1733 = vmatpush1.bf16.msra.mxu0 %v1672
        %1734 = vmatprep.subr.bf16.mxu0 0
        %1735 = vmatpush1.bf16.msra.mxu0 %v1671
        %1736 = vmatprep.subr.bf16.mxu0 0
        %1737 = vmatpush1.bf16.msra.mxu0 %v1670
        %1738 = vmatprep.subr.bf16.mxu0 0
        %1739 = vmatpush1.bf16.msra.mxu0 %v1669
        %1740 = vmatprep.subr.bf16.mxu0 0
        %1741 = vmatpush1.bf16.msra.mxu0 %v1668
        %1742 = vmatprep.subr.bf16.mxu0 0
        %1743 = vmatpush1.bf16.msra.mxu0 %v1667
        %1744 = vmatprep.subr.bf16.mxu0 0
        %1745 = vmatpush1.bf16.msra.mxu0 %v1666
        %1746 = vmatprep.subr.bf16.mxu0 0
        %1747 = vmatpush2.bf16.msra.mxu0 %v1681
        %1748 = vmatprep.subr.bf16.mxu0 0
        %1749 = vmatpush2.bf16.msra.mxu0 %v1680
        %1750 = vmatprep.subr.bf16.mxu0 0
        %1751 = vmatpush2.bf16.msra.mxu0 %v1679
        %1752 = vmatprep.subr.bf16.mxu0 0
        %1753 = vmatpush2.bf16.msra.mxu0 %v1678
        %1754 = vmatprep.subr.bf16.mxu0 0
        %1755 = vmatpush2.bf16.msra.mxu0 %v1677
        %1756 = vmatprep.subr.bf16.mxu0 0
        %1757 = vmatpush2.bf16.msra.mxu0 %v1676
        %1758 = vmatprep.subr.bf16.mxu0 0
        %1759 = vmatpush2.bf16.msra.mxu0 %v1675
        %1760 = vmatprep.subr.bf16.mxu0 0
        %1761 = vmatpush2.bf16.msra.mxu0 %v1674
        %1762 = vmatprep.mubr.bf16.mxu0 %v1411
        %1763 = vmatmul.mubr.bf16.gmra.mxu0 %v1410
        %v1764 = vpop.f32.mrf.mxu0
        %v1765 = vadd.f32 0.0, %v1764
        %v1766 = vpop.f32.mrf.mxu0
        %v1767 = vpop.f32.mrf.mxu0
        %v1768 = vadd.f32 0.0, %v1767
        %v1769 = vpop.f32.mrf.mxu0
        %1770 = vmatprep.mubr.bf16.mxu0 %v1415
        %1771 = vmatmul.mubr.bf16.gmra.mxu0 %v1414
        %v1772 = vpop.f32.mrf.mxu0
        %v1773 = vadd.f32 0.0, %v1772
        %v1774 = vpop.f32.mrf.mxu0
        %v1775 = vpop.f32.mrf.mxu0
        %v1776 = vadd.f32 0.0, %v1775
        %v1777 = vpop.f32.mrf.mxu0
        %1778 = vmatprep.mubr.bf16.mxu0 %v1419
        %1779 = vmatmul.mubr.bf16.gmra.mxu0 %v1418
        %v1780 = vpop.f32.mrf.mxu0
        %v1781 = vadd.f32 0.0, %v1780
        %v1782 = vpop.f32.mrf.mxu0
        %v1783 = vpop.f32.mrf.mxu0
        %v1784 = vadd.f32 0.0, %v1783
        %v1785 = vpop.f32.mrf.mxu0
        %1786 = vmatprep.mubr.bf16.mxu0 %v1423
        %1787 = vmatmul.mubr.bf16.gmra.mxu0 %v1422
        %v1788 = vpop.f32.mrf.mxu0
        %v1789 = vadd.f32 0.0, %v1788
        %v1790 = vpop.f32.mrf.mxu0
        %v1791 = vpop.f32.mrf.mxu0
        %v1792 = vadd.f32 0.0, %v1791
        %v1793 = vpop.f32.mrf.mxu0
        %1794 = vmatprep.mubr.bf16.mxu0 %v1427
        %1795 = vmatmul.mubr.bf16.gmra.mxu0 %v1426
        %v1796 = vpop.f32.mrf.mxu0
        %v1797 = vadd.f32 0.0, %v1796
        %v1798 = vpop.f32.mrf.mxu0
        %v1799 = vpop.f32.mrf.mxu0
        %v1800 = vadd.f32 0.0, %v1799
        %v1801 = vpop.f32.mrf.mxu0
        %1802 = vmatprep.mubr.bf16.mxu0 %v1431
        %1803 = vmatmul.mubr.bf16.gmra.mxu0 %v1430
        %v1804 = vpop.f32.mrf.mxu0
        %v1805 = vadd.f32 0.0, %v1804
        %v1806 = vpop.f32.mrf.mxu0
        %v1807 = vpop.f32.mrf.mxu0
        %v1808 = vadd.f32 0.0, %v1807
        %v1809 = vpop.f32.mrf.mxu0
        %1810 = vmatprep.mubr.bf16.mxu0 %v1435
        %1811 = vmatmul.mubr.bf16.gmra.mxu0 %v1434
        %v1812 = vpop.f32.mrf.mxu0
        %v1813 = vadd.f32 0.0, %v1812
        %v1814 = vpop.f32.mrf.mxu0
        %v1815 = vpop.f32.mrf.mxu0
        %v1816 = vadd.f32 0.0, %v1815
        %v1817 = vpop.f32.mrf.mxu0
        %1818 = vmatprep.mubr.bf16.mxu0 %v1439
        %1819 = vmatmul.mubr.bf16.gmra.mxu0 %v1438
        %v1820 = vpop.f32.mrf.mxu0
        %v1821 = vadd.f32 0.0, %v1820
        %v1822 = vpop.f32.mrf.mxu0
        %v1823 = vpop.f32.mrf.mxu0
        %v1824 = vadd.f32 0.0, %v1823
        %v1825 = vpop.f32.mrf.mxu0
        %1826 = vmatprep.mubr.bf16.mxu0 %v1443
        %1827 = vmatmul.mubr.bf16.gmra.mxu0 %v1442
        %v1828 = vpop.f32.mrf.mxu0
        %v1829 = vadd.f32 0.0, %v1828
        %v1830 = vpop.f32.mrf.mxu0
        %v1831 = vpop.f32.mrf.mxu0
        %v1832 = vadd.f32 0.0, %v1831
        %v1833 = vpop.f32.mrf.mxu0
        %1834 = vmatprep.mubr.bf16.mxu0 %v1447
        %1835 = vmatmul.mubr.bf16.gmra.mxu0 %v1446
        %v1836 = vpop.f32.mrf.mxu0
        %v1837 = vadd.f32 0.0, %v1836
        %v1838 = vpop.f32.mrf.mxu0
        %v1839 = vpop.f32.mrf.mxu0
        %v1840 = vadd.f32 0.0, %v1839
        %v1841 = vpop.f32.mrf.mxu0
        %1842 = vmatprep.mubr.bf16.mxu0 %v1451
        %1843 = vmatmul.mubr.bf16.gmra.mxu0 %v1450
        %v1844 = vpop.f32.mrf.mxu0
        %v1845 = vadd.f32 0.0, %v1844
        %v1846 = vpop.f32.mrf.mxu0
        %v1847 = vpop.f32.mrf.mxu0
        %v1848 = vadd.f32 0.0, %v1847
        %v1849 = vpop.f32.mrf.mxu0
        %1850 = vmatprep.mubr.bf16.mxu0 %v1455
        %1851 = vmatmul.mubr.bf16.gmra.mxu0 %v1454
        %v1852 = vpop.f32.mrf.mxu0
        %v1853 = vadd.f32 0.0, %v1852
        %v1854 = vpop.f32.mrf.mxu0
        %v1855 = vpop.f32.mrf.mxu0
        %v1856 = vadd.f32 0.0, %v1855
        %v1857 = vpop.f32.mrf.mxu0
        %1858 = vmatprep.mubr.bf16.mxu0 %v1459
        %1859 = vmatmul.mubr.bf16.gmra.mxu0 %v1458
        %v1860 = vpop.f32.mrf.mxu0
        %v1861 = vadd.f32 0.0, %v1860
        %v1862 = vpop.f32.mrf.mxu0
        %v1863 = vpop.f32.mrf.mxu0
        %v1864 = vadd.f32 0.0, %v1863
        %v1865 = vpop.f32.mrf.mxu0
        %1866 = vmatprep.mubr.bf16.mxu0 %v1463
        %1867 = vmatmul.mubr.bf16.gmra.mxu0 %v1462
        %v1868 = vpop.f32.mrf.mxu0
        %v1869 = vadd.f32 0.0, %v1868
        %v1870 = vpop.f32.mrf.mxu0
        %v1871 = vpop.f32.mrf.mxu0
        %v1872 = vadd.f32 0.0, %v1871
        %v1873 = vpop.f32.mrf.mxu0
        %1874 = vmatprep.mubr.bf16.mxu0 %v1467
        %1875 = vmatmul.mubr.bf16.gmra.mxu0 %v1466
        %v1876 = vpop.f32.mrf.mxu0
        %v1877 = vadd.f32 0.0, %v1876
        %v1878 = vpop.f32.mrf.mxu0
        %v1879 = vpop.f32.mrf.mxu0
        %v1880 = vadd.f32 0.0, %v1879
        %v1881 = vpop.f32.mrf.mxu0
        %1882 = vmatprep.mubr.bf16.mxu0 %v1471
        %1883 = vmatmul.mubr.bf16.gmra.mxu0 %v1470
        %v1884 = vpop.f32.mrf.mxu0
        %v1885 = vadd.f32 0.0, %v1884
        %v1886 = vpop.f32.mrf.mxu0
        %v1887 = vpop.f32.mrf.mxu0
        %v1888 = vadd.f32 0.0, %v1887
        %v1889 = vpop.f32.mrf.mxu0
        %1890 = vdwg.mxu0
        %1891 = vmatprep.subr.bf16.mxu0 0
        %1892 = vmatpush1.bf16.msra.mxu0 %v1689
        %1893 = vmatprep.subr.bf16.mxu0 0
        %1894 = vmatpush1.bf16.msra.mxu0 %v1688
        %1895 = vmatprep.subr.bf16.mxu0 0
        %1896 = vmatpush1.bf16.msra.mxu0 %v1687
        %1897 = vmatprep.subr.bf16.mxu0 0
        %1898 = vmatpush1.bf16.msra.mxu0 %v1686
        %1899 = vmatprep.subr.bf16.mxu0 0
        %1900 = vmatpush1.bf16.msra.mxu0 %v1685
        %1901 = vmatprep.subr.bf16.mxu0 0
        %1902 = vmatpush1.bf16.msra.mxu0 %v1684
        %1903 = vmatprep.subr.bf16.mxu0 0
        %1904 = vmatpush1.bf16.msra.mxu0 %v1683
        %1905 = vmatprep.subr.bf16.mxu0 0
        %1906 = vmatpush1.bf16.msra.mxu0 %v1682
        %1907 = vmatprep.subr.bf16.mxu0 0
        %1908 = vmatpush2.bf16.msra.mxu0 %v1697
        %1909 = vmatprep.subr.bf16.mxu0 0
        %1910 = vmatpush2.bf16.msra.mxu0 %v1696
        %1911 = vmatprep.subr.bf16.mxu0 0
        %1912 = vmatpush2.bf16.msra.mxu0 %v1695
        %1913 = vmatprep.subr.bf16.mxu0 0
        %1914 = vmatpush2.bf16.msra.mxu0 %v1694
        %1915 = vmatprep.subr.bf16.mxu0 0
        %1916 = vmatpush2.bf16.msra.mxu0 %v1693
        %1917 = vmatprep.subr.bf16.mxu0 0
        %1918 = vmatpush2.bf16.msra.mxu0 %v1692
        %1919 = vmatprep.subr.bf16.mxu0 0
        %1920 = vmatpush2.bf16.msra.mxu0 %v1691
        %1921 = vmatprep.subr.bf16.mxu0 0
        %1922 = vmatpush2.bf16.msra.mxu0 %v1690
        %1923 = vmatprep.mubr.bf16.mxu0 %v1413
        %1924 = vmatmul.mubr.bf16.gmra.mxu0 %v1412
        %v1925 = vpop.f32.mrf.mxu0
        %v1926 = vadd.f32 %v1765, %v1925
        %v1927 = vpop.f32.mrf.mxu0
        %v1928 = vpop.f32.mrf.mxu0
        %v1929 = vadd.f32 %v1768, %v1928
        %v1930 = vpop.f32.mrf.mxu0
        %1931 = vmatprep.mubr.bf16.mxu0 %v1417
        %1932 = vmatmul.mubr.bf16.gmra.mxu0 %v1416
        %v1933 = vpop.f32.mrf.mxu0
        %v1934 = vadd.f32 %v1773, %v1933
        %v1935 = vpop.f32.mrf.mxu0
        %v1936 = vpop.f32.mrf.mxu0
        %v1937 = vadd.f32 %v1776, %v1936
        %v1938 = vpop.f32.mrf.mxu0
        %1939 = vmatprep.mubr.bf16.mxu0 %v1421
        %1940 = vmatmul.mubr.bf16.gmra.mxu0 %v1420
        %v1941 = vpop.f32.mrf.mxu0
        %v1942 = vadd.f32 %v1781, %v1941
        %v1943 = vpop.f32.mrf.mxu0
        %v1944 = vpop.f32.mrf.mxu0
        %v1945 = vadd.f32 %v1784, %v1944
        %v1946 = vpop.f32.mrf.mxu0
        %1947 = vmatprep.mubr.bf16.mxu0 %v1425
        %1948 = vmatmul.mubr.bf16.gmra.mxu0 %v1424
        %v1949 = vpop.f32.mrf.mxu0
        %v1950 = vadd.f32 %v1789, %v1949
        %v1951 = vpop.f32.mrf.mxu0
        %v1952 = vpop.f32.mrf.mxu0
        %v1953 = vadd.f32 %v1792, %v1952
        %v1954 = vpop.f32.mrf.mxu0
        %1955 = vmatprep.mubr.bf16.mxu0 %v1429
        %1956 = vmatmul.mubr.bf16.gmra.mxu0 %v1428
        %v1957 = vpop.f32.mrf.mxu0
        %v1958 = vadd.f32 %v1797, %v1957
        %v1959 = vpop.f32.mrf.mxu0
        %v1960 = vpop.f32.mrf.mxu0
        %v1961 = vadd.f32 %v1800, %v1960
        %v1962 = vpop.f32.mrf.mxu0
        %1963 = vmatprep.mubr.bf16.mxu0 %v1433
        %1964 = vmatmul.mubr.bf16.gmra.mxu0 %v1432
        %v1965 = vpop.f32.mrf.mxu0
        %v1966 = vadd.f32 %v1805, %v1965
        %v1967 = vpop.f32.mrf.mxu0
        %v1968 = vpop.f32.mrf.mxu0
        %v1969 = vadd.f32 %v1808, %v1968
        %v1970 = vpop.f32.mrf.mxu0
        %1971 = vmatprep.mubr.bf16.mxu0 %v1437
        %1972 = vmatmul.mubr.bf16.gmra.mxu0 %v1436
        %v1973 = vpop.f32.mrf.mxu0
        %v1974 = vadd.f32 %v1813, %v1973
        %v1975 = vpop.f32.mrf.mxu0
        %v1976 = vpop.f32.mrf.mxu0
        %v1977 = vadd.f32 %v1816, %v1976
        %v1978 = vpop.f32.mrf.mxu0
        %1979 = vmatprep.mubr.bf16.mxu0 %v1441
        %1980 = vmatmul.mubr.bf16.gmra.mxu0 %v1440
        %v1981 = vpop.f32.mrf.mxu0
        %v1982 = vadd.f32 %v1821, %v1981
        %v1983 = vpop.f32.mrf.mxu0
        %v1984 = vpop.f32.mrf.mxu0
        %v1985 = vadd.f32 %v1824, %v1984
        %v1986 = vpop.f32.mrf.mxu0
        %1987 = vmatprep.mubr.bf16.mxu0 %v1445
        %1988 = vmatmul.mubr.bf16.gmra.mxu0 %v1444
        %v1989 = vpop.f32.mrf.mxu0
        %v1990 = vadd.f32 %v1829, %v1989
        %v1991 = vpop.f32.mrf.mxu0
        %v1992 = vpop.f32.mrf.mxu0
        %v1993 = vadd.f32 %v1832, %v1992
        %v1994 = vpop.f32.mrf.mxu0
        %1995 = vmatprep.mubr.bf16.mxu0 %v1449
        %1996 = vmatmul.mubr.bf16.gmra.mxu0 %v1448
        %v1997 = vpop.f32.mrf.mxu0
        %v1998 = vadd.f32 %v1837, %v1997
        %v1999 = vpop.f32.mrf.mxu0
        %v2000 = vpop.f32.mrf.mxu0
        %v2001 = vadd.f32 %v1840, %v2000
        %v2002 = vpop.f32.mrf.mxu0
        %2003 = vmatprep.mubr.bf16.mxu0 %v1453
        %2004 = vmatmul.mubr.bf16.gmra.mxu0 %v1452
        %v2005 = vpop.f32.mrf.mxu0
        %v2006 = vadd.f32 %v1845, %v2005
        %v2007 = vpop.f32.mrf.mxu0
        %v2008 = vpop.f32.mrf.mxu0
        %v2009 = vadd.f32 %v1848, %v2008
        %v2010 = vpop.f32.mrf.mxu0
        %2011 = vmatprep.mubr.bf16.mxu0 %v1457
        %2012 = vmatmul.mubr.bf16.gmra.mxu0 %v1456
        %v2013 = vpop.f32.mrf.mxu0
        %v2014 = vadd.f32 %v1853, %v2013
        %v2015 = vpop.f32.mrf.mxu0
        %v2016 = vpop.f32.mrf.mxu0
        %v2017 = vadd.f32 %v1856, %v2016
        %v2018 = vpop.f32.mrf.mxu0
        %2019 = vmatprep.mubr.bf16.mxu0 %v1461
        %2020 = vmatmul.mubr.bf16.gmra.mxu0 %v1460
        %v2021 = vpop.f32.mrf.mxu0
        %v2022 = vadd.f32 %v1861, %v2021
        %v2023 = vpop.f32.mrf.mxu0
        %v2024 = vpop.f32.mrf.mxu0
        %v2025 = vadd.f32 %v1864, %v2024
        %v2026 = vpop.f32.mrf.mxu0
        %2027 = vmatprep.mubr.bf16.mxu0 %v1465
        %2028 = vmatmul.mubr.bf16.gmra.mxu0 %v1464
        %v2029 = vpop.f32.mrf.mxu0
        %v2030 = vadd.f32 %v1869, %v2029
        %v2031 = vpop.f32.mrf.mxu0
        %v2032 = vpop.f32.mrf.mxu0
        %v2033 = vadd.f32 %v1872, %v2032
        %v2034 = vpop.f32.mrf.mxu0
        %2035 = vmatprep.mubr.bf16.mxu0 %v1469
        %2036 = vmatmul.mubr.bf16.gmra.mxu0 %v1468
        %v2037 = vpop.f32.mrf.mxu0
        %v2038 = vadd.f32 %v1877, %v2037
        %v2039 = vpop.f32.mrf.mxu0
        %v2040 = vpop.f32.mrf.mxu0
        %v2041 = vadd.f32 %v1880, %v2040
        %v2042 = vpop.f32.mrf.mxu0
        %2043 = vmatprep.mubr.bf16.mxu0 %v1473
        %2044 = vmatmul.mubr.bf16.gmra.mxu0 %v1472
        %v2045 = vpop.f32.mrf.mxu0
        %v2046 = vadd.f32 %v1885, %v2045
        %v2047 = vpop.f32.mrf.mxu0
        %v2048 = vpop.f32.mrf.mxu0
        %v2049 = vadd.f32 %v1888, %v2048
        %v2050 = vpop.f32.mrf.mxu0
        %2051 = vdwg.mxu0
        %v2116 = vunpack.c.l.b16 %v907
        %v2117 = vunpack.c.l.b16 %v908
        %v2118 = vunpack.c.l.b16 %v909
        %v2119 = vunpack.c.l.b16 %v910
        %v2120 = vunpack.c.l.b16 %v911
        %v2121 = vunpack.c.l.b16 %v912
        %v2122 = vunpack.c.l.b16 %v913
        %v2123 = vunpack.c.l.b16 %v914
        %v2124 = vunpack.c.l.b16 %v915
        %v2125 = vunpack.c.l.b16 %v916
        %v2126 = vunpack.c.l.b16 %v917
        %v2127 = vunpack.c.l.b16 %v918
        %v2128 = vunpack.c.l.b16 %v919
        %v2129 = vunpack.c.l.b16 %v920
        %v2130 = vunpack.c.l.b16 %v921
        %v2131 = vunpack.c.l.b16 %v922
        %v2132 = vunpack.c.l.b16 %v923
        %v2133 = vunpack.c.l.b16 %v924
        %v2134 = vunpack.c.l.b16 %v925
        %v2135 = vunpack.c.l.b16 %v926
        %v2136 = vunpack.c.l.b16 %v927
        %v2137 = vunpack.c.l.b16 %v928
        %v2138 = vunpack.c.l.b16 %v929
        %v2139 = vunpack.c.l.b16 %v930
        %v2140 = vunpack.c.l.b16 %v931
        %v2141 = vunpack.c.l.b16 %v932
        %v2142 = vunpack.c.l.b16 %v933
        %v2143 = vunpack.c.l.b16 %v934
        %v2144 = vunpack.c.l.b16 %v935
        %v2145 = vunpack.c.l.b16 %v936
        %v2146 = vunpack.c.l.b16 %v937
        %v2147 = vunpack.c.l.b16 %v938
        %v2148 = vunpack.c.l.b16 %v939
        %v2149 = vunpack.c.l.b16 %v940
        %v2150 = vunpack.c.l.b16 %v941
        %v2151 = vunpack.c.l.b16 %v942
        %v2152 = vunpack.c.l.b16 %v943
        %v2153 = vunpack.c.l.b16 %v944
        %v2154 = vunpack.c.l.b16 %v945
        %v2155 = vunpack.c.l.b16 %v946
        %v2156 = vunpack.c.l.b16 %v947
        %v2157 = vunpack.c.l.b16 %v948
        %v2158 = vunpack.c.l.b16 %v949
        %v2159 = vunpack.c.l.b16 %v950
        %v2160 = vunpack.c.l.b16 %v951
        %v2161 = vunpack.c.l.b16 %v952
        %v2162 = vunpack.c.l.b16 %v953
        %v2163 = vunpack.c.l.b16 %v954
        %v2164 = vunpack.c.l.b16 %v955
        %v2165 = vunpack.c.l.b16 %v956
        %v2166 = vunpack.c.l.b16 %v957
        %v2167 = vunpack.c.l.b16 %v958
        %v2168 = vunpack.c.l.b16 %v959
        %v2169 = vunpack.c.l.b16 %v960
        %v2170 = vunpack.c.l.b16 %v961
        %v2171 = vunpack.c.l.b16 %v962
        %v2172 = vunpack.c.l.b16 %v963
        %v2173 = vunpack.c.l.b16 %v964
        %v2174 = vunpack.c.l.b16 %v965
        %v2175 = vunpack.c.l.b16 %v966
        %v2176 = vunpack.c.l.b16 %v967
        %v2177 = vunpack.c.l.b16 %v968
        %v2178 = vunpack.c.l.b16 %v969
        %v2179 = vunpack.c.l.b16 %v970
        %v2180 = vpack.c.b16 %v2117, %v2116
        %v2181 = vpack.c.b16 %v2119, %v2118
        %v2182 = vpack.c.b16 %v2121, %v2120
        %v2183 = vpack.c.b16 %v2123, %v2122
        %v2184 = vpack.c.b16 %v2125, %v2124
        %v2185 = vpack.c.b16 %v2127, %v2126
        %v2186 = vpack.c.b16 %v2129, %v2128
        %v2187 = vpack.c.b16 %v2131, %v2130
        %v2188 = vpack.c.b16 %v2133, %v2132
        %v2189 = vpack.c.b16 %v2135, %v2134
        %v2190 = vpack.c.b16 %v2137, %v2136
        %v2191 = vpack.c.b16 %v2139, %v2138
        %v2192 = vpack.c.b16 %v2141, %v2140
        %v2193 = vpack.c.b16 %v2143, %v2142
        %v2194 = vpack.c.b16 %v2145, %v2144
        %v2195 = vpack.c.b16 %v2147, %v2146
        %v2196 = vpack.c.b16 %v2149, %v2148
        %v2197 = vpack.c.b16 %v2151, %v2150
        %v2198 = vpack.c.b16 %v2153, %v2152
        %v2199 = vpack.c.b16 %v2155, %v2154
        %v2200 = vpack.c.b16 %v2157, %v2156
        %v2201 = vpack.c.b16 %v2159, %v2158
        %v2202 = vpack.c.b16 %v2161, %v2160
        %v2203 = vpack.c.b16 %v2163, %v2162
        %v2204 = vpack.c.b16 %v2165, %v2164
        %v2205 = vpack.c.b16 %v2167, %v2166
        %v2206 = vpack.c.b16 %v2169, %v2168
        %v2207 = vpack.c.b16 %v2171, %v2170
        %v2208 = vpack.c.b16 %v2173, %v2172
        %v2209 = vpack.c.b16 %v2175, %v2174
        %v2210 = vpack.c.b16 %v2177, %v2176
        %v2211 = vpack.c.b16 %v2179, %v2178
        %2244 = vmatprep.subr.bf16.mxu0 0
        %2245 = vmatpush1.bf16.msra.mxu0 %v2187
        %2246 = vmatprep.subr.bf16.mxu0 0
        %2247 = vmatpush1.bf16.msra.mxu0 %v2186
        %2248 = vmatprep.subr.bf16.mxu0 0
        %2249 = vmatpush1.bf16.msra.mxu0 %v2185
        %2250 = vmatprep.subr.bf16.mxu0 0
        %2251 = vmatpush1.bf16.msra.mxu0 %v2184
        %2252 = vmatprep.subr.bf16.mxu0 0
        %2253 = vmatpush1.bf16.msra.mxu0 %v2183
        %2254 = vmatprep.subr.bf16.mxu0 0
        %2255 = vmatpush1.bf16.msra.mxu0 %v2182
        %2256 = vmatprep.subr.bf16.mxu0 0
        %2257 = vmatpush1.bf16.msra.mxu0 %v2181
        %2258 = vmatprep.subr.bf16.mxu0 0
        %2259 = vmatpush1.bf16.msra.mxu0 %v2180
        %2260 = vmatprep.subr.bf16.mxu0 0
        %2261 = vmatpush2.bf16.msra.mxu0 %v2195
        %2262 = vmatprep.subr.bf16.mxu0 0
        %2263 = vmatpush2.bf16.msra.mxu0 %v2194
        %2264 = vmatprep.subr.bf16.mxu0 0
        %2265 = vmatpush2.bf16.msra.mxu0 %v2193
        %2266 = vmatprep.subr.bf16.mxu0 0
        %2267 = vmatpush2.bf16.msra.mxu0 %v2192
        %2268 = vmatprep.subr.bf16.mxu0 0
        %2269 = vmatpush2.bf16.msra.mxu0 %v2191
        %2270 = vmatprep.subr.bf16.mxu0 0
        %2271 = vmatpush2.bf16.msra.mxu0 %v2190
        %2272 = vmatprep.subr.bf16.mxu0 0
        %2273 = vmatpush2.bf16.msra.mxu0 %v2189
        %2274 = vmatprep.subr.bf16.mxu0 0
        %2275 = vmatpush2.bf16.msra.mxu0 %v2188
        %2276 = vmatprep.mubr.bf16.mxu0 %v844
        %2277 = vmatmul.mubr.bf16.gmra.mxu0 %v843
        %v2278 = vpop.f32.mrf.mxu0
        %v2279 = vadd.f32 %v1926, %v2278
        %v2280 = vpop.f32.mrf.mxu0
        %v2281 = vpop.f32.mrf.mxu0
        %v2282 = vadd.f32 %v1929, %v2281
        %v2283 = vpop.f32.mrf.mxu0
        %2284 = vmatprep.mubr.bf16.mxu0 %v848
        %2285 = vmatmul.mubr.bf16.gmra.mxu0 %v847
        %v2286 = vpop.f32.mrf.mxu0
        %v2287 = vadd.f32 %v1934, %v2286
        %v2288 = vpop.f32.mrf.mxu0
        %v2289 = vpop.f32.mrf.mxu0
        %v2290 = vadd.f32 %v1937, %v2289
        %v2291 = vpop.f32.mrf.mxu0
        %2292 = vmatprep.mubr.bf16.mxu0 %v852
        %2293 = vmatmul.mubr.bf16.gmra.mxu0 %v851
        %v2294 = vpop.f32.mrf.mxu0
        %v2295 = vadd.f32 %v1942, %v2294
        %v2296 = vpop.f32.mrf.mxu0
        %v2297 = vpop.f32.mrf.mxu0
        %v2298 = vadd.f32 %v1945, %v2297
        %v2299 = vpop.f32.mrf.mxu0
        %2300 = vmatprep.mubr.bf16.mxu0 %v856
        %2301 = vmatmul.mubr.bf16.gmra.mxu0 %v855
        %v2302 = vpop.f32.mrf.mxu0
        %v2303 = vadd.f32 %v1950, %v2302
        %v2304 = vpop.f32.mrf.mxu0
        %v2305 = vpop.f32.mrf.mxu0
        %v2306 = vadd.f32 %v1953, %v2305
        %v2307 = vpop.f32.mrf.mxu0
        %2308 = vmatprep.mubr.bf16.mxu0 %v860
        %2309 = vmatmul.mubr.bf16.gmra.mxu0 %v859
        %v2310 = vpop.f32.mrf.mxu0
        %v2311 = vadd.f32 %v1958, %v2310
        %v2312 = vpop.f32.mrf.mxu0
        %v2313 = vpop.f32.mrf.mxu0
        %v2314 = vadd.f32 %v1961, %v2313
        %v2315 = vpop.f32.mrf.mxu0
        %2316 = vmatprep.mubr.bf16.mxu0 %v864
        %2317 = vmatmul.mubr.bf16.gmra.mxu0 %v863
        %v2318 = vpop.f32.mrf.mxu0
        %v2319 = vadd.f32 %v1966, %v2318
        %v2320 = vpop.f32.mrf.mxu0
        %v2321 = vpop.f32.mrf.mxu0
        %v2322 = vadd.f32 %v1969, %v2321
        %v2323 = vpop.f32.mrf.mxu0
        %2324 = vmatprep.mubr.bf16.mxu0 %v868
        %2325 = vmatmul.mubr.bf16.gmra.mxu0 %v867
        %v2326 = vpop.f32.mrf.mxu0
        %v2327 = vadd.f32 %v1974, %v2326
        %v2328 = vpop.f32.mrf.mxu0
        %v2329 = vpop.f32.mrf.mxu0
        %v2330 = vadd.f32 %v1977, %v2329
        %v2331 = vpop.f32.mrf.mxu0
        %2332 = vmatprep.mubr.bf16.mxu0 %v872
        %2333 = vmatmul.mubr.bf16.gmra.mxu0 %v871
        %v2334 = vpop.f32.mrf.mxu0
        %v2335 = vadd.f32 %v1982, %v2334
        %v2336 = vpop.f32.mrf.mxu0
        %v2337 = vpop.f32.mrf.mxu0
        %v2338 = vadd.f32 %v1985, %v2337
        %v2339 = vpop.f32.mrf.mxu0
        %2340 = vmatprep.mubr.bf16.mxu0 %v876
        %2341 = vmatmul.mubr.bf16.gmra.mxu0 %v875
        %v2342 = vpop.f32.mrf.mxu0
        %v2343 = vadd.f32 %v1990, %v2342
        %v2344 = vpop.f32.mrf.mxu0
        %v2345 = vpop.f32.mrf.mxu0
        %v2346 = vadd.f32 %v1993, %v2345
        %v2347 = vpop.f32.mrf.mxu0
        %2348 = vmatprep.mubr.bf16.mxu0 %v880
        %2349 = vmatmul.mubr.bf16.gmra.mxu0 %v879
        %v2350 = vpop.f32.mrf.mxu0
        %v2351 = vadd.f32 %v1998, %v2350
        %v2352 = vpop.f32.mrf.mxu0
        %v2353 = vpop.f32.mrf.mxu0
        %v2354 = vadd.f32 %v2001, %v2353
        %v2355 = vpop.f32.mrf.mxu0
        %2356 = vmatprep.mubr.bf16.mxu0 %v884
        %2357 = vmatmul.mubr.bf16.gmra.mxu0 %v883
        %v2358 = vpop.f32.mrf.mxu0
        %v2359 = vadd.f32 %v2006, %v2358
        %v2360 = vpop.f32.mrf.mxu0
        %v2361 = vpop.f32.mrf.mxu0
        %v2362 = vadd.f32 %v2009, %v2361
        %v2363 = vpop.f32.mrf.mxu0
        %2364 = vmatprep.mubr.bf16.mxu0 %v888
        %2365 = vmatmul.mubr.bf16.gmra.mxu0 %v887
        %v2366 = vpop.f32.mrf.mxu0
        %v2367 = vadd.f32 %v2014, %v2366
        %v2368 = vpop.f32.mrf.mxu0
        %v2369 = vpop.f32.mrf.mxu0
        %v2370 = vadd.f32 %v2017, %v2369
        %v2371 = vpop.f32.mrf.mxu0
        %2372 = vmatprep.mubr.bf16.mxu0 %v892
        %2373 = vmatmul.mubr.bf16.gmra.mxu0 %v891
        %v2374 = vpop.f32.mrf.mxu0
        %v2375 = vadd.f32 %v2022, %v2374
        %v2376 = vpop.f32.mrf.mxu0
        %v2377 = vpop.f32.mrf.mxu0
        %v2378 = vadd.f32 %v2025, %v2377
        %v2379 = vpop.f32.mrf.mxu0
        %2380 = vmatprep.mubr.bf16.mxu0 %v896
        %2381 = vmatmul.mubr.bf16.gmra.mxu0 %v895
        %v2382 = vpop.f32.mrf.mxu0
        %v2383 = vadd.f32 %v2030, %v2382
        %v2384 = vpop.f32.mrf.mxu0
        %v2385 = vpop.f32.mrf.mxu0
        %v2386 = vadd.f32 %v2033, %v2385
        %v2387 = vpop.f32.mrf.mxu0
        %2388 = vmatprep.mubr.bf16.mxu0 %v900
        %2389 = vmatmul.mubr.bf16.gmra.mxu0 %v899
        %v2390 = vpop.f32.mrf.mxu0
        %v2391 = vadd.f32 %v2038, %v2390
        %v2392 = vpop.f32.mrf.mxu0
        %v2393 = vpop.f32.mrf.mxu0
        %v2394 = vadd.f32 %v2041, %v2393
        %v2395 = vpop.f32.mrf.mxu0
        %2396 = vmatprep.mubr.bf16.mxu0 %v904
        %2397 = vmatmul.mubr.bf16.gmra.mxu0 %v903
        %v2398 = vpop.f32.mrf.mxu0
        %v2399 = vadd.f32 %v2046, %v2398
        %v2400 = vpop.f32.mrf.mxu0
        %v2401 = vpop.f32.mrf.mxu0
        %v2402 = vadd.f32 %v2049, %v2401
        %v2403 = vpop.f32.mrf.mxu0
        %2404 = vdwg.mxu0
        %2405 = vmatprep.subr.bf16.mxu0 0
        %2406 = vmatpush1.bf16.msra.mxu0 %v2203
        %2407 = vmatprep.subr.bf16.mxu0 0
        %2408 = vmatpush1.bf16.msra.mxu0 %v2202
        %2409 = vmatprep.subr.bf16.mxu0 0
        %2410 = vmatpush1.bf16.msra.mxu0 %v2201
        %2411 = vmatprep.subr.bf16.mxu0 0
        %2412 = vmatpush1.bf16.msra.mxu0 %v2200
        %2413 = vmatprep.subr.bf16.mxu0 0
        %2414 = vmatpush1.bf16.msra.mxu0 %v2199
        %2415 = vmatprep.subr.bf16.mxu0 0
        %2416 = vmatpush1.bf16.msra.mxu0 %v2198
        %2417 = vmatprep.subr.bf16.mxu0 0
        %2418 = vmatpush1.bf16.msra.mxu0 %v2197
        %2419 = vmatprep.subr.bf16.mxu0 0
        %2420 = vmatpush1.bf16.msra.mxu0 %v2196
        %2421 = vmatprep.subr.bf16.mxu0 0
        %2422 = vmatpush2.bf16.msra.mxu0 %v2211
        %2423 = vmatprep.subr.bf16.mxu0 0
        %2424 = vmatpush2.bf16.msra.mxu0 %v2210
        %2425 = vmatprep.subr.bf16.mxu0 0
        %2426 = vmatpush2.bf16.msra.mxu0 %v2209
        %2427 = vmatprep.subr.bf16.mxu0 0
        %2428 = vmatpush2.bf16.msra.mxu0 %v2208
        %2429 = vmatprep.subr.bf16.mxu0 0
        %2430 = vmatpush2.bf16.msra.mxu0 %v2207
        %2431 = vmatprep.subr.bf16.mxu0 0
        %2432 = vmatpush2.bf16.msra.mxu0 %v2206
        %2433 = vmatprep.subr.bf16.mxu0 0
        %2434 = vmatpush2.bf16.msra.mxu0 %v2205
        %2435 = vmatprep.subr.bf16.mxu0 0
        %2436 = vmatpush2.bf16.msra.mxu0 %v2204
        %2437 = vmatprep.mubr.bf16.mxu0 %v846
        %2438 = vmatmul.mubr.bf16.gmra.mxu0 %v845
        %v2439 = vpop.f32.mrf.mxu0
        %v2440 = vadd.f32 %v2279, %v2439
        %v2441 = vpop.f32.mrf.mxu0
        %v2442 = vpop.f32.mrf.mxu0
        %v2443 = vadd.f32 %v2282, %v2442
        %v2444 = vpop.f32.mrf.mxu0
        %2445 = vmatprep.mubr.bf16.mxu0 %v850
        %2446 = vmatmul.mubr.bf16.gmra.mxu0 %v849
        %v2447 = vpop.f32.mrf.mxu0
        %v2448 = vadd.f32 %v2287, %v2447
        %v2449 = vpop.f32.mrf.mxu0
        %v2450 = vpop.f32.mrf.mxu0
        %v2451 = vadd.f32 %v2290, %v2450
        %v2452 = vpop.f32.mrf.mxu0
        %2453 = vmatprep.mubr.bf16.mxu0 %v854
        %2454 = vmatmul.mubr.bf16.gmra.mxu0 %v853
        %v2455 = vpop.f32.mrf.mxu0
        %v2456 = vadd.f32 %v2295, %v2455
        %v2457 = vpop.f32.mrf.mxu0
        %v2458 = vpop.f32.mrf.mxu0
        %v2459 = vadd.f32 %v2298, %v2458
        %v2460 = vpop.f32.mrf.mxu0
        %2461 = vmatprep.mubr.bf16.mxu0 %v858
        %2462 = vmatmul.mubr.bf16.gmra.mxu0 %v857
        %v2463 = vpop.f32.mrf.mxu0
        %v2464 = vadd.f32 %v2303, %v2463
        %v2465 = vpop.f32.mrf.mxu0
        %v2466 = vpop.f32.mrf.mxu0
        %v2467 = vadd.f32 %v2306, %v2466
        %v2468 = vpop.f32.mrf.mxu0
        %2469 = vmatprep.mubr.bf16.mxu0 %v862
        %2470 = vmatmul.mubr.bf16.gmra.mxu0 %v861
        %v2471 = vpop.f32.mrf.mxu0
        %v2472 = vadd.f32 %v2311, %v2471
        %v2473 = vpop.f32.mrf.mxu0
        %v2474 = vpop.f32.mrf.mxu0
        %v2475 = vadd.f32 %v2314, %v2474
        %v2476 = vpop.f32.mrf.mxu0
        %2477 = vmatprep.mubr.bf16.mxu0 %v866
        %2478 = vmatmul.mubr.bf16.gmra.mxu0 %v865
        %v2479 = vpop.f32.mrf.mxu0
        %v2480 = vadd.f32 %v2319, %v2479
        %v2481 = vpop.f32.mrf.mxu0
        %v2482 = vpop.f32.mrf.mxu0
        %v2483 = vadd.f32 %v2322, %v2482
        %v2484 = vpop.f32.mrf.mxu0
        %2485 = vmatprep.mubr.bf16.mxu0 %v870
        %2486 = vmatmul.mubr.bf16.gmra.mxu0 %v869
        %v2487 = vpop.f32.mrf.mxu0
        %v2488 = vadd.f32 %v2327, %v2487
        %v2489 = vpop.f32.mrf.mxu0
        %v2490 = vpop.f32.mrf.mxu0
        %v2491 = vadd.f32 %v2330, %v2490
        %v2492 = vpop.f32.mrf.mxu0
        %2493 = vmatprep.mubr.bf16.mxu0 %v874
        %2494 = vmatmul.mubr.bf16.gmra.mxu0 %v873
        %v2495 = vpop.f32.mrf.mxu0
        %v2496 = vadd.f32 %v2335, %v2495
        %v2497 = vpop.f32.mrf.mxu0
        %v2498 = vpop.f32.mrf.mxu0
        %v2499 = vadd.f32 %v2338, %v2498
        %v2500 = vpop.f32.mrf.mxu0
        %2501 = vmatprep.mubr.bf16.mxu0 %v878
        %2502 = vmatmul.mubr.bf16.gmra.mxu0 %v877
        %v2503 = vpop.f32.mrf.mxu0
        %v2504 = vadd.f32 %v2343, %v2503
        %v2505 = vpop.f32.mrf.mxu0
        %v2506 = vpop.f32.mrf.mxu0
        %v2507 = vadd.f32 %v2346, %v2506
        %v2508 = vpop.f32.mrf.mxu0
        %2509 = vmatprep.mubr.bf16.mxu0 %v882
        %2510 = vmatmul.mubr.bf16.gmra.mxu0 %v881
        %v2511 = vpop.f32.mrf.mxu0
        %v2512 = vadd.f32 %v2351, %v2511
        %v2513 = vpop.f32.mrf.mxu0
        %v2514 = vpop.f32.mrf.mxu0
        %v2515 = vadd.f32 %v2354, %v2514
        %v2516 = vpop.f32.mrf.mxu0
        %2517 = vmatprep.mubr.bf16.mxu0 %v886
        %2518 = vmatmul.mubr.bf16.gmra.mxu0 %v885
        %v2519 = vpop.f32.mrf.mxu0
        %v2520 = vadd.f32 %v2359, %v2519
        %v2521 = vpop.f32.mrf.mxu0
        %v2522 = vpop.f32.mrf.mxu0
        %v2523 = vadd.f32 %v2362, %v2522
        %v2524 = vpop.f32.mrf.mxu0
        %2525 = vmatprep.mubr.bf16.mxu0 %v890
        %2526 = vmatmul.mubr.bf16.gmra.mxu0 %v889
        %v2527 = vpop.f32.mrf.mxu0
        %v2528 = vadd.f32 %v2367, %v2527
        %v2529 = vpop.f32.mrf.mxu0
        %v2530 = vpop.f32.mrf.mxu0
        %v2531 = vadd.f32 %v2370, %v2530
        %v2532 = vpop.f32.mrf.mxu0
        %2533 = vmatprep.mubr.bf16.mxu0 %v894
        %2534 = vmatmul.mubr.bf16.gmra.mxu0 %v893
        %v2535 = vpop.f32.mrf.mxu0
        %v2536 = vadd.f32 %v2375, %v2535
        %v2537 = vpop.f32.mrf.mxu0
        %v2538 = vpop.f32.mrf.mxu0
        %v2539 = vadd.f32 %v2378, %v2538
        %v2540 = vpop.f32.mrf.mxu0
        %2541 = vmatprep.mubr.bf16.mxu0 %v898
        %2542 = vmatmul.mubr.bf16.gmra.mxu0 %v897
        %v2543 = vpop.f32.mrf.mxu0
        %v2544 = vadd.f32 %v2383, %v2543
        %v2545 = vpop.f32.mrf.mxu0
        %v2546 = vpop.f32.mrf.mxu0
        %v2547 = vadd.f32 %v2386, %v2546
        %v2548 = vpop.f32.mrf.mxu0
        %2549 = vmatprep.mubr.bf16.mxu0 %v902
        %2550 = vmatmul.mubr.bf16.gmra.mxu0 %v901
        %v2551 = vpop.f32.mrf.mxu0
        %v2552 = vadd.f32 %v2391, %v2551
        %v2553 = vpop.f32.mrf.mxu0
        %v2554 = vpop.f32.mrf.mxu0
        %v2555 = vadd.f32 %v2394, %v2554
        %v2556 = vpop.f32.mrf.mxu0
        %2557 = vmatprep.mubr.bf16.mxu0 %v906
        %2558 = vmatmul.mubr.bf16.gmra.mxu0 %v905
        %v2559 = vpop.f32.mrf.mxu0
        %v2560 = vadd.f32 %v2399, %v2559
        %v2561 = vpop.f32.mrf.mxu0
        %v2562 = vpop.f32.mrf.mxu0
        %v2563 = vadd.f32 %v2402, %v2562
        %v2564 = vpop.f32.mrf.mxu0
        %2565 = vdwg.mxu0
        %v2566 = vld [vmem:[%s1 + $0x10] sm:$0xff]
        %v2567 = vld [vmem:[%s2 + $0x8] sm:$0xf]
        %v2569 = vlaneseq
        %v2570 = vshrl.u32 %v2569, 7
        %v2571 = vsub.s32 0, %v2570
        %v2572 = vrot.slane %v2567, %v2571
        %v2573 = vlaneseq
        %v2574 = vshrl.u32 %v2573, 7
        %v2575 = vsub.s32 1, %v2574
        %v2576 = vrot.slane %v2567, %v2575
        %v2577 = vlaneseq
        %v2578 = vshrl.u32 %v2577, 7
        %v2579 = vsub.s32 2, %v2578
        %v2580 = vrot.slane %v2567, %v2579
        %v2581 = vlaneseq
        %v2582 = vshrl.u32 %v2581, 7
        %v2583 = vsub.s32 3, %v2582
        %v2584 = vrot.slane %v2567, %v2583
        %v2590 = vcombine.high %v2566, %v2566
        %v2592 = vunpack.c.l.s4 1983009808
        %v2593 = vunpack.c.0.s8 %v2592
        %v2594 = vlaneseq
        %v2595 = vshrl.u32 %v2594, 7
        %v2596 = vsub.s32 %v2593, %v2595
        %v2597 = vrot.slane %v2566, %v2596
        %v2599 = vunpack.c.l.s4 1983009808
        %v2600 = vunpack.c.0.s8 %v2599
        %v2601 = vlaneseq
        %v2602 = vshrl.u32 %v2601, 7
        %v2603 = vsub.s32 %v2600, %v2602
        %v2604 = vrot.slane %v2590, %v2603
        %v2605 = vcombine.high %v2597, %v2597
        %v2606 = vcombine.high %v2604, %v2604
        %v2608 = vsel %vm444, %v2597, 0
        %v2611 = vsel %vm444, %v2605, 0
        %v2614 = vsel %vm444, %v2604, 0
        %v2617 = vsel %vm444, %v2606, 0
        %2619 = vmatprep.subr.bf16.mxu0 0
        %2620 = vmatpush1.bf16.msra.mxu0 0
        %2621 = vmatprep.subr.bf16.mxu0 0
        %2622 = vmatpush1.bf16.msra.mxu0 0
        %2623 = vmatprep.subr.bf16.mxu0 0
        %2624 = vmatpush1.bf16.msra.mxu0 0
        %2625 = vmatprep.subr.bf16.mxu0 0
        %2626 = vmatpush1.bf16.msra.mxu0 0
        %2627 = vmatprep.subr.bf16.mxu0 0
        %2628 = vmatpush1.bf16.msra.mxu0 0
        %2629 = vmatprep.subr.bf16.mxu0 0
        %2630 = vmatpush1.bf16.msra.mxu0 0
        %2631 = vmatprep.subr.bf16.mxu0 0
        %2632 = vmatpush1.bf16.msra.mxu0 0
        %2633 = vmatprep.subr.bf16.mxu0 %v2611
        %2634 = vmatpush1.bf16.msra.mxu0 %v2608
        %2635 = vmatprep.subr.bf16.mxu0 0
        %2636 = vmatpush2.bf16.msra.mxu0 0
        %2637 = vmatprep.subr.bf16.mxu0 0
        %2638 = vmatpush2.bf16.msra.mxu0 0
        %2639 = vmatprep.subr.bf16.mxu0 0
        %2640 = vmatpush2.bf16.msra.mxu0 0
        %2641 = vmatprep.subr.bf16.mxu0 0
        %2642 = vmatpush2.bf16.msra.mxu0 0
        %2643 = vmatprep.subr.bf16.mxu0 0
        %2644 = vmatpush2.bf16.msra.mxu0 0
        %2645 = vmatprep.subr.bf16.mxu0 0
        %2646 = vmatpush2.bf16.msra.mxu0 0
        %2647 = vmatprep.subr.bf16.mxu0 0
        %2648 = vmatpush2.bf16.msra.mxu0 0
        %2649 = vmatprep.subr.bf16.mxu0 0
        %2650 = vmatpush2.bf16.msra.mxu0 0
        %2651 = vmatprep.mubr.bf16.mxu0 0
        %2652 = vmatmul.mubr.bf16.gmra.mxu0 %v397
        %v2653 = vpop.f32.mrf.mxu0
        %v2654 = vadd.f32 %v2572, %v2653
        %v2655 = vpop.f32.mrf.mxu0
        %v2656 = vadd.f32 %v2576, %v2655
        %v2657 = vpop.f32.mrf.mxu0
        %v2658 = vadd.f32 %v2572, %v2657
        %v2659 = vpop.f32.mrf.mxu0
        %v2660 = vadd.f32 %v2576, %v2659
        %2661 = vmatprep.mubr.bf16.mxu0 0
        %2662 = vmatmul.mubr.bf16.gmra.mxu0 %v400
        %v2663 = vpop.f32.mrf.mxu0
        %v2664 = vadd.f32 %v2572, %v2663
        %v2665 = vpop.f32.mrf.mxu0
        %v2666 = vadd.f32 %v2576, %v2665
        %v2667 = vpop.f32.mrf.mxu0
        %v2668 = vadd.f32 %v2572, %v2667
        %v2669 = vpop.f32.mrf.mxu0
        %v2670 = vadd.f32 %v2576, %v2669
        %2671 = vmatprep.mubr.bf16.mxu0 0
        %2672 = vmatmul.mubr.bf16.gmra.mxu0 %v403
        %v2673 = vpop.f32.mrf.mxu0
        %v2674 = vadd.f32 %v2572, %v2673
        %v2675 = vpop.f32.mrf.mxu0
        %v2676 = vadd.f32 %v2576, %v2675
        %v2677 = vpop.f32.mrf.mxu0
        %v2678 = vadd.f32 %v2572, %v2677
        %v2679 = vpop.f32.mrf.mxu0
        %v2680 = vadd.f32 %v2576, %v2679
        %2681 = vmatprep.mubr.bf16.mxu0 0
        %2682 = vmatmul.mubr.bf16.gmra.mxu0 %v406
        %v2683 = vpop.f32.mrf.mxu0
        %v2684 = vadd.f32 %v2572, %v2683
        %v2685 = vpop.f32.mrf.mxu0
        %v2686 = vadd.f32 %v2576, %v2685
        %v2687 = vpop.f32.mrf.mxu0
        %v2688 = vadd.f32 %v2572, %v2687
        %v2689 = vpop.f32.mrf.mxu0
        %v2690 = vadd.f32 %v2576, %v2689
        %2691 = vmatprep.mubr.bf16.mxu0 0
        %2692 = vmatmul.mubr.bf16.gmra.mxu0 %v409
        %v2693 = vpop.f32.mrf.mxu0
        %v2694 = vadd.f32 %v2572, %v2693
        %v2695 = vpop.f32.mrf.mxu0
        %v2696 = vadd.f32 %v2576, %v2695
        %v2697 = vpop.f32.mrf.mxu0
        %v2698 = vadd.f32 %v2572, %v2697
        %v2699 = vpop.f32.mrf.mxu0
        %v2700 = vadd.f32 %v2576, %v2699
        %2701 = vmatprep.mubr.bf16.mxu0 0
        %2702 = vmatmul.mubr.bf16.gmra.mxu0 %v412
        %v2703 = vpop.f32.mrf.mxu0
        %v2704 = vadd.f32 %v2572, %v2703
        %v2705 = vpop.f32.mrf.mxu0
        %v2706 = vadd.f32 %v2576, %v2705
        %v2707 = vpop.f32.mrf.mxu0
        %v2708 = vadd.f32 %v2572, %v2707
        %v2709 = vpop.f32.mrf.mxu0
        %v2710 = vadd.f32 %v2576, %v2709
        %2711 = vmatprep.mubr.bf16.mxu0 0
        %2712 = vmatmul.mubr.bf16.gmra.mxu0 %v415
        %v2713 = vpop.f32.mrf.mxu0
        %v2714 = vadd.f32 %v2572, %v2713
        %v2715 = vpop.f32.mrf.mxu0
        %v2716 = vadd.f32 %v2576, %v2715
        %v2717 = vpop.f32.mrf.mxu0
        %v2718 = vadd.f32 %v2572, %v2717
        %v2719 = vpop.f32.mrf.mxu0
        %v2720 = vadd.f32 %v2576, %v2719
        %2721 = vmatprep.mubr.bf16.mxu0 0
        %2722 = vmatmul.mubr.bf16.gmra.mxu0 %v418
        %v2723 = vpop.f32.mrf.mxu0
        %v2724 = vadd.f32 %v2572, %v2723
        %v2725 = vpop.f32.mrf.mxu0
        %v2726 = vadd.f32 %v2576, %v2725
        %v2727 = vpop.f32.mrf.mxu0
        %v2728 = vadd.f32 %v2572, %v2727
        %v2729 = vpop.f32.mrf.mxu0
        %v2730 = vadd.f32 %v2576, %v2729
        %2731 = vmatprep.mubr.bf16.mxu0 0
        %2732 = vmatmul.mubr.bf16.gmra.mxu0 %v421
        %v2733 = vpop.f32.mrf.mxu0
        %v2734 = vadd.f32 %v2572, %v2733
        %v2735 = vpop.f32.mrf.mxu0
        %v2736 = vadd.f32 %v2576, %v2735
        %v2737 = vpop.f32.mrf.mxu0
        %v2738 = vadd.f32 %v2572, %v2737
        %v2739 = vpop.f32.mrf.mxu0
        %v2740 = vadd.f32 %v2576, %v2739
        %2741 = vmatprep.mubr.bf16.mxu0 0
        %2742 = vmatmul.mubr.bf16.gmra.mxu0 %v424
        %v2743 = vpop.f32.mrf.mxu0
        %v2744 = vadd.f32 %v2572, %v2743
        %v2745 = vpop.f32.mrf.mxu0
        %v2746 = vadd.f32 %v2576, %v2745
        %v2747 = vpop.f32.mrf.mxu0
        %v2748 = vadd.f32 %v2572, %v2747
        %v2749 = vpop.f32.mrf.mxu0
        %v2750 = vadd.f32 %v2576, %v2749
        %2751 = vmatprep.mubr.bf16.mxu0 0
        %2752 = vmatmul.mubr.bf16.gmra.mxu0 %v427
        %v2753 = vpop.f32.mrf.mxu0
        %v2754 = vadd.f32 %v2572, %v2753
        %v2755 = vpop.f32.mrf.mxu0
        %v2756 = vadd.f32 %v2576, %v2755
        %v2757 = vpop.f32.mrf.mxu0
        %v2758 = vadd.f32 %v2572, %v2757
        %v2759 = vpop.f32.mrf.mxu0
        %v2760 = vadd.f32 %v2576, %v2759
        %2761 = vmatprep.mubr.bf16.mxu0 0
        %2762 = vmatmul.mubr.bf16.gmra.mxu0 %v430
        %v2763 = vpop.f32.mrf.mxu0
        %v2764 = vadd.f32 %v2572, %v2763
        %v2765 = vpop.f32.mrf.mxu0
        %v2766 = vadd.f32 %v2576, %v2765
        %v2767 = vpop.f32.mrf.mxu0
        %v2768 = vadd.f32 %v2572, %v2767
        %v2769 = vpop.f32.mrf.mxu0
        %v2770 = vadd.f32 %v2576, %v2769
        %2771 = vmatprep.mubr.bf16.mxu0 0
        %2772 = vmatmul.mubr.bf16.gmra.mxu0 %v433
        %v2773 = vpop.f32.mrf.mxu0
        %v2774 = vadd.f32 %v2572, %v2773
        %v2775 = vpop.f32.mrf.mxu0
        %v2776 = vadd.f32 %v2576, %v2775
        %v2777 = vpop.f32.mrf.mxu0
        %v2778 = vadd.f32 %v2572, %v2777
        %v2779 = vpop.f32.mrf.mxu0
        %v2780 = vadd.f32 %v2576, %v2779
        %2781 = vmatprep.mubr.bf16.mxu0 0
        %2782 = vmatmul.mubr.bf16.gmra.mxu0 %v436
        %v2783 = vpop.f32.mrf.mxu0
        %v2784 = vadd.f32 %v2572, %v2783
        %v2785 = vpop.f32.mrf.mxu0
        %v2786 = vadd.f32 %v2576, %v2785
        %v2787 = vpop.f32.mrf.mxu0
        %v2788 = vadd.f32 %v2572, %v2787
        %v2789 = vpop.f32.mrf.mxu0
        %v2790 = vadd.f32 %v2576, %v2789
        %2791 = vmatprep.mubr.bf16.mxu0 0
        %2792 = vmatmul.mubr.bf16.gmra.mxu0 %v439
        %v2793 = vpop.f32.mrf.mxu0
        %v2794 = vadd.f32 %v2572, %v2793
        %v2795 = vpop.f32.mrf.mxu0
        %v2796 = vadd.f32 %v2576, %v2795
        %v2797 = vpop.f32.mrf.mxu0
        %v2798 = vadd.f32 %v2572, %v2797
        %v2799 = vpop.f32.mrf.mxu0
        %v2800 = vadd.f32 %v2576, %v2799
        %2801 = vmatprep.mubr.bf16.mxu0 0
        %2802 = vmatmul.mubr.bf16.gmra.mxu0 %v442
        %v2803 = vpop.f32.mrf.mxu0
        %v2804 = vadd.f32 %v2572, %v2803
        %v2805 = vpop.f32.mrf.mxu0
        %v2806 = vadd.f32 %v2576, %v2805
        %v2807 = vpop.f32.mrf.mxu0
        %v2808 = vadd.f32 %v2572, %v2807
        %v2809 = vpop.f32.mrf.mxu0
        %v2810 = vadd.f32 %v2576, %v2809
        %2811 = vdwg.mxu0
        %2812 = vmatprep.subr.bf16.mxu0 0
        %2813 = vmatpush1.bf16.msra.mxu0 0
        %2814 = vmatprep.subr.bf16.mxu0 0
        %2815 = vmatpush1.bf16.msra.mxu0 0
        %2816 = vmatprep.subr.bf16.mxu0 0
        %2817 = vmatpush1.bf16.msra.mxu0 0
        %2818 = vmatprep.subr.bf16.mxu0 0
        %2819 = vmatpush1.bf16.msra.mxu0 0
        %2820 = vmatprep.subr.bf16.mxu0 0
        %2821 = vmatpush1.bf16.msra.mxu0 0
        %2822 = vmatprep.subr.bf16.mxu0 0
        %2823 = vmatpush1.bf16.msra.mxu0 0
        %2824 = vmatprep.subr.bf16.mxu0 0
        %2825 = vmatpush1.bf16.msra.mxu0 0
        %2826 = vmatprep.subr.bf16.mxu0 %v2617
        %2827 = vmatpush1.bf16.msra.mxu0 %v2614
        %2828 = vmatprep.subr.bf16.mxu0 0
        %2829 = vmatpush2.bf16.msra.mxu0 0
        %2830 = vmatprep.subr.bf16.mxu0 0
        %2831 = vmatpush2.bf16.msra.mxu0 0
        %2832 = vmatprep.subr.bf16.mxu0 0
        %2833 = vmatpush2.bf16.msra.mxu0 0
        %2834 = vmatprep.subr.bf16.mxu0 0
        %2835 = vmatpush2.bf16.msra.mxu0 0
        %2836 = vmatprep.subr.bf16.mxu0 0
        %2837 = vmatpush2.bf16.msra.mxu0 0
        %2838 = vmatprep.subr.bf16.mxu0 0
        %2839 = vmatpush2.bf16.msra.mxu0 0
        %2840 = vmatprep.subr.bf16.mxu0 0
        %2841 = vmatpush2.bf16.msra.mxu0 0
        %2842 = vmatprep.subr.bf16.mxu0 0
        %2843 = vmatpush2.bf16.msra.mxu0 0
        %2844 = vmatprep.mubr.bf16.mxu0 0
        %2845 = vmatmul.mubr.bf16.gmra.mxu0 %v397
        %v2846 = vpop.f32.mrf.mxu0
        %v2847 = vadd.f32 %v2580, %v2846
        %v2848 = vpop.f32.mrf.mxu0
        %v2849 = vadd.f32 %v2584, %v2848
        %v2850 = vpop.f32.mrf.mxu0
        %v2851 = vadd.f32 %v2580, %v2850
        %v2852 = vpop.f32.mrf.mxu0
        %v2853 = vadd.f32 %v2584, %v2852
        %2854 = vmatprep.mubr.bf16.mxu0 0
        %2855 = vmatmul.mubr.bf16.gmra.mxu0 %v400
        %v2856 = vpop.f32.mrf.mxu0
        %v2857 = vadd.f32 %v2580, %v2856
        %v2858 = vpop.f32.mrf.mxu0
        %v2859 = vadd.f32 %v2584, %v2858
        %v2860 = vpop.f32.mrf.mxu0
        %v2861 = vadd.f32 %v2580, %v2860
        %v2862 = vpop.f32.mrf.mxu0
        %v2863 = vadd.f32 %v2584, %v2862
        %2864 = vmatprep.mubr.bf16.mxu0 0
        %2865 = vmatmul.mubr.bf16.gmra.mxu0 %v403
        %v2866 = vpop.f32.mrf.mxu0
        %v2867 = vadd.f32 %v2580, %v2866
        %v2868 = vpop.f32.mrf.mxu0
        %v2869 = vadd.f32 %v2584, %v2868
        %v2870 = vpop.f32.mrf.mxu0
        %v2871 = vadd.f32 %v2580, %v2870
        %v2872 = vpop.f32.mrf.mxu0
        %v2873 = vadd.f32 %v2584, %v2872
        %2874 = vmatprep.mubr.bf16.mxu0 0
        %2875 = vmatmul.mubr.bf16.gmra.mxu0 %v406
        %v2876 = vpop.f32.mrf.mxu0
        %v2877 = vadd.f32 %v2580, %v2876
        %v2878 = vpop.f32.mrf.mxu0
        %v2879 = vadd.f32 %v2584, %v2878
        %v2880 = vpop.f32.mrf.mxu0
        %v2881 = vadd.f32 %v2580, %v2880
        %v2882 = vpop.f32.mrf.mxu0
        %v2883 = vadd.f32 %v2584, %v2882
        %2884 = vmatprep.mubr.bf16.mxu0 0
        %2885 = vmatmul.mubr.bf16.gmra.mxu0 %v409
        %v2886 = vpop.f32.mrf.mxu0
        %v2887 = vadd.f32 %v2580, %v2886
        %v2888 = vpop.f32.mrf.mxu0
        %v2889 = vadd.f32 %v2584, %v2888
        %v2890 = vpop.f32.mrf.mxu0
        %v2891 = vadd.f32 %v2580, %v2890
        %v2892 = vpop.f32.mrf.mxu0
        %v2893 = vadd.f32 %v2584, %v2892
        %2894 = vmatprep.mubr.bf16.mxu0 0
        %2895 = vmatmul.mubr.bf16.gmra.mxu0 %v412
        %v2896 = vpop.f32.mrf.mxu0
        %v2897 = vadd.f32 %v2580, %v2896
        %v2898 = vpop.f32.mrf.mxu0
        %v2899 = vadd.f32 %v2584, %v2898
        %v2900 = vpop.f32.mrf.mxu0
        %v2901 = vadd.f32 %v2580, %v2900
        %v2902 = vpop.f32.mrf.mxu0
        %v2903 = vadd.f32 %v2584, %v2902
        %2904 = vmatprep.mubr.bf16.mxu0 0
        %2905 = vmatmul.mubr.bf16.gmra.mxu0 %v415
        %v2906 = vpop.f32.mrf.mxu0
        %v2907 = vadd.f32 %v2580, %v2906
        %v2908 = vpop.f32.mrf.mxu0
        %v2909 = vadd.f32 %v2584, %v2908
        %v2910 = vpop.f32.mrf.mxu0
        %v2911 = vadd.f32 %v2580, %v2910
        %v2912 = vpop.f32.mrf.mxu0
        %v2913 = vadd.f32 %v2584, %v2912
        %2914 = vmatprep.mubr.bf16.mxu0 0
        %2915 = vmatmul.mubr.bf16.gmra.mxu0 %v418
        %v2916 = vpop.f32.mrf.mxu0
        %v2917 = vadd.f32 %v2580, %v2916
        %v2918 = vpop.f32.mrf.mxu0
        %v2919 = vadd.f32 %v2584, %v2918
        %v2920 = vpop.f32.mrf.mxu0
        %v2921 = vadd.f32 %v2580, %v2920
        %v2922 = vpop.f32.mrf.mxu0
        %v2923 = vadd.f32 %v2584, %v2922
        %2924 = vmatprep.mubr.bf16.mxu0 0
        %2925 = vmatmul.mubr.bf16.gmra.mxu0 %v421
        %v2926 = vpop.f32.mrf.mxu0
        %v2927 = vadd.f32 %v2580, %v2926
        %v2928 = vpop.f32.mrf.mxu0
        %v2929 = vadd.f32 %v2584, %v2928
        %v2930 = vpop.f32.mrf.mxu0
        %v2931 = vadd.f32 %v2580, %v2930
        %v2932 = vpop.f32.mrf.mxu0
        %v2933 = vadd.f32 %v2584, %v2932
        %2934 = vmatprep.mubr.bf16.mxu0 0
        %2935 = vmatmul.mubr.bf16.gmra.mxu0 %v424
        %v2936 = vpop.f32.mrf.mxu0
        %v2937 = vadd.f32 %v2580, %v2936
        %v2938 = vpop.f32.mrf.mxu0
        %v2939 = vadd.f32 %v2584, %v2938
        %v2940 = vpop.f32.mrf.mxu0
        %v2941 = vadd.f32 %v2580, %v2940
        %v2942 = vpop.f32.mrf.mxu0
        %v2943 = vadd.f32 %v2584, %v2942
        %2944 = vmatprep.mubr.bf16.mxu0 0
        %2945 = vmatmul.mubr.bf16.gmra.mxu0 %v427
        %v2946 = vpop.f32.mrf.mxu0
        %v2947 = vadd.f32 %v2580, %v2946
        %v2948 = vpop.f32.mrf.mxu0
        %v2949 = vadd.f32 %v2584, %v2948
        %v2950 = vpop.f32.mrf.mxu0
        %v2951 = vadd.f32 %v2580, %v2950
        %v2952 = vpop.f32.mrf.mxu0
        %v2953 = vadd.f32 %v2584, %v2952
        %2954 = vmatprep.mubr.bf16.mxu0 0
        %2955 = vmatmul.mubr.bf16.gmra.mxu0 %v430
        %v2956 = vpop.f32.mrf.mxu0
        %v2957 = vadd.f32 %v2580, %v2956
        %v2958 = vpop.f32.mrf.mxu0
        %v2959 = vadd.f32 %v2584, %v2958
        %v2960 = vpop.f32.mrf.mxu0
        %v2961 = vadd.f32 %v2580, %v2960
        %v2962 = vpop.f32.mrf.mxu0
        %v2963 = vadd.f32 %v2584, %v2962
        %2964 = vmatprep.mubr.bf16.mxu0 0
        %2965 = vmatmul.mubr.bf16.gmra.mxu0 %v433
        %v2966 = vpop.f32.mrf.mxu0
        %v2967 = vadd.f32 %v2580, %v2966
        %v2968 = vpop.f32.mrf.mxu0
        %v2969 = vadd.f32 %v2584, %v2968
        %v2970 = vpop.f32.mrf.mxu0
        %v2971 = vadd.f32 %v2580, %v2970
        %v2972 = vpop.f32.mrf.mxu0
        %v2973 = vadd.f32 %v2584, %v2972
        %2974 = vmatprep.mubr.bf16.mxu0 0
        %2975 = vmatmul.mubr.bf16.gmra.mxu0 %v436
        %v2976 = vpop.f32.mrf.mxu0
        %v2977 = vadd.f32 %v2580, %v2976
        %v2978 = vpop.f32.mrf.mxu0
        %v2979 = vadd.f32 %v2584, %v2978
        %v2980 = vpop.f32.mrf.mxu0
        %v2981 = vadd.f32 %v2580, %v2980
        %v2982 = vpop.f32.mrf.mxu0
        %v2983 = vadd.f32 %v2584, %v2982
        %2984 = vmatprep.mubr.bf16.mxu0 0
        %2985 = vmatmul.mubr.bf16.gmra.mxu0 %v439
        %v2986 = vpop.f32.mrf.mxu0
        %v2987 = vadd.f32 %v2580, %v2986
        %v2988 = vpop.f32.mrf.mxu0
        %v2989 = vadd.f32 %v2584, %v2988
        %v2990 = vpop.f32.mrf.mxu0
        %v2991 = vadd.f32 %v2580, %v2990
        %v2992 = vpop.f32.mrf.mxu0
        %v2993 = vadd.f32 %v2584, %v2992
        %2994 = vmatprep.mubr.bf16.mxu0 0
        %2995 = vmatmul.mubr.bf16.gmra.mxu0 %v442
        %v2996 = vpop.f32.mrf.mxu0
        %v2997 = vadd.f32 %v2580, %v2996
        %v2998 = vpop.f32.mrf.mxu0
        %v2999 = vadd.f32 %v2584, %v2998
        %v3000 = vpop.f32.mrf.mxu0
        %v3001 = vadd.f32 %v2580, %v3000
        %v3002 = vpop.f32.mrf.mxu0
        %v3003 = vadd.f32 %v2584, %v3002
        %3004 = vdwg.mxu0
        %v3005 = vpack.c.bf16 %v2658, %v2654
        %v3006 = vpack.c.bf16 %v2660, %v2656
        %v3007 = vpack.c.bf16 %v2851, %v2847
        %v3008 = vpack.c.bf16 %v2853, %v2849
        %v3009 = vpack.c.bf16 %v2668, %v2664
        %v3010 = vpack.c.bf16 %v2670, %v2666
        %v3011 = vpack.c.bf16 %v2861, %v2857
        %v3012 = vpack.c.bf16 %v2863, %v2859
        %v3013 = vpack.c.bf16 %v2678, %v2674
        %v3014 = vpack.c.bf16 %v2680, %v2676
        %v3015 = vpack.c.bf16 %v2871, %v2867
        %v3016 = vpack.c.bf16 %v2873, %v2869
        %v3017 = vpack.c.bf16 %v2688, %v2684
        %v3018 = vpack.c.bf16 %v2690, %v2686
        %v3019 = vpack.c.bf16 %v2881, %v2877
        %v3020 = vpack.c.bf16 %v2883, %v2879
        %v3021 = vpack.c.bf16 %v2698, %v2694
        %v3022 = vpack.c.bf16 %v2700, %v2696
        %v3023 = vpack.c.bf16 %v2891, %v2887
        %v3024 = vpack.c.bf16 %v2893, %v2889
        %v3025 = vpack.c.bf16 %v2708, %v2704
        %v3026 = vpack.c.bf16 %v2710, %v2706
        %v3027 = vpack.c.bf16 %v2901, %v2897
        %v3028 = vpack.c.bf16 %v2903, %v2899
        %v3029 = vpack.c.bf16 %v2718, %v2714
        %v3030 = vpack.c.bf16 %v2720, %v2716
        %v3031 = vpack.c.bf16 %v2911, %v2907
        %v3032 = vpack.c.bf16 %v2913, %v2909
        %v3033 = vpack.c.bf16 %v2728, %v2724
        %v3034 = vpack.c.bf16 %v2730, %v2726
        %v3035 = vpack.c.bf16 %v2921, %v2917
        %v3036 = vpack.c.bf16 %v2923, %v2919
        %v3037 = vpack.c.bf16 %v2738, %v2734
        %v3038 = vpack.c.bf16 %v2740, %v2736
        %v3039 = vpack.c.bf16 %v2931, %v2927
        %v3040 = vpack.c.bf16 %v2933, %v2929
        %v3041 = vpack.c.bf16 %v2748, %v2744
        %v3042 = vpack.c.bf16 %v2750, %v2746
        %v3043 = vpack.c.bf16 %v2941, %v2937
        %v3044 = vpack.c.bf16 %v2943, %v2939
        %v3045 = vpack.c.bf16 %v2758, %v2754
        %v3046 = vpack.c.bf16 %v2760, %v2756
        %v3047 = vpack.c.bf16 %v2951, %v2947
        %v3048 = vpack.c.bf16 %v2953, %v2949
        %v3049 = vpack.c.bf16 %v2768, %v2764
        %v3050 = vpack.c.bf16 %v2770, %v2766
        %v3051 = vpack.c.bf16 %v2961, %v2957
        %v3052 = vpack.c.bf16 %v2963, %v2959
        %v3053 = vpack.c.bf16 %v2778, %v2774
        %v3054 = vpack.c.bf16 %v2780, %v2776
        %v3055 = vpack.c.bf16 %v2971, %v2967
        %v3056 = vpack.c.bf16 %v2973, %v2969
        %v3057 = vpack.c.bf16 %v2788, %v2784
        %v3058 = vpack.c.bf16 %v2790, %v2786
        %v3059 = vpack.c.bf16 %v2981, %v2977
        %v3060 = vpack.c.bf16 %v2983, %v2979
        %v3061 = vpack.c.bf16 %v2798, %v2794
        %v3062 = vpack.c.bf16 %v2800, %v2796
        %v3063 = vpack.c.bf16 %v2991, %v2987
        %v3064 = vpack.c.bf16 %v2993, %v2989
        %v3065 = vpack.c.bf16 %v2808, %v2804
        %v3066 = vpack.c.bf16 %v2810, %v2806
        %v3067 = vpack.c.bf16 %v3001, %v2997
        %v3068 = vpack.c.bf16 %v3003, %v2999
        %v3069 = vld [vmem:[#allocation2 + $0x200] sm:$0xf]
        %v3070 = vld [vmem:[#allocation2 + $0x204] sm:$0xf]
        %v3071 = vld [vmem:[#allocation2 + $0x208] sm:$0xf]
        %v3072 = vld [vmem:[#allocation2 + $0x20c] sm:$0xf]
        %v3073 = vld [vmem:[#allocation2 + $0x210] sm:$0xf]
        %v3074 = vld [vmem:[#allocation2 + $0x214] sm:$0xf]
        %v3075 = vld [vmem:[#allocation2 + $0x218] sm:$0xf]
        %v3076 = vld [vmem:[#allocation2 + $0x21c] sm:$0xf]
        %v3077 = vld [vmem:[#allocation2 + $0x220] sm:$0xf]
        %v3078 = vld [vmem:[#allocation2 + $0x224] sm:$0xf]
        %v3079 = vld [vmem:[#allocation2 + $0x228] sm:$0xf]
        %v3080 = vld [vmem:[#allocation2 + $0x22c] sm:$0xf]
        %v3081 = vld [vmem:[#allocation2 + $0x230] sm:$0xf]
        %v3082 = vld [vmem:[#allocation2 + $0x234] sm:$0xf]
        %v3083 = vld [vmem:[#allocation2 + $0x238] sm:$0xf]
        %v3084 = vld [vmem:[#allocation2 + $0x23c] sm:$0xf]
        %v3085 = vld [vmem:[#allocation2 + $0x240] sm:$0xf]
        %v3086 = vld [vmem:[#allocation2 + $0x244] sm:$0xf]
        %v3087 = vld [vmem:[#allocation2 + $0x248] sm:$0xf]
        %v3088 = vld [vmem:[#allocation2 + $0x24c] sm:$0xf]
        %v3089 = vld [vmem:[#allocation2 + $0x250] sm:$0xf]
        %v3090 = vld [vmem:[#allocation2 + $0x254] sm:$0xf]
        %v3091 = vld [vmem:[#allocation2 + $0x258] sm:$0xf]
        %v3092 = vld [vmem:[#allocation2 + $0x25c] sm:$0xf]
        %v3093 = vld [vmem:[#allocation2 + $0x260] sm:$0xf]
        %v3094 = vld [vmem:[#allocation2 + $0x264] sm:$0xf]
        %v3095 = vld [vmem:[#allocation2 + $0x268] sm:$0xf]
        %v3096 = vld [vmem:[#allocation2 + $0x26c] sm:$0xf]
        %v3097 = vld [vmem:[#allocation2 + $0x270] sm:$0xf]
        %v3098 = vld [vmem:[#allocation2 + $0x274] sm:$0xf]
        %v3099 = vld [vmem:[#allocation2 + $0x278] sm:$0xf]
        %v3100 = vld [vmem:[#allocation2 + $0x27c] sm:$0xf]
        %v3101 = vld [vmem:[#allocation2 + $0x280] sm:$0xf]
        %v3102 = vld [vmem:[#allocation2 + $0x284] sm:$0xf]
        %v3103 = vld [vmem:[#allocation2 + $0x288] sm:$0xf]
        %v3104 = vld [vmem:[#allocation2 + $0x28c] sm:$0xf]
        %v3105 = vld [vmem:[#allocation2 + $0x290] sm:$0xf]
        %v3106 = vld [vmem:[#allocation2 + $0x294] sm:$0xf]
        %v3107 = vld [vmem:[#allocation2 + $0x298] sm:$0xf]
        %v3108 = vld [vmem:[#allocation2 + $0x29c] sm:$0xf]
        %v3109 = vld [vmem:[#allocation2 + $0x2a0] sm:$0xf]
        %v3110 = vld [vmem:[#allocation2 + $0x2a4] sm:$0xf]
        %v3111 = vld [vmem:[#allocation2 + $0x2a8] sm:$0xf]
        %v3112 = vld [vmem:[#allocation2 + $0x2ac] sm:$0xf]
        %v3113 = vld [vmem:[#allocation2 + $0x2b0] sm:$0xf]
        %v3114 = vld [vmem:[#allocation2 + $0x2b4] sm:$0xf]
        %v3115 = vld [vmem:[#allocation2 + $0x2b8] sm:$0xf]
        %v3116 = vld [vmem:[#allocation2 + $0x2bc] sm:$0xf]
        %v3117 = vld [vmem:[#allocation2 + $0x2c0] sm:$0xf]
        %v3118 = vld [vmem:[#allocation2 + $0x2c4] sm:$0xf]
        %v3119 = vld [vmem:[#allocation2 + $0x2c8] sm:$0xf]
        %v3120 = vld [vmem:[#allocation2 + $0x2cc] sm:$0xf]
        %v3121 = vld [vmem:[#allocation2 + $0x2d0] sm:$0xf]
        %v3122 = vld [vmem:[#allocation2 + $0x2d4] sm:$0xf]
        %v3123 = vld [vmem:[#allocation2 + $0x2d8] sm:$0xf]
        %v3124 = vld [vmem:[#allocation2 + $0x2dc] sm:$0xf]
        %v3125 = vld [vmem:[#allocation2 + $0x2e0] sm:$0xf]
        %v3126 = vld [vmem:[#allocation2 + $0x2e4] sm:$0xf]
        %v3127 = vld [vmem:[#allocation2 + $0x2e8] sm:$0xf]
        %v3128 = vld [vmem:[#allocation2 + $0x2ec] sm:$0xf]
        %v3129 = vld [vmem:[#allocation2 + $0x2f0] sm:$0xf]
        %v3130 = vld [vmem:[#allocation2 + $0x2f4] sm:$0xf]
        %v3131 = vld [vmem:[#allocation2 + $0x2f8] sm:$0xf]
        %v3132 = vld [vmem:[#allocation2 + $0x2fc] sm:$0xf]
        %v3197 = vunpack.c.l.b16 %v3069
        %v3198 = vunpack.c.l.b16 %v3070
        %v3199 = vunpack.c.l.b16 %v3071
        %v3200 = vunpack.c.l.b16 %v3072
        %v3201 = vunpack.c.l.b16 %v3073
        %v3202 = vunpack.c.l.b16 %v3074
        %v3203 = vunpack.c.l.b16 %v3075
        %v3204 = vunpack.c.l.b16 %v3076
        %v3205 = vunpack.c.l.b16 %v3077
        %v3206 = vunpack.c.l.b16 %v3078
        %v3207 = vunpack.c.l.b16 %v3079
        %v3208 = vunpack.c.l.b16 %v3080
        %v3209 = vunpack.c.l.b16 %v3081
        %v3210 = vunpack.c.l.b16 %v3082
        %v3211 = vunpack.c.l.b16 %v3083
        %v3212 = vunpack.c.l.b16 %v3084
        %v3213 = vunpack.c.l.b16 %v3085
        %v3214 = vunpack.c.l.b16 %v3086
        %v3215 = vunpack.c.l.b16 %v3087
        %v3216 = vunpack.c.l.b16 %v3088
        %v3217 = vunpack.c.l.b16 %v3089
        %v3218 = vunpack.c.l.b16 %v3090
        %v3219 = vunpack.c.l.b16 %v3091
        %v3220 = vunpack.c.l.b16 %v3092
        %v3221 = vunpack.c.l.b16 %v3093
        %v3222 = vunpack.c.l.b16 %v3094
        %v3223 = vunpack.c.l.b16 %v3095
        %v3224 = vunpack.c.l.b16 %v3096
        %v3225 = vunpack.c.l.b16 %v3097
        %v3226 = vunpack.c.l.b16 %v3098
        %v3227 = vunpack.c.l.b16 %v3099
        %v3228 = vunpack.c.l.b16 %v3100
        %v3229 = vunpack.c.l.b16 %v3101
        %v3230 = vunpack.c.l.b16 %v3102
        %v3231 = vunpack.c.l.b16 %v3103
        %v3232 = vunpack.c.l.b16 %v3104
        %v3233 = vunpack.c.l.b16 %v3105
        %v3234 = vunpack.c.l.b16 %v3106
        %v3235 = vunpack.c.l.b16 %v3107
        %v3236 = vunpack.c.l.b16 %v3108
        %v3237 = vunpack.c.l.b16 %v3109
        %v3238 = vunpack.c.l.b16 %v3110
        %v3239 = vunpack.c.l.b16 %v3111
        %v3240 = vunpack.c.l.b16 %v3112
        %v3241 = vunpack.c.l.b16 %v3113
        %v3242 = vunpack.c.l.b16 %v3114
        %v3243 = vunpack.c.l.b16 %v3115
        %v3244 = vunpack.c.l.b16 %v3116
        %v3245 = vunpack.c.l.b16 %v3117
        %v3246 = vunpack.c.l.b16 %v3118
        %v3247 = vunpack.c.l.b16 %v3119
        %v3248 = vunpack.c.l.b16 %v3120
        %v3249 = vunpack.c.l.b16 %v3121
        %v3250 = vunpack.c.l.b16 %v3122
        %v3251 = vunpack.c.l.b16 %v3123
        %v3252 = vunpack.c.l.b16 %v3124
        %v3253 = vunpack.c.l.b16 %v3125
        %v3254 = vunpack.c.l.b16 %v3126
        %v3255 = vunpack.c.l.b16 %v3127
        %v3256 = vunpack.c.l.b16 %v3128
        %v3257 = vunpack.c.l.b16 %v3129
        %v3258 = vunpack.c.l.b16 %v3130
        %v3259 = vunpack.c.l.b16 %v3131
        %v3260 = vunpack.c.l.b16 %v3132
        %v3261 = vpack.c.b16 %v3198, %v3197
        %v3262 = vpack.c.b16 %v3200, %v3199
        %v3263 = vpack.c.b16 %v3202, %v3201
        %v3264 = vpack.c.b16 %v3204, %v3203
        %v3265 = vpack.c.b16 %v3206, %v3205
        %v3266 = vpack.c.b16 %v3208, %v3207
        %v3267 = vpack.c.b16 %v3210, %v3209
        %v3268 = vpack.c.b16 %v3212, %v3211
        %v3269 = vpack.c.b16 %v3214, %v3213
        %v3270 = vpack.c.b16 %v3216, %v3215
        %v3271 = vpack.c.b16 %v3218, %v3217
        %v3272 = vpack.c.b16 %v3220, %v3219
        %v3273 = vpack.c.b16 %v3222, %v3221
        %v3274 = vpack.c.b16 %v3224, %v3223
        %v3275 = vpack.c.b16 %v3226, %v3225
        %v3276 = vpack.c.b16 %v3228, %v3227
        %v3277 = vpack.c.b16 %v3230, %v3229
        %v3278 = vpack.c.b16 %v3232, %v3231
        %v3279 = vpack.c.b16 %v3234, %v3233
        %v3280 = vpack.c.b16 %v3236, %v3235
        %v3281 = vpack.c.b16 %v3238, %v3237
        %v3282 = vpack.c.b16 %v3240, %v3239
        %v3283 = vpack.c.b16 %v3242, %v3241
        %v3284 = vpack.c.b16 %v3244, %v3243
        %v3285 = vpack.c.b16 %v3246, %v3245
        %v3286 = vpack.c.b16 %v3248, %v3247
        %v3287 = vpack.c.b16 %v3250, %v3249
        %v3288 = vpack.c.b16 %v3252, %v3251
        %v3289 = vpack.c.b16 %v3254, %v3253
        %v3290 = vpack.c.b16 %v3256, %v3255
        %v3291 = vpack.c.b16 %v3258, %v3257
        %v3292 = vpack.c.b16 %v3260, %v3259
        %3325 = vmatprep.subr.bf16.mxu0 0
        %3326 = vmatpush1.bf16.msra.mxu0 %v3268
        %3327 = vmatprep.subr.bf16.mxu0 0
        %3328 = vmatpush1.bf16.msra.mxu0 %v3267
        %3329 = vmatprep.subr.bf16.mxu0 0
        %3330 = vmatpush1.bf16.msra.mxu0 %v3266
        %3331 = vmatprep.subr.bf16.mxu0 0
        %3332 = vmatpush1.bf16.msra.mxu0 %v3265
        %3333 = vmatprep.subr.bf16.mxu0 0
        %3334 = vmatpush1.bf16.msra.mxu0 %v3264
        %3335 = vmatprep.subr.bf16.mxu0 0
        %3336 = vmatpush1.bf16.msra.mxu0 %v3263
        %3337 = vmatprep.subr.bf16.mxu0 0
        %3338 = vmatpush1.bf16.msra.mxu0 %v3262
        %3339 = vmatprep.subr.bf16.mxu0 0
        %3340 = vmatpush1.bf16.msra.mxu0 %v3261
        %3341 = vmatprep.subr.bf16.mxu0 0
        %3342 = vmatpush2.bf16.msra.mxu0 %v3276
        %3343 = vmatprep.subr.bf16.mxu0 0
        %3344 = vmatpush2.bf16.msra.mxu0 %v3275
        %3345 = vmatprep.subr.bf16.mxu0 0
        %3346 = vmatpush2.bf16.msra.mxu0 %v3274
        %3347 = vmatprep.subr.bf16.mxu0 0
        %3348 = vmatpush2.bf16.msra.mxu0 %v3273
        %3349 = vmatprep.subr.bf16.mxu0 0
        %3350 = vmatpush2.bf16.msra.mxu0 %v3272
        %3351 = vmatprep.subr.bf16.mxu0 0
        %3352 = vmatpush2.bf16.msra.mxu0 %v3271
        %3353 = vmatprep.subr.bf16.mxu0 0
        %3354 = vmatpush2.bf16.msra.mxu0 %v3270
        %3355 = vmatprep.subr.bf16.mxu0 0
        %3356 = vmatpush2.bf16.msra.mxu0 %v3269
        %3357 = vmatprep.mubr.bf16.mxu0 %v3006
        %3358 = vmatmul.mubr.bf16.gmra.mxu0 %v3005
        %v3359 = vpop.f32.mrf.mxu0
        %v3360 = vadd.f32 0.0, %v3359
        %v3361 = vpop.f32.mrf.mxu0
        %v3362 = vpop.f32.mrf.mxu0
        %v3363 = vadd.f32 0.0, %v3362
        %v3364 = vpop.f32.mrf.mxu0
        %3365 = vmatprep.mubr.bf16.mxu0 %v3010
        %3366 = vmatmul.mubr.bf16.gmra.mxu0 %v3009
        %v3367 = vpop.f32.mrf.mxu0
        %v3368 = vadd.f32 0.0, %v3367
        %v3369 = vpop.f32.mrf.mxu0
        %v3370 = vpop.f32.mrf.mxu0
        %v3371 = vadd.f32 0.0, %v3370
        %v3372 = vpop.f32.mrf.mxu0
        %3373 = vmatprep.mubr.bf16.mxu0 %v3014
        %3374 = vmatmul.mubr.bf16.gmra.mxu0 %v3013
        %v3375 = vpop.f32.mrf.mxu0
        %v3376 = vadd.f32 0.0, %v3375
        %v3377 = vpop.f32.mrf.mxu0
        %v3378 = vpop.f32.mrf.mxu0
        %v3379 = vadd.f32 0.0, %v3378
        %v3380 = vpop.f32.mrf.mxu0
        %3381 = vmatprep.mubr.bf16.mxu0 %v3018
        %3382 = vmatmul.mubr.bf16.gmra.mxu0 %v3017
        %v3383 = vpop.f32.mrf.mxu0
        %v3384 = vadd.f32 0.0, %v3383
        %v3385 = vpop.f32.mrf.mxu0
        %v3386 = vpop.f32.mrf.mxu0
        %v3387 = vadd.f32 0.0, %v3386
        %v3388 = vpop.f32.mrf.mxu0
        %3389 = vmatprep.mubr.bf16.mxu0 %v3022
        %3390 = vmatmul.mubr.bf16.gmra.mxu0 %v3021
        %v3391 = vpop.f32.mrf.mxu0
        %v3392 = vadd.f32 0.0, %v3391
        %v3393 = vpop.f32.mrf.mxu0
        %v3394 = vpop.f32.mrf.mxu0
        %v3395 = vadd.f32 0.0, %v3394
        %v3396 = vpop.f32.mrf.mxu0
        %3397 = vmatprep.mubr.bf16.mxu0 %v3026
        %3398 = vmatmul.mubr.bf16.gmra.mxu0 %v3025
        %v3399 = vpop.f32.mrf.mxu0
        %v3400 = vadd.f32 0.0, %v3399
        %v3401 = vpop.f32.mrf.mxu0
        %v3402 = vpop.f32.mrf.mxu0
        %v3403 = vadd.f32 0.0, %v3402
        %v3404 = vpop.f32.mrf.mxu0
        %3405 = vmatprep.mubr.bf16.mxu0 %v3030
        %3406 = vmatmul.mubr.bf16.gmra.mxu0 %v3029
        %v3407 = vpop.f32.mrf.mxu0
        %v3408 = vadd.f32 0.0, %v3407
        %v3409 = vpop.f32.mrf.mxu0
        %v3410 = vpop.f32.mrf.mxu0
        %v3411 = vadd.f32 0.0, %v3410
        %v3412 = vpop.f32.mrf.mxu0
        %3413 = vmatprep.mubr.bf16.mxu0 %v3034
        %3414 = vmatmul.mubr.bf16.gmra.mxu0 %v3033
        %v3415 = vpop.f32.mrf.mxu0
        %v3416 = vadd.f32 0.0, %v3415
        %v3417 = vpop.f32.mrf.mxu0
        %v3418 = vpop.f32.mrf.mxu0
        %v3419 = vadd.f32 0.0, %v3418
        %v3420 = vpop.f32.mrf.mxu0
        %3421 = vmatprep.mubr.bf16.mxu0 %v3038
        %3422 = vmatmul.mubr.bf16.gmra.mxu0 %v3037
        %v3423 = vpop.f32.mrf.mxu0
        %v3424 = vadd.f32 0.0, %v3423
        %v3425 = vpop.f32.mrf.mxu0
        %v3426 = vpop.f32.mrf.mxu0
        %v3427 = vadd.f32 0.0, %v3426
        %v3428 = vpop.f32.mrf.mxu0
        %3429 = vmatprep.mubr.bf16.mxu0 %v3042
        %3430 = vmatmul.mubr.bf16.gmra.mxu0 %v3041
        %v3431 = vpop.f32.mrf.mxu0
        %v3432 = vadd.f32 0.0, %v3431
        %v3433 = vpop.f32.mrf.mxu0
        %v3434 = vpop.f32.mrf.mxu0
        %v3435 = vadd.f32 0.0, %v3434
        %v3436 = vpop.f32.mrf.mxu0
        %3437 = vmatprep.mubr.bf16.mxu0 %v3046
        %3438 = vmatmul.mubr.bf16.gmra.mxu0 %v3045
        %v3439 = vpop.f32.mrf.mxu0
        %v3440 = vadd.f32 0.0, %v3439
        %v3441 = vpop.f32.mrf.mxu0
        %v3442 = vpop.f32.mrf.mxu0
        %v3443 = vadd.f32 0.0, %v3442
        %v3444 = vpop.f32.mrf.mxu0
        %3445 = vmatprep.mubr.bf16.mxu0 %v3050
        %3446 = vmatmul.mubr.bf16.gmra.mxu0 %v3049
        %v3447 = vpop.f32.mrf.mxu0
        %v3448 = vadd.f32 0.0, %v3447
        %v3449 = vpop.f32.mrf.mxu0
        %v3450 = vpop.f32.mrf.mxu0
        %v3451 = vadd.f32 0.0, %v3450
        %v3452 = vpop.f32.mrf.mxu0
        %3453 = vmatprep.mubr.bf16.mxu0 %v3054
        %3454 = vmatmul.mubr.bf16.gmra.mxu0 %v3053
        %v3455 = vpop.f32.mrf.mxu0
        %v3456 = vadd.f32 0.0, %v3455
        %v3457 = vpop.f32.mrf.mxu0
        %v3458 = vpop.f32.mrf.mxu0
        %v3459 = vadd.f32 0.0, %v3458
        %v3460 = vpop.f32.mrf.mxu0
        %3461 = vmatprep.mubr.bf16.mxu0 %v3058
        %3462 = vmatmul.mubr.bf16.gmra.mxu0 %v3057
        %v3463 = vpop.f32.mrf.mxu0
        %v3464 = vadd.f32 0.0, %v3463
        %v3465 = vpop.f32.mrf.mxu0
        %v3466 = vpop.f32.mrf.mxu0
        %v3467 = vadd.f32 0.0, %v3466
        %v3468 = vpop.f32.mrf.mxu0
        %3469 = vmatprep.mubr.bf16.mxu0 %v3062
        %3470 = vmatmul.mubr.bf16.gmra.mxu0 %v3061
        %v3471 = vpop.f32.mrf.mxu0
        %v3472 = vadd.f32 0.0, %v3471
        %v3473 = vpop.f32.mrf.mxu0
        %v3474 = vpop.f32.mrf.mxu0
        %v3475 = vadd.f32 0.0, %v3474
        %v3476 = vpop.f32.mrf.mxu0
        %3477 = vmatprep.mubr.bf16.mxu0 %v3066
        %3478 = vmatmul.mubr.bf16.gmra.mxu0 %v3065
        %v3479 = vpop.f32.mrf.mxu0
        %v3480 = vadd.f32 0.0, %v3479
        %v3481 = vpop.f32.mrf.mxu0
        %v3482 = vpop.f32.mrf.mxu0
        %v3483 = vadd.f32 0.0, %v3482
        %v3484 = vpop.f32.mrf.mxu0
        %3485 = vdwg.mxu0
        %3486 = vmatprep.subr.bf16.mxu0 0
        %3487 = vmatpush1.bf16.msra.mxu0 %v3284
        %3488 = vmatprep.subr.bf16.mxu0 0
        %3489 = vmatpush1.bf16.msra.mxu0 %v3283
        %3490 = vmatprep.subr.bf16.mxu0 0
        %3491 = vmatpush1.bf16.msra.mxu0 %v3282
        %3492 = vmatprep.subr.bf16.mxu0 0
        %3493 = vmatpush1.bf16.msra.mxu0 %v3281
        %3494 = vmatprep.subr.bf16.mxu0 0
        %3495 = vmatpush1.bf16.msra.mxu0 %v3280
        %3496 = vmatprep.subr.bf16.mxu0 0
        %3497 = vmatpush1.bf16.msra.mxu0 %v3279
        %3498 = vmatprep.subr.bf16.mxu0 0
        %3499 = vmatpush1.bf16.msra.mxu0 %v3278
        %3500 = vmatprep.subr.bf16.mxu0 0
        %3501 = vmatpush1.bf16.msra.mxu0 %v3277
        %3502 = vmatprep.subr.bf16.mxu0 0
        %3503 = vmatpush2.bf16.msra.mxu0 %v3292
        %3504 = vmatprep.subr.bf16.mxu0 0
        %3505 = vmatpush2.bf16.msra.mxu0 %v3291
        %3506 = vmatprep.subr.bf16.mxu0 0
        %3507 = vmatpush2.bf16.msra.mxu0 %v3290
        %3508 = vmatprep.subr.bf16.mxu0 0
        %3509 = vmatpush2.bf16.msra.mxu0 %v3289
        %3510 = vmatprep.subr.bf16.mxu0 0
        %3511 = vmatpush2.bf16.msra.mxu0 %v3288
        %3512 = vmatprep.subr.bf16.mxu0 0
        %3513 = vmatpush2.bf16.msra.mxu0 %v3287
        %3514 = vmatprep.subr.bf16.mxu0 0
        %3515 = vmatpush2.bf16.msra.mxu0 %v3286
        %3516 = vmatprep.subr.bf16.mxu0 0
        %3517 = vmatpush2.bf16.msra.mxu0 %v3285
        %3518 = vmatprep.mubr.bf16.mxu0 %v3008
        %3519 = vmatmul.mubr.bf16.gmra.mxu0 %v3007
        %v3520 = vpop.f32.mrf.mxu0
        %v3521 = vadd.f32 %v3360, %v3520
        %v3522 = vpop.f32.mrf.mxu0
        %v3523 = vpop.f32.mrf.mxu0
        %v3524 = vadd.f32 %v3363, %v3523
        %v3525 = vpop.f32.mrf.mxu0
        %3526 = vmatprep.mubr.bf16.mxu0 %v3012
        %3527 = vmatmul.mubr.bf16.gmra.mxu0 %v3011
        %v3528 = vpop.f32.mrf.mxu0
        %v3529 = vadd.f32 %v3368, %v3528
        %v3530 = vpop.f32.mrf.mxu0
        %v3531 = vpop.f32.mrf.mxu0
        %v3532 = vadd.f32 %v3371, %v3531
        %v3533 = vpop.f32.mrf.mxu0
        %3534 = vmatprep.mubr.bf16.mxu0 %v3016
        %3535 = vmatmul.mubr.bf16.gmra.mxu0 %v3015
        %v3536 = vpop.f32.mrf.mxu0
        %v3537 = vadd.f32 %v3376, %v3536
        %v3538 = vpop.f32.mrf.mxu0
        %v3539 = vpop.f32.mrf.mxu0
        %v3540 = vadd.f32 %v3379, %v3539
        %v3541 = vpop.f32.mrf.mxu0
        %3542 = vmatprep.mubr.bf16.mxu0 %v3020
        %3543 = vmatmul.mubr.bf16.gmra.mxu0 %v3019
        %v3544 = vpop.f32.mrf.mxu0
        %v3545 = vadd.f32 %v3384, %v3544
        %v3546 = vpop.f32.mrf.mxu0
        %v3547 = vpop.f32.mrf.mxu0
        %v3548 = vadd.f32 %v3387, %v3547
        %v3549 = vpop.f32.mrf.mxu0
        %3550 = vmatprep.mubr.bf16.mxu0 %v3024
        %3551 = vmatmul.mubr.bf16.gmra.mxu0 %v3023
        %v3552 = vpop.f32.mrf.mxu0
        %v3553 = vadd.f32 %v3392, %v3552
        %v3554 = vpop.f32.mrf.mxu0
        %v3555 = vpop.f32.mrf.mxu0
        %v3556 = vadd.f32 %v3395, %v3555
        %v3557 = vpop.f32.mrf.mxu0
        %3558 = vmatprep.mubr.bf16.mxu0 %v3028
        %3559 = vmatmul.mubr.bf16.gmra.mxu0 %v3027
        %v3560 = vpop.f32.mrf.mxu0
        %v3561 = vadd.f32 %v3400, %v3560
        %v3562 = vpop.f32.mrf.mxu0
        %v3563 = vpop.f32.mrf.mxu0
        %v3564 = vadd.f32 %v3403, %v3563
        %v3565 = vpop.f32.mrf.mxu0
        %3566 = vmatprep.mubr.bf16.mxu0 %v3032
        %3567 = vmatmul.mubr.bf16.gmra.mxu0 %v3031
        %v3568 = vpop.f32.mrf.mxu0
        %v3569 = vadd.f32 %v3408, %v3568
        %v3570 = vpop.f32.mrf.mxu0
        %v3571 = vpop.f32.mrf.mxu0
        %v3572 = vadd.f32 %v3411, %v3571
        %v3573 = vpop.f32.mrf.mxu0
        %3574 = vmatprep.mubr.bf16.mxu0 %v3036
        %3575 = vmatmul.mubr.bf16.gmra.mxu0 %v3035
        %v3576 = vpop.f32.mrf.mxu0
        %v3577 = vadd.f32 %v3416, %v3576
        %v3578 = vpop.f32.mrf.mxu0
        %v3579 = vpop.f32.mrf.mxu0
        %v3580 = vadd.f32 %v3419, %v3579
        %v3581 = vpop.f32.mrf.mxu0
        %3582 = vmatprep.mubr.bf16.mxu0 %v3040
        %3583 = vmatmul.mubr.bf16.gmra.mxu0 %v3039
        %v3584 = vpop.f32.mrf.mxu0
        %v3585 = vadd.f32 %v3424, %v3584
        %v3586 = vpop.f32.mrf.mxu0
        %v3587 = vpop.f32.mrf.mxu0
        %v3588 = vadd.f32 %v3427, %v3587
        %v3589 = vpop.f32.mrf.mxu0
        %3590 = vmatprep.mubr.bf16.mxu0 %v3044
        %3591 = vmatmul.mubr.bf16.gmra.mxu0 %v3043
        %v3592 = vpop.f32.mrf.mxu0
        %v3593 = vadd.f32 %v3432, %v3592
        %v3594 = vpop.f32.mrf.mxu0
        %v3595 = vpop.f32.mrf.mxu0
        %v3596 = vadd.f32 %v3435, %v3595
        %v3597 = vpop.f32.mrf.mxu0
        %3598 = vmatprep.mubr.bf16.mxu0 %v3048
        %3599 = vmatmul.mubr.bf16.gmra.mxu0 %v3047
        %v3600 = vpop.f32.mrf.mxu0
        %v3601 = vadd.f32 %v3440, %v3600
        %v3602 = vpop.f32.mrf.mxu0
        %v3603 = vpop.f32.mrf.mxu0
        %v3604 = vadd.f32 %v3443, %v3603
        %v3605 = vpop.f32.mrf.mxu0
        %3606 = vmatprep.mubr.bf16.mxu0 %v3052
        %3607 = vmatmul.mubr.bf16.gmra.mxu0 %v3051
        %v3608 = vpop.f32.mrf.mxu0
        %v3609 = vadd.f32 %v3448, %v3608
        %v3610 = vpop.f32.mrf.mxu0
        %v3611 = vpop.f32.mrf.mxu0
        %v3612 = vadd.f32 %v3451, %v3611
        %v3613 = vpop.f32.mrf.mxu0
        %3614 = vmatprep.mubr.bf16.mxu0 %v3056
        %3615 = vmatmul.mubr.bf16.gmra.mxu0 %v3055
        %v3616 = vpop.f32.mrf.mxu0
        %v3617 = vadd.f32 %v3456, %v3616
        %v3618 = vpop.f32.mrf.mxu0
        %v3619 = vpop.f32.mrf.mxu0
        %v3620 = vadd.f32 %v3459, %v3619
        %v3621 = vpop.f32.mrf.mxu0
        %3622 = vmatprep.mubr.bf16.mxu0 %v3060
        %3623 = vmatmul.mubr.bf16.gmra.mxu0 %v3059
        %v3624 = vpop.f32.mrf.mxu0
        %v3625 = vadd.f32 %v3464, %v3624
        %v3626 = vpop.f32.mrf.mxu0
        %v3627 = vpop.f32.mrf.mxu0
        %v3628 = vadd.f32 %v3467, %v3627
        %v3629 = vpop.f32.mrf.mxu0
        %3630 = vmatprep.mubr.bf16.mxu0 %v3064
        %3631 = vmatmul.mubr.bf16.gmra.mxu0 %v3063
        %v3632 = vpop.f32.mrf.mxu0
        %v3633 = vadd.f32 %v3472, %v3632
        %v3634 = vpop.f32.mrf.mxu0
        %v3635 = vpop.f32.mrf.mxu0
        %v3636 = vadd.f32 %v3475, %v3635
        %v3637 = vpop.f32.mrf.mxu0
        %3638 = vmatprep.mubr.bf16.mxu0 %v3068
        %3639 = vmatmul.mubr.bf16.gmra.mxu0 %v3067
        %v3640 = vpop.f32.mrf.mxu0
        %v3641 = vadd.f32 %v3480, %v3640
        %v3642 = vpop.f32.mrf.mxu0
        %v3643 = vpop.f32.mrf.mxu0
        %v3644 = vadd.f32 %v3483, %v3643
        %v3645 = vpop.f32.mrf.mxu0
        %3646 = vdwg.mxu0
        %v3647 = vadd.f32 %v2440, %v3521
        %v3648 = vadd.f32 %v2443, %v3524
        %v3649 = vadd.f32 %v2448, %v3529
        %v3650 = vadd.f32 %v2451, %v3532
        %v3651 = vadd.f32 %v2456, %v3537
        %v3652 = vadd.f32 %v2459, %v3540
        %v3653 = vadd.f32 %v2464, %v3545
        %v3654 = vadd.f32 %v2467, %v3548
        %v3655 = vadd.f32 %v2472, %v3553
        %v3656 = vadd.f32 %v2475, %v3556
        %v3657 = vadd.f32 %v2480, %v3561
        %v3658 = vadd.f32 %v2483, %v3564
        %v3659 = vadd.f32 %v2488, %v3569
        %v3660 = vadd.f32 %v2491, %v3572
        %v3661 = vadd.f32 %v2496, %v3577
        %v3662 = vadd.f32 %v2499, %v3580
        %v3663 = vadd.f32 %v2504, %v3585
        %v3664 = vadd.f32 %v2507, %v3588
        %v3665 = vadd.f32 %v2512, %v3593
        %v3666 = vadd.f32 %v2515, %v3596
        %v3667 = vadd.f32 %v2520, %v3601
        %v3668 = vadd.f32 %v2523, %v3604
        %v3669 = vadd.f32 %v2528, %v3609
        %v3670 = vadd.f32 %v2531, %v3612
        %v3671 = vadd.f32 %v2536, %v3617
        %v3672 = vadd.f32 %v2539, %v3620
        %v3673 = vadd.f32 %v2544, %v3625
        %v3674 = vadd.f32 %v2547, %v3628
        %v3675 = vadd.f32 %v2552, %v3633
        %v3676 = vadd.f32 %v2555, %v3636
        %v3677 = vadd.f32 %v2560, %v3641
        %v3678 = vadd.f32 %v2563, %v3644
        %v3679 = vld [vmem:[%s1 + $0x18] sm:$0xff]
        %v3680 = vld [vmem:[%s2 + $0xc] sm:$0xf]
        %v3682 = vlaneseq
        %v3683 = vshrl.u32 %v3682, 7
        %v3684 = vsub.s32 0, %v3683
        %v3685 = vrot.slane %v3680, %v3684
        %v3686 = vlaneseq
        %v3687 = vshrl.u32 %v3686, 7
        %v3688 = vsub.s32 1, %v3687
        %v3689 = vrot.slane %v3680, %v3688
        %v3690 = vlaneseq
        %v3691 = vshrl.u32 %v3690, 7
        %v3692 = vsub.s32 2, %v3691
        %v3693 = vrot.slane %v3680, %v3692
        %v3694 = vlaneseq
        %v3695 = vshrl.u32 %v3694, 7
        %v3696 = vsub.s32 3, %v3695
        %v3697 = vrot.slane %v3680, %v3696
        %v3703 = vcombine.high %v3679, %v3679
        %v3705 = vunpack.c.l.s4 1983009808
        %v3706 = vunpack.c.0.s8 %v3705
        %v3707 = vlaneseq
        %v3708 = vshrl.u32 %v3707, 7
        %v3709 = vsub.s32 %v3706, %v3708
        %v3710 = vrot.slane %v3679, %v3709
        %v3712 = vunpack.c.l.s4 1983009808
        %v3713 = vunpack.c.0.s8 %v3712
        %v3714 = vlaneseq
        %v3715 = vshrl.u32 %v3714, 7
        %v3716 = vsub.s32 %v3713, %v3715
        %v3717 = vrot.slane %v3703, %v3716
        %v3718 = vcombine.high %v3710, %v3710
        %v3719 = vcombine.high %v3717, %v3717
        %v3721 = vsel %vm444, %v3710, 0
        %v3724 = vsel %vm444, %v3718, 0
        %v3727 = vsel %vm444, %v3717, 0
        %v3730 = vsel %vm444, %v3719, 0
        %3732 = vmatprep.subr.bf16.mxu0 0
        %3733 = vmatpush1.bf16.msra.mxu0 0
        %3734 = vmatprep.subr.bf16.mxu0 0
        %3735 = vmatpush1.bf16.msra.mxu0 0
        %3736 = vmatprep.subr.bf16.mxu0 0
        %3737 = vmatpush1.bf16.msra.mxu0 0
        %3738 = vmatprep.subr.bf16.mxu0 0
        %3739 = vmatpush1.bf16.msra.mxu0 0
        %3740 = vmatprep.subr.bf16.mxu0 0
        %3741 = vmatpush1.bf16.msra.mxu0 0
        %3742 = vmatprep.subr.bf16.mxu0 0
        %3743 = vmatpush1.bf16.msra.mxu0 0
        %3744 = vmatprep.subr.bf16.mxu0 0
        %3745 = vmatpush1.bf16.msra.mxu0 0
        %3746 = vmatprep.subr.bf16.mxu0 %v3724
        %3747 = vmatpush1.bf16.msra.mxu0 %v3721
        %3748 = vmatprep.subr.bf16.mxu0 0
        %3749 = vmatpush2.bf16.msra.mxu0 0
        %3750 = vmatprep.subr.bf16.mxu0 0
        %3751 = vmatpush2.bf16.msra.mxu0 0
        %3752 = vmatprep.subr.bf16.mxu0 0
        %3753 = vmatpush2.bf16.msra.mxu0 0
        %3754 = vmatprep.subr.bf16.mxu0 0
        %3755 = vmatpush2.bf16.msra.mxu0 0
        %3756 = vmatprep.subr.bf16.mxu0 0
        %3757 = vmatpush2.bf16.msra.mxu0 0
        %3758 = vmatprep.subr.bf16.mxu0 0
        %3759 = vmatpush2.bf16.msra.mxu0 0
        %3760 = vmatprep.subr.bf16.mxu0 0
        %3761 = vmatpush2.bf16.msra.mxu0 0
        %3762 = vmatprep.subr.bf16.mxu0 0
        %3763 = vmatpush2.bf16.msra.mxu0 0
        %3764 = vmatprep.mubr.bf16.mxu0 0
        %3765 = vmatmul.mubr.bf16.gmra.mxu0 %v397
        %v3766 = vpop.f32.mrf.mxu0
        %v3767 = vadd.f32 %v3685, %v3766
        %v3768 = vpop.f32.mrf.mxu0
        %v3769 = vadd.f32 %v3689, %v3768
        %v3770 = vpop.f32.mrf.mxu0
        %v3771 = vadd.f32 %v3685, %v3770
        %v3772 = vpop.f32.mrf.mxu0
        %v3773 = vadd.f32 %v3689, %v3772
        %3774 = vmatprep.mubr.bf16.mxu0 0
        %3775 = vmatmul.mubr.bf16.gmra.mxu0 %v400
        %v3776 = vpop.f32.mrf.mxu0
        %v3777 = vadd.f32 %v3685, %v3776
        %v3778 = vpop.f32.mrf.mxu0
        %v3779 = vadd.f32 %v3689, %v3778
        %v3780 = vpop.f32.mrf.mxu0
        %v3781 = vadd.f32 %v3685, %v3780
        %v3782 = vpop.f32.mrf.mxu0
        %v3783 = vadd.f32 %v3689, %v3782
        %3784 = vmatprep.mubr.bf16.mxu0 0
        %3785 = vmatmul.mubr.bf16.gmra.mxu0 %v403
        %v3786 = vpop.f32.mrf.mxu0
        %v3787 = vadd.f32 %v3685, %v3786
        %v3788 = vpop.f32.mrf.mxu0
        %v3789 = vadd.f32 %v3689, %v3788
        %v3790 = vpop.f32.mrf.mxu0
        %v3791 = vadd.f32 %v3685, %v3790
        %v3792 = vpop.f32.mrf.mxu0
        %v3793 = vadd.f32 %v3689, %v3792
        %3794 = vmatprep.mubr.bf16.mxu0 0
        %3795 = vmatmul.mubr.bf16.gmra.mxu0 %v406
        %v3796 = vpop.f32.mrf.mxu0
        %v3797 = vadd.f32 %v3685, %v3796
        %v3798 = vpop.f32.mrf.mxu0
        %v3799 = vadd.f32 %v3689, %v3798
        %v3800 = vpop.f32.mrf.mxu0
        %v3801 = vadd.f32 %v3685, %v3800
        %v3802 = vpop.f32.mrf.mxu0
        %v3803 = vadd.f32 %v3689, %v3802
        %3804 = vmatprep.mubr.bf16.mxu0 0
        %3805 = vmatmul.mubr.bf16.gmra.mxu0 %v409
        %v3806 = vpop.f32.mrf.mxu0
        %v3807 = vadd.f32 %v3685, %v3806
        %v3808 = vpop.f32.mrf.mxu0
        %v3809 = vadd.f32 %v3689, %v3808
        %v3810 = vpop.f32.mrf.mxu0
        %v3811 = vadd.f32 %v3685, %v3810
        %v3812 = vpop.f32.mrf.mxu0
        %v3813 = vadd.f32 %v3689, %v3812
        %3814 = vmatprep.mubr.bf16.mxu0 0
        %3815 = vmatmul.mubr.bf16.gmra.mxu0 %v412
        %v3816 = vpop.f32.mrf.mxu0
        %v3817 = vadd.f32 %v3685, %v3816
        %v3818 = vpop.f32.mrf.mxu0
        %v3819 = vadd.f32 %v3689, %v3818
        %v3820 = vpop.f32.mrf.mxu0
        %v3821 = vadd.f32 %v3685, %v3820
        %v3822 = vpop.f32.mrf.mxu0
        %v3823 = vadd.f32 %v3689, %v3822
        %3824 = vmatprep.mubr.bf16.mxu0 0
        %3825 = vmatmul.mubr.bf16.gmra.mxu0 %v415
        %v3826 = vpop.f32.mrf.mxu0
        %v3827 = vadd.f32 %v3685, %v3826
        %v3828 = vpop.f32.mrf.mxu0
        %v3829 = vadd.f32 %v3689, %v3828
        %v3830 = vpop.f32.mrf.mxu0
        %v3831 = vadd.f32 %v3685, %v3830
        %v3832 = vpop.f32.mrf.mxu0
        %v3833 = vadd.f32 %v3689, %v3832
        %3834 = vmatprep.mubr.bf16.mxu0 0
        %3835 = vmatmul.mubr.bf16.gmra.mxu0 %v418
        %v3836 = vpop.f32.mrf.mxu0
        %v3837 = vadd.f32 %v3685, %v3836
        %v3838 = vpop.f32.mrf.mxu0
        %v3839 = vadd.f32 %v3689, %v3838
        %v3840 = vpop.f32.mrf.mxu0
        %v3841 = vadd.f32 %v3685, %v3840
        %v3842 = vpop.f32.mrf.mxu0
        %v3843 = vadd.f32 %v3689, %v3842
        %3844 = vmatprep.mubr.bf16.mxu0 0
        %3845 = vmatmul.mubr.bf16.gmra.mxu0 %v421
        %v3846 = vpop.f32.mrf.mxu0
        %v3847 = vadd.f32 %v3685, %v3846
        %v3848 = vpop.f32.mrf.mxu0
        %v3849 = vadd.f32 %v3689, %v3848
        %v3850 = vpop.f32.mrf.mxu0
        %v3851 = vadd.f32 %v3685, %v3850
        %v3852 = vpop.f32.mrf.mxu0
        %v3853 = vadd.f32 %v3689, %v3852
        %3854 = vmatprep.mubr.bf16.mxu0 0
        %3855 = vmatmul.mubr.bf16.gmra.mxu0 %v424
        %v3856 = vpop.f32.mrf.mxu0
        %v3857 = vadd.f32 %v3685, %v3856
        %v3858 = vpop.f32.mrf.mxu0
        %v3859 = vadd.f32 %v3689, %v3858
        %v3860 = vpop.f32.mrf.mxu0
        %v3861 = vadd.f32 %v3685, %v3860
        %v3862 = vpop.f32.mrf.mxu0
        %v3863 = vadd.f32 %v3689, %v3862
        %3864 = vmatprep.mubr.bf16.mxu0 0
        %3865 = vmatmul.mubr.bf16.gmra.mxu0 %v427
        %v3866 = vpop.f32.mrf.mxu0
        %v3867 = vadd.f32 %v3685, %v3866
        %v3868 = vpop.f32.mrf.mxu0
        %v3869 = vadd.f32 %v3689, %v3868
        %v3870 = vpop.f32.mrf.mxu0
        %v3871 = vadd.f32 %v3685, %v3870
        %v3872 = vpop.f32.mrf.mxu0
        %v3873 = vadd.f32 %v3689, %v3872
        %3874 = vmatprep.mubr.bf16.mxu0 0
        %3875 = vmatmul.mubr.bf16.gmra.mxu0 %v430
        %v3876 = vpop.f32.mrf.mxu0
        %v3877 = vadd.f32 %v3685, %v3876
        %v3878 = vpop.f32.mrf.mxu0
        %v3879 = vadd.f32 %v3689, %v3878
        %v3880 = vpop.f32.mrf.mxu0
        %v3881 = vadd.f32 %v3685, %v3880
        %v3882 = vpop.f32.mrf.mxu0
        %v3883 = vadd.f32 %v3689, %v3882
        %3884 = vmatprep.mubr.bf16.mxu0 0
        %3885 = vmatmul.mubr.bf16.gmra.mxu0 %v433
        %v3886 = vpop.f32.mrf.mxu0
        %v3887 = vadd.f32 %v3685, %v3886
        %v3888 = vpop.f32.mrf.mxu0
        %v3889 = vadd.f32 %v3689, %v3888
        %v3890 = vpop.f32.mrf.mxu0
        %v3891 = vadd.f32 %v3685, %v3890
        %v3892 = vpop.f32.mrf.mxu0
        %v3893 = vadd.f32 %v3689, %v3892
        %3894 = vmatprep.mubr.bf16.mxu0 0
        %3895 = vmatmul.mubr.bf16.gmra.mxu0 %v436
        %v3896 = vpop.f32.mrf.mxu0
        %v3897 = vadd.f32 %v3685, %v3896
        %v3898 = vpop.f32.mrf.mxu0
        %v3899 = vadd.f32 %v3689, %v3898
        %v3900 = vpop.f32.mrf.mxu0
        %v3901 = vadd.f32 %v3685, %v3900
        %v3902 = vpop.f32.mrf.mxu0
        %v3903 = vadd.f32 %v3689, %v3902
        %3904 = vmatprep.mubr.bf16.mxu0 0
        %3905 = vmatmul.mubr.bf16.gmra.mxu0 %v439
        %v3906 = vpop.f32.mrf.mxu0
        %v3907 = vadd.f32 %v3685, %v3906
        %v3908 = vpop.f32.mrf.mxu0
        %v3909 = vadd.f32 %v3689, %v3908
        %v3910 = vpop.f32.mrf.mxu0
        %v3911 = vadd.f32 %v3685, %v3910
        %v3912 = vpop.f32.mrf.mxu0
        %v3913 = vadd.f32 %v3689, %v3912
        %3914 = vmatprep.mubr.bf16.mxu0 0
        %3915 = vmatmul.mubr.bf16.gmra.mxu0 %v442
        %v3916 = vpop.f32.mrf.mxu0
        %v3917 = vadd.f32 %v3685, %v3916
        %v3918 = vpop.f32.mrf.mxu0
        %v3919 = vadd.f32 %v3689, %v3918
        %v3920 = vpop.f32.mrf.mxu0
        %v3921 = vadd.f32 %v3685, %v3920
        %v3922 = vpop.f32.mrf.mxu0
        %v3923 = vadd.f32 %v3689, %v3922
        %3924 = vdwg.mxu0
        %3925 = vmatprep.subr.bf16.mxu0 0
        %3926 = vmatpush1.bf16.msra.mxu0 0
        %3927 = vmatprep.subr.bf16.mxu0 0
        %3928 = vmatpush1.bf16.msra.mxu0 0
        %3929 = vmatprep.subr.bf16.mxu0 0
        %3930 = vmatpush1.bf16.msra.mxu0 0
        %3931 = vmatprep.subr.bf16.mxu0 0
        %3932 = vmatpush1.bf16.msra.mxu0 0
        %3933 = vmatprep.subr.bf16.mxu0 0
        %3934 = vmatpush1.bf16.msra.mxu0 0
        %3935 = vmatprep.subr.bf16.mxu0 0
        %3936 = vmatpush1.bf16.msra.mxu0 0
        %3937 = vmatprep.subr.bf16.mxu0 0
        %3938 = vmatpush1.bf16.msra.mxu0 0
        %3939 = vmatprep.subr.bf16.mxu0 %v3730
        %3940 = vmatpush1.bf16.msra.mxu0 %v3727
        %3941 = vmatprep.subr.bf16.mxu0 0
        %3942 = vmatpush2.bf16.msra.mxu0 0
        %3943 = vmatprep.subr.bf16.mxu0 0
        %3944 = vmatpush2.bf16.msra.mxu0 0
        %3945 = vmatprep.subr.bf16.mxu0 0
        %3946 = vmatpush2.bf16.msra.mxu0 0
        %3947 = vmatprep.subr.bf16.mxu0 0
        %3948 = vmatpush2.bf16.msra.mxu0 0
        %3949 = vmatprep.subr.bf16.mxu0 0
        %3950 = vmatpush2.bf16.msra.mxu0 0
        %3951 = vmatprep.subr.bf16.mxu0 0
        %3952 = vmatpush2.bf16.msra.mxu0 0
        %3953 = vmatprep.subr.bf16.mxu0 0
        %3954 = vmatpush2.bf16.msra.mxu0 0
        %3955 = vmatprep.subr.bf16.mxu0 0
        %3956 = vmatpush2.bf16.msra.mxu0 0
        %3957 = vmatprep.mubr.bf16.mxu0 0
        %3958 = vmatmul.mubr.bf16.gmra.mxu0 %v397
        %v3959 = vpop.f32.mrf.mxu0
        %v3960 = vadd.f32 %v3693, %v3959
        %v3961 = vpop.f32.mrf.mxu0
        %v3962 = vadd.f32 %v3697, %v3961
        %v3963 = vpop.f32.mrf.mxu0
        %v3964 = vadd.f32 %v3693, %v3963
        %v3965 = vpop.f32.mrf.mxu0
        %v3966 = vadd.f32 %v3697, %v3965
        %3967 = vmatprep.mubr.bf16.mxu0 0
        %3968 = vmatmul.mubr.bf16.gmra.mxu0 %v400
        %v3969 = vpop.f32.mrf.mxu0
        %v3970 = vadd.f32 %v3693, %v3969
        %v3971 = vpop.f32.mrf.mxu0
        %v3972 = vadd.f32 %v3697, %v3971
        %v3973 = vpop.f32.mrf.mxu0
        %v3974 = vadd.f32 %v3693, %v3973
        %v3975 = vpop.f32.mrf.mxu0
        %v3976 = vadd.f32 %v3697, %v3975
        %3977 = vmatprep.mubr.bf16.mxu0 0
        %3978 = vmatmul.mubr.bf16.gmra.mxu0 %v403
        %v3979 = vpop.f32.mrf.mxu0
        %v3980 = vadd.f32 %v3693, %v3979
        %v3981 = vpop.f32.mrf.mxu0
        %v3982 = vadd.f32 %v3697, %v3981
        %v3983 = vpop.f32.mrf.mxu0
        %v3984 = vadd.f32 %v3693, %v3983
        %v3985 = vpop.f32.mrf.mxu0
        %v3986 = vadd.f32 %v3697, %v3985
        %3987 = vmatprep.mubr.bf16.mxu0 0
        %3988 = vmatmul.mubr.bf16.gmra.mxu0 %v406
        %v3989 = vpop.f32.mrf.mxu0
        %v3990 = vadd.f32 %v3693, %v3989
        %v3991 = vpop.f32.mrf.mxu0
        %v3992 = vadd.f32 %v3697, %v3991
        %v3993 = vpop.f32.mrf.mxu0
        %v3994 = vadd.f32 %v3693, %v3993
        %v3995 = vpop.f32.mrf.mxu0
        %v3996 = vadd.f32 %v3697, %v3995
        %3997 = vmatprep.mubr.bf16.mxu0 0
        %3998 = vmatmul.mubr.bf16.gmra.mxu0 %v409
        %v3999 = vpop.f32.mrf.mxu0
        %v4000 = vadd.f32 %v3693, %v3999
        %v4001 = vpop.f32.mrf.mxu0
        %v4002 = vadd.f32 %v3697, %v4001
        %v4003 = vpop.f32.mrf.mxu0
        %v4004 = vadd.f32 %v3693, %v4003
        %v4005 = vpop.f32.mrf.mxu0
        %v4006 = vadd.f32 %v3697, %v4005
        %4007 = vmatprep.mubr.bf16.mxu0 0
        %4008 = vmatmul.mubr.bf16.gmra.mxu0 %v412
        %v4009 = vpop.f32.mrf.mxu0
        %v4010 = vadd.f32 %v3693, %v4009
        %v4011 = vpop.f32.mrf.mxu0
        %v4012 = vadd.f32 %v3697, %v4011
        %v4013 = vpop.f32.mrf.mxu0
        %v4014 = vadd.f32 %v3693, %v4013
        %v4015 = vpop.f32.mrf.mxu0
        %v4016 = vadd.f32 %v3697, %v4015
        %4017 = vmatprep.mubr.bf16.mxu0 0
        %4018 = vmatmul.mubr.bf16.gmra.mxu0 %v415
        %v4019 = vpop.f32.mrf.mxu0
        %v4020 = vadd.f32 %v3693, %v4019
        %v4021 = vpop.f32.mrf.mxu0
        %v4022 = vadd.f32 %v3697, %v4021
        %v4023 = vpop.f32.mrf.mxu0
        %v4024 = vadd.f32 %v3693, %v4023
        %v4025 = vpop.f32.mrf.mxu0
        %v4026 = vadd.f32 %v3697, %v4025
        %4027 = vmatprep.mubr.bf16.mxu0 0
        %4028 = vmatmul.mubr.bf16.gmra.mxu0 %v418
        %v4029 = vpop.f32.mrf.mxu0
        %v4030 = vadd.f32 %v3693, %v4029
        %v4031 = vpop.f32.mrf.mxu0
        %v4032 = vadd.f32 %v3697, %v4031
        %v4033 = vpop.f32.mrf.mxu0
        %v4034 = vadd.f32 %v3693, %v4033
        %v4035 = vpop.f32.mrf.mxu0
        %v4036 = vadd.f32 %v3697, %v4035
        %4037 = vmatprep.mubr.bf16.mxu0 0
        %4038 = vmatmul.mubr.bf16.gmra.mxu0 %v421
        %v4039 = vpop.f32.mrf.mxu0
        %v4040 = vadd.f32 %v3693, %v4039
        %v4041 = vpop.f32.mrf.mxu0
        %v4042 = vadd.f32 %v3697, %v4041
        %v4043 = vpop.f32.mrf.mxu0
        %v4044 = vadd.f32 %v3693, %v4043
        %v4045 = vpop.f32.mrf.mxu0
        %v4046 = vadd.f32 %v3697, %v4045
        %4047 = vmatprep.mubr.bf16.mxu0 0
        %4048 = vmatmul.mubr.bf16.gmra.mxu0 %v424
        %v4049 = vpop.f32.mrf.mxu0
        %v4050 = vadd.f32 %v3693, %v4049
        %v4051 = vpop.f32.mrf.mxu0
        %v4052 = vadd.f32 %v3697, %v4051
        %v4053 = vpop.f32.mrf.mxu0
        %v4054 = vadd.f32 %v3693, %v4053
        %v4055 = vpop.f32.mrf.mxu0
        %v4056 = vadd.f32 %v3697, %v4055
        %4057 = vmatprep.mubr.bf16.mxu0 0
        %4058 = vmatmul.mubr.bf16.gmra.mxu0 %v427
        %v4059 = vpop.f32.mrf.mxu0
        %v4060 = vadd.f32 %v3693, %v4059
        %v4061 = vpop.f32.mrf.mxu0
        %v4062 = vadd.f32 %v3697, %v4061
        %v4063 = vpop.f32.mrf.mxu0
        %v4064 = vadd.f32 %v3693, %v4063
        %v4065 = vpop.f32.mrf.mxu0
        %v4066 = vadd.f32 %v3697, %v4065
        %4067 = vmatprep.mubr.bf16.mxu0 0
        %4068 = vmatmul.mubr.bf16.gmra.mxu0 %v430
        %v4069 = vpop.f32.mrf.mxu0
        %v4070 = vadd.f32 %v3693, %v4069
        %v4071 = vpop.f32.mrf.mxu0
        %v4072 = vadd.f32 %v3697, %v4071
        %v4073 = vpop.f32.mrf.mxu0
        %v4074 = vadd.f32 %v3693, %v4073
        %v4075 = vpop.f32.mrf.mxu0
        %v4076 = vadd.f32 %v3697, %v4075
        %4077 = vmatprep.mubr.bf16.mxu0 0
        %4078 = vmatmul.mubr.bf16.gmra.mxu0 %v433
        %v4079 = vpop.f32.mrf.mxu0
        %v4080 = vadd.f32 %v3693, %v4079
        %v4081 = vpop.f32.mrf.mxu0
        %v4082 = vadd.f32 %v3697, %v4081
        %v4083 = vpop.f32.mrf.mxu0
        %v4084 = vadd.f32 %v3693, %v4083
        %v4085 = vpop.f32.mrf.mxu0
        %v4086 = vadd.f32 %v3697, %v4085
        %4087 = vmatprep.mubr.bf16.mxu0 0
        %4088 = vmatmul.mubr.bf16.gmra.mxu0 %v436
        %v4089 = vpop.f32.mrf.mxu0
        %v4090 = vadd.f32 %v3693, %v4089
        %v4091 = vpop.f32.mrf.mxu0
        %v4092 = vadd.f32 %v3697, %v4091
        %v4093 = vpop.f32.mrf.mxu0
        %v4094 = vadd.f32 %v3693, %v4093
        %v4095 = vpop.f32.mrf.mxu0
        %v4096 = vadd.f32 %v3697, %v4095
        %4097 = vmatprep.mubr.bf16.mxu0 0
        %4098 = vmatmul.mubr.bf16.gmra.mxu0 %v439
        %v4099 = vpop.f32.mrf.mxu0
        %v4100 = vadd.f32 %v3693, %v4099
        %v4101 = vpop.f32.mrf.mxu0
        %v4102 = vadd.f32 %v3697, %v4101
        %v4103 = vpop.f32.mrf.mxu0
        %v4104 = vadd.f32 %v3693, %v4103
        %v4105 = vpop.f32.mrf.mxu0
        %v4106 = vadd.f32 %v3697, %v4105
        %4107 = vmatprep.mubr.bf16.mxu0 0
        %4108 = vmatmul.mubr.bf16.gmra.mxu0 %v442
        %v4109 = vpop.f32.mrf.mxu0
        %v4110 = vadd.f32 %v3693, %v4109
        %v4111 = vpop.f32.mrf.mxu0
        %v4112 = vadd.f32 %v3697, %v4111
        %v4113 = vpop.f32.mrf.mxu0
        %v4114 = vadd.f32 %v3693, %v4113
        %v4115 = vpop.f32.mrf.mxu0
        %v4116 = vadd.f32 %v3697, %v4115
        %4117 = vdwg.mxu0
        %v4118 = vpack.c.bf16 %v3771, %v3767
        %v4119 = vpack.c.bf16 %v3773, %v3769
        %v4120 = vpack.c.bf16 %v3964, %v3960
        %v4121 = vpack.c.bf16 %v3966, %v3962
        %v4122 = vpack.c.bf16 %v3781, %v3777
        %v4123 = vpack.c.bf16 %v3783, %v3779
        %v4124 = vpack.c.bf16 %v3974, %v3970
        %v4125 = vpack.c.bf16 %v3976, %v3972
        %v4126 = vpack.c.bf16 %v3791, %v3787
        %v4127 = vpack.c.bf16 %v3793, %v3789
        %v4128 = vpack.c.bf16 %v3984, %v3980
        %v4129 = vpack.c.bf16 %v3986, %v3982
        %v4130 = vpack.c.bf16 %v3801, %v3797
        %v4131 = vpack.c.bf16 %v3803, %v3799
        %v4132 = vpack.c.bf16 %v3994, %v3990
        %v4133 = vpack.c.bf16 %v3996, %v3992
        %v4134 = vpack.c.bf16 %v3811, %v3807
        %v4135 = vpack.c.bf16 %v3813, %v3809
        %v4136 = vpack.c.bf16 %v4004, %v4000
        %v4137 = vpack.c.bf16 %v4006, %v4002
        %v4138 = vpack.c.bf16 %v3821, %v3817
        %v4139 = vpack.c.bf16 %v3823, %v3819
        %v4140 = vpack.c.bf16 %v4014, %v4010
        %v4141 = vpack.c.bf16 %v4016, %v4012
        %v4142 = vpack.c.bf16 %v3831, %v3827
        %v4143 = vpack.c.bf16 %v3833, %v3829
        %v4144 = vpack.c.bf16 %v4024, %v4020
        %v4145 = vpack.c.bf16 %v4026, %v4022
        %v4146 = vpack.c.bf16 %v3841, %v3837
        %v4147 = vpack.c.bf16 %v3843, %v3839
        %v4148 = vpack.c.bf16 %v4034, %v4030
        %v4149 = vpack.c.bf16 %v4036, %v4032
        %v4150 = vpack.c.bf16 %v3851, %v3847
        %v4151 = vpack.c.bf16 %v3853, %v3849
        %v4152 = vpack.c.bf16 %v4044, %v4040
        %v4153 = vpack.c.bf16 %v4046, %v4042
        %v4154 = vpack.c.bf16 %v3861, %v3857
        %v4155 = vpack.c.bf16 %v3863, %v3859
        %v4156 = vpack.c.bf16 %v4054, %v4050
        %v4157 = vpack.c.bf16 %v4056, %v4052
        %v4158 = vpack.c.bf16 %v3871, %v3867
        %v4159 = vpack.c.bf16 %v3873, %v3869
        %v4160 = vpack.c.bf16 %v4064, %v4060
        %v4161 = vpack.c.bf16 %v4066, %v4062
        %v4162 = vpack.c.bf16 %v3881, %v3877
        %v4163 = vpack.c.bf16 %v3883, %v3879
        %v4164 = vpack.c.bf16 %v4074, %v4070
        %v4165 = vpack.c.bf16 %v4076, %v4072
        %v4166 = vpack.c.bf16 %v3891, %v3887
        %v4167 = vpack.c.bf16 %v3893, %v3889
        %v4168 = vpack.c.bf16 %v4084, %v4080
        %v4169 = vpack.c.bf16 %v4086, %v4082
        %v4170 = vpack.c.bf16 %v3901, %v3897
        %v4171 = vpack.c.bf16 %v3903, %v3899
        %v4172 = vpack.c.bf16 %v4094, %v4090
        %v4173 = vpack.c.bf16 %v4096, %v4092
        %v4174 = vpack.c.bf16 %v3911, %v3907
        %v4175 = vpack.c.bf16 %v3913, %v3909
        %v4176 = vpack.c.bf16 %v4104, %v4100
        %v4177 = vpack.c.bf16 %v4106, %v4102
        %v4178 = vpack.c.bf16 %v3921, %v3917
        %v4179 = vpack.c.bf16 %v3923, %v3919
        %v4180 = vpack.c.bf16 %v4114, %v4110
        %v4181 = vpack.c.bf16 %v4116, %v4112
        %v4182 = vld [vmem:[#allocation2 + $0x300] sm:$0xf]
        %v4183 = vld [vmem:[#allocation2 + $0x304] sm:$0xf]
        %v4184 = vld [vmem:[#allocation2 + $0x308] sm:$0xf]
        %v4185 = vld [vmem:[#allocation2 + $0x30c] sm:$0xf]
        %v4186 = vld [vmem:[#allocation2 + $0x310] sm:$0xf]
        %v4187 = vld [vmem:[#allocation2 + $0x314] sm:$0xf]
        %v4188 = vld [vmem:[#allocation2 + $0x318] sm:$0xf]
        %v4189 = vld [vmem:[#allocation2 + $0x31c] sm:$0xf]
        %v4190 = vld [vmem:[#allocation2 + $0x320] sm:$0xf]
        %v4191 = vld [vmem:[#allocation2 + $0x324] sm:$0xf]
        %v4192 = vld [vmem:[#allocation2 + $0x328] sm:$0xf]
        %v4193 = vld [vmem:[#allocation2 + $0x32c] sm:$0xf]
        %v4194 = vld [vmem:[#allocation2 + $0x330] sm:$0xf]
        %v4195 = vld [vmem:[#allocation2 + $0x334] sm:$0xf]
        %v4196 = vld [vmem:[#allocation2 + $0x338] sm:$0xf]
        %v4197 = vld [vmem:[#allocation2 + $0x33c] sm:$0xf]
        %v4198 = vld [vmem:[#allocation2 + $0x340] sm:$0xf]
        %v4199 = vld [vmem:[#allocation2 + $0x344] sm:$0xf]
        %v4200 = vld [vmem:[#allocation2 + $0x348] sm:$0xf]
        %v4201 = vld [vmem:[#allocation2 + $0x34c] sm:$0xf]
        %v4202 = vld [vmem:[#allocation2 + $0x350] sm:$0xf]
        %v4203 = vld [vmem:[#allocation2 + $0x354] sm:$0xf]
        %v4204 = vld [vmem:[#allocation2 + $0x358] sm:$0xf]
        %v4205 = vld [vmem:[#allocation2 + $0x35c] sm:$0xf]
        %v4206 = vld [vmem:[#allocation2 + $0x360] sm:$0xf]
        %v4207 = vld [vmem:[#allocation2 + $0x364] sm:$0xf]
        %v4208 = vld [vmem:[#allocation2 + $0x368] sm:$0xf]
        %v4209 = vld [vmem:[#allocation2 + $0x36c] sm:$0xf]
        %v4210 = vld [vmem:[#allocation2 + $0x370] sm:$0xf]
        %v4211 = vld [vmem:[#allocation2 + $0x374] sm:$0xf]
        %v4212 = vld [vmem:[#allocation2 + $0x378] sm:$0xf]
        %v4213 = vld [vmem:[#allocation2 + $0x37c] sm:$0xf]
        %v4214 = vld [vmem:[#allocation2 + $0x380] sm:$0xf]
        %v4215 = vld [vmem:[#allocation2 + $0x384] sm:$0xf]
        %v4216 = vld [vmem:[#allocation2 + $0x388] sm:$0xf]
        %v4217 = vld [vmem:[#allocation2 + $0x38c] sm:$0xf]
        %v4218 = vld [vmem:[#allocation2 + $0x390] sm:$0xf]
        %v4219 = vld [vmem:[#allocation2 + $0x394] sm:$0xf]
        %v4220 = vld [vmem:[#allocation2 + $0x398] sm:$0xf]
        %v4221 = vld [vmem:[#allocation2 + $0x39c] sm:$0xf]
        %v4222 = vld [vmem:[#allocation2 + $0x3a0] sm:$0xf]
        %v4223 = vld [vmem:[#allocation2 + $0x3a4] sm:$0xf]
        %v4224 = vld [vmem:[#allocation2 + $0x3a8] sm:$0xf]
        %v4225 = vld [vmem:[#allocation2 + $0x3ac] sm:$0xf]
        %v4226 = vld [vmem:[#allocation2 + $0x3b0] sm:$0xf]
        %v4227 = vld [vmem:[#allocation2 + $0x3b4] sm:$0xf]
        %v4228 = vld [vmem:[#allocation2 + $0x3b8] sm:$0xf]
        %v4229 = vld [vmem:[#allocation2 + $0x3bc] sm:$0xf]
        %v4230 = vld [vmem:[#allocation2 + $0x3c0] sm:$0xf]
        %v4231 = vld [vmem:[#allocation2 + $0x3c4] sm:$0xf]
        %v4232 = vld [vmem:[#allocation2 + $0x3c8] sm:$0xf]
        %v4233 = vld [vmem:[#allocation2 + $0x3cc] sm:$0xf]
        %v4234 = vld [vmem:[#allocation2 + $0x3d0] sm:$0xf]
        %v4235 = vld [vmem:[#allocation2 + $0x3d4] sm:$0xf]
        %v4236 = vld [vmem:[#allocation2 + $0x3d8] sm:$0xf]
        %v4237 = vld [vmem:[#allocation2 + $0x3dc] sm:$0xf]
        %v4238 = vld [vmem:[#allocation2 + $0x3e0] sm:$0xf]
        %v4239 = vld [vmem:[#allocation2 + $0x3e4] sm:$0xf]
        %v4240 = vld [vmem:[#allocation2 + $0x3e8] sm:$0xf]
        %v4241 = vld [vmem:[#allocation2 + $0x3ec] sm:$0xf]
        %v4242 = vld [vmem:[#allocation2 + $0x3f0] sm:$0xf]
        %v4243 = vld [vmem:[#allocation2 + $0x3f4] sm:$0xf]
        %v4244 = vld [vmem:[#allocation2 + $0x3f8] sm:$0xf]
        %v4245 = vld [vmem:[#allocation2 + $0x3fc] sm:$0xf]
        %v4310 = vunpack.c.l.b16 %v4182
        %v4311 = vunpack.c.l.b16 %v4183
        %v4312 = vunpack.c.l.b16 %v4184
        %v4313 = vunpack.c.l.b16 %v4185
        %v4314 = vunpack.c.l.b16 %v4186
        %v4315 = vunpack.c.l.b16 %v4187
        %v4316 = vunpack.c.l.b16 %v4188
        %v4317 = vunpack.c.l.b16 %v4189
        %v4318 = vunpack.c.l.b16 %v4190
        %v4319 = vunpack.c.l.b16 %v4191
        %v4320 = vunpack.c.l.b16 %v4192
        %v4321 = vunpack.c.l.b16 %v4193
        %v4322 = vunpack.c.l.b16 %v4194
        %v4323 = vunpack.c.l.b16 %v4195
        %v4324 = vunpack.c.l.b16 %v4196
        %v4325 = vunpack.c.l.b16 %v4197
        %v4326 = vunpack.c.l.b16 %v4198
        %v4327 = vunpack.c.l.b16 %v4199
        %v4328 = vunpack.c.l.b16 %v4200
        %v4329 = vunpack.c.l.b16 %v4201
        %v4330 = vunpack.c.l.b16 %v4202
        %v4331 = vunpack.c.l.b16 %v4203
        %v4332 = vunpack.c.l.b16 %v4204
        %v4333 = vunpack.c.l.b16 %v4205
        %v4334 = vunpack.c.l.b16 %v4206
        %v4335 = vunpack.c.l.b16 %v4207
        %v4336 = vunpack.c.l.b16 %v4208
        %v4337 = vunpack.c.l.b16 %v4209
        %v4338 = vunpack.c.l.b16 %v4210
        %v4339 = vunpack.c.l.b16 %v4211
        %v4340 = vunpack.c.l.b16 %v4212
        %v4341 = vunpack.c.l.b16 %v4213
        %v4342 = vunpack.c.l.b16 %v4214
        %v4343 = vunpack.c.l.b16 %v4215
        %v4344 = vunpack.c.l.b16 %v4216
        %v4345 = vunpack.c.l.b16 %v4217
        %v4346 = vunpack.c.l.b16 %v4218
        %v4347 = vunpack.c.l.b16 %v4219
        %v4348 = vunpack.c.l.b16 %v4220
        %v4349 = vunpack.c.l.b16 %v4221
        %v4350 = vunpack.c.l.b16 %v4222
        %v4351 = vunpack.c.l.b16 %v4223
        %v4352 = vunpack.c.l.b16 %v4224
        %v4353 = vunpack.c.l.b16 %v4225
        %v4354 = vunpack.c.l.b16 %v4226
        %v4355 = vunpack.c.l.b16 %v4227
        %v4356 = vunpack.c.l.b16 %v4228
        %v4357 = vunpack.c.l.b16 %v4229
        %v4358 = vunpack.c.l.b16 %v4230
        %v4359 = vunpack.c.l.b16 %v4231
        %v4360 = vunpack.c.l.b16 %v4232
        %v4361 = vunpack.c.l.b16 %v4233
        %v4362 = vunpack.c.l.b16 %v4234
        %v4363 = vunpack.c.l.b16 %v4235
        %v4364 = vunpack.c.l.b16 %v4236
        %v4365 = vunpack.c.l.b16 %v4237
        %v4366 = vunpack.c.l.b16 %v4238
        %v4367 = vunpack.c.l.b16 %v4239
        %v4368 = vunpack.c.l.b16 %v4240
        %v4369 = vunpack.c.l.b16 %v4241
        %v4370 = vunpack.c.l.b16 %v4242
        %v4371 = vunpack.c.l.b16 %v4243
        %v4372 = vunpack.c.l.b16 %v4244
        %v4373 = vunpack.c.l.b16 %v4245
        %v4374 = vpack.c.b16 %v4311, %v4310
        %v4375 = vpack.c.b16 %v4313, %v4312
        %v4376 = vpack.c.b16 %v4315, %v4314
        %v4377 = vpack.c.b16 %v4317, %v4316
        %v4378 = vpack.c.b16 %v4319, %v4318
        %v4379 = vpack.c.b16 %v4321, %v4320
        %v4380 = vpack.c.b16 %v4323, %v4322
        %v4381 = vpack.c.b16 %v4325, %v4324
        %v4382 = vpack.c.b16 %v4327, %v4326
        %v4383 = vpack.c.b16 %v4329, %v4328
        %v4384 = vpack.c.b16 %v4331, %v4330
        %v4385 = vpack.c.b16 %v4333, %v4332
        %v4386 = vpack.c.b16 %v4335, %v4334
        %v4387 = vpack.c.b16 %v4337, %v4336
        %v4388 = vpack.c.b16 %v4339, %v4338
        %v4389 = vpack.c.b16 %v4341, %v4340
        %v4390 = vpack.c.b16 %v4343, %v4342
        %v4391 = vpack.c.b16 %v4345, %v4344
        %v4392 = vpack.c.b16 %v4347, %v4346
        %v4393 = vpack.c.b16 %v4349, %v4348
        %v4394 = vpack.c.b16 %v4351, %v4350
        %v4395 = vpack.c.b16 %v4353, %v4352
        %v4396 = vpack.c.b16 %v4355, %v4354
        %v4397 = vpack.c.b16 %v4357, %v4356
        %v4398 = vpack.c.b16 %v4359, %v4358
        %v4399 = vpack.c.b16 %v4361, %v4360
        %v4400 = vpack.c.b16 %v4363, %v4362
        %v4401 = vpack.c.b16 %v4365, %v4364
        %v4402 = vpack.c.b16 %v4367, %v4366
        %v4403 = vpack.c.b16 %v4369, %v4368
        %v4404 = vpack.c.b16 %v4371, %v4370
        %v4405 = vpack.c.b16 %v4373, %v4372
        %4438 = vmatprep.subr.bf16.mxu0 0
        %4439 = vmatpush1.bf16.msra.mxu0 %v4381
        %4440 = vmatprep.subr.bf16.mxu0 0
        %4441 = vmatpush1.bf16.msra.mxu0 %v4380
        %4442 = vmatprep.subr.bf16.mxu0 0
        %4443 = vmatpush1.bf16.msra.mxu0 %v4379
        %4444 = vmatprep.subr.bf16.mxu0 0
        %4445 = vmatpush1.bf16.msra.mxu0 %v4378
        %4446 = vmatprep.subr.bf16.mxu0 0
        %4447 = vmatpush1.bf16.msra.mxu0 %v4377
        %4448 = vmatprep.subr.bf16.mxu0 0
        %4449 = vmatpush1.bf16.msra.mxu0 %v4376
        %4450 = vmatprep.subr.bf16.mxu0 0
        %4451 = vmatpush1.bf16.msra.mxu0 %v4375
        %4452 = vmatprep.subr.bf16.mxu0 0
        %4453 = vmatpush1.bf16.msra.mxu0 %v4374
        %4454 = vmatprep.subr.bf16.mxu0 0
        %4455 = vmatpush2.bf16.msra.mxu0 %v4389
        %4456 = vmatprep.subr.bf16.mxu0 0
        %4457 = vmatpush2.bf16.msra.mxu0 %v4388
        %4458 = vmatprep.subr.bf16.mxu0 0
        %4459 = vmatpush2.bf16.msra.mxu0 %v4387
        %4460 = vmatprep.subr.bf16.mxu0 0
        %4461 = vmatpush2.bf16.msra.mxu0 %v4386
        %4462 = vmatprep.subr.bf16.mxu0 0
        %4463 = vmatpush2.bf16.msra.mxu0 %v4385
        %4464 = vmatprep.subr.bf16.mxu0 0
        %4465 = vmatpush2.bf16.msra.mxu0 %v4384
        %4466 = vmatprep.subr.bf16.mxu0 0
        %4467 = vmatpush2.bf16.msra.mxu0 %v4383
        %4468 = vmatprep.subr.bf16.mxu0 0
        %4469 = vmatpush2.bf16.msra.mxu0 %v4382
        %4470 = vmatprep.mubr.bf16.mxu0 %v4119
        %4471 = vmatmul.mubr.bf16.gmra.mxu0 %v4118
        %v4472 = vpop.f32.mrf.mxu0
        %v4473 = vadd.f32 0.0, %v4472
        %v4474 = vpop.f32.mrf.mxu0
        %v4475 = vpop.f32.mrf.mxu0
        %v4476 = vadd.f32 0.0, %v4475
        %v4477 = vpop.f32.mrf.mxu0
        %4478 = vmatprep.mubr.bf16.mxu0 %v4123
        %4479 = vmatmul.mubr.bf16.gmra.mxu0 %v4122
        %v4480 = vpop.f32.mrf.mxu0
        %v4481 = vadd.f32 0.0, %v4480
        %v4482 = vpop.f32.mrf.mxu0
        %v4483 = vpop.f32.mrf.mxu0
        %v4484 = vadd.f32 0.0, %v4483
        %v4485 = vpop.f32.mrf.mxu0
        %4486 = vmatprep.mubr.bf16.mxu0 %v4127
        %4487 = vmatmul.mubr.bf16.gmra.mxu0 %v4126
        %v4488 = vpop.f32.mrf.mxu0
        %v4489 = vadd.f32 0.0, %v4488
        %v4490 = vpop.f32.mrf.mxu0
        %v4491 = vpop.f32.mrf.mxu0
        %v4492 = vadd.f32 0.0, %v4491
        %v4493 = vpop.f32.mrf.mxu0
        %4494 = vmatprep.mubr.bf16.mxu0 %v4131
        %4495 = vmatmul.mubr.bf16.gmra.mxu0 %v4130
        %v4496 = vpop.f32.mrf.mxu0
        %v4497 = vadd.f32 0.0, %v4496
        %v4498 = vpop.f32.mrf.mxu0
        %v4499 = vpop.f32.mrf.mxu0
        %v4500 = vadd.f32 0.0, %v4499
        %v4501 = vpop.f32.mrf.mxu0
        %4502 = vmatprep.mubr.bf16.mxu0 %v4135
        %4503 = vmatmul.mubr.bf16.gmra.mxu0 %v4134
        %v4504 = vpop.f32.mrf.mxu0
        %v4505 = vadd.f32 0.0, %v4504
        %v4506 = vpop.f32.mrf.mxu0
        %v4507 = vpop.f32.mrf.mxu0
        %v4508 = vadd.f32 0.0, %v4507
        %v4509 = vpop.f32.mrf.mxu0
        %4510 = vmatprep.mubr.bf16.mxu0 %v4139
        %4511 = vmatmul.mubr.bf16.gmra.mxu0 %v4138
        %v4512 = vpop.f32.mrf.mxu0
        %v4513 = vadd.f32 0.0, %v4512
        %v4514 = vpop.f32.mrf.mxu0
        %v4515 = vpop.f32.mrf.mxu0
        %v4516 = vadd.f32 0.0, %v4515
        %v4517 = vpop.f32.mrf.mxu0
        %4518 = vmatprep.mubr.bf16.mxu0 %v4143
        %4519 = vmatmul.mubr.bf16.gmra.mxu0 %v4142
        %v4520 = vpop.f32.mrf.mxu0
        %v4521 = vadd.f32 0.0, %v4520
        %v4522 = vpop.f32.mrf.mxu0
        %v4523 = vpop.f32.mrf.mxu0
        %v4524 = vadd.f32 0.0, %v4523
        %v4525 = vpop.f32.mrf.mxu0
        %4526 = vmatprep.mubr.bf16.mxu0 %v4147
        %4527 = vmatmul.mubr.bf16.gmra.mxu0 %v4146
        %v4528 = vpop.f32.mrf.mxu0
        %v4529 = vadd.f32 0.0, %v4528
        %v4530 = vpop.f32.mrf.mxu0
        %v4531 = vpop.f32.mrf.mxu0
        %v4532 = vadd.f32 0.0, %v4531
        %v4533 = vpop.f32.mrf.mxu0
        %4534 = vmatprep.mubr.bf16.mxu0 %v4151
        %4535 = vmatmul.mubr.bf16.gmra.mxu0 %v4150
        %v4536 = vpop.f32.mrf.mxu0
        %v4537 = vadd.f32 0.0, %v4536
        %v4538 = vpop.f32.mrf.mxu0
        %v4539 = vpop.f32.mrf.mxu0
        %v4540 = vadd.f32 0.0, %v4539
        %v4541 = vpop.f32.mrf.mxu0
        %4542 = vmatprep.mubr.bf16.mxu0 %v4155
        %4543 = vmatmul.mubr.bf16.gmra.mxu0 %v4154
        %v4544 = vpop.f32.mrf.mxu0
        %v4545 = vadd.f32 0.0, %v4544
        %v4546 = vpop.f32.mrf.mxu0
        %v4547 = vpop.f32.mrf.mxu0
        %v4548 = vadd.f32 0.0, %v4547
        %v4549 = vpop.f32.mrf.mxu0
        %4550 = vmatprep.mubr.bf16.mxu0 %v4159
        %4551 = vmatmul.mubr.bf16.gmra.mxu0 %v4158
        %v4552 = vpop.f32.mrf.mxu0
        %v4553 = vadd.f32 0.0, %v4552
        %v4554 = vpop.f32.mrf.mxu0
        %v4555 = vpop.f32.mrf.mxu0
        %v4556 = vadd.f32 0.0, %v4555
        %v4557 = vpop.f32.mrf.mxu0
        %4558 = vmatprep.mubr.bf16.mxu0 %v4163
        %4559 = vmatmul.mubr.bf16.gmra.mxu0 %v4162
        %v4560 = vpop.f32.mrf.mxu0
        %v4561 = vadd.f32 0.0, %v4560
        %v4562 = vpop.f32.mrf.mxu0
        %v4563 = vpop.f32.mrf.mxu0
        %v4564 = vadd.f32 0.0, %v4563
        %v4565 = vpop.f32.mrf.mxu0
        %4566 = vmatprep.mubr.bf16.mxu0 %v4167
        %4567 = vmatmul.mubr.bf16.gmra.mxu0 %v4166
        %v4568 = vpop.f32.mrf.mxu0
        %v4569 = vadd.f32 0.0, %v4568
        %v4570 = vpop.f32.mrf.mxu0
        %v4571 = vpop.f32.mrf.mxu0
        %v4572 = vadd.f32 0.0, %v4571
        %v4573 = vpop.f32.mrf.mxu0
        %4574 = vmatprep.mubr.bf16.mxu0 %v4171
        %4575 = vmatmul.mubr.bf16.gmra.mxu0 %v4170
        %v4576 = vpop.f32.mrf.mxu0
        %v4577 = vadd.f32 0.0, %v4576
        %v4578 = vpop.f32.mrf.mxu0
        %v4579 = vpop.f32.mrf.mxu0
        %v4580 = vadd.f32 0.0, %v4579
        %v4581 = vpop.f32.mrf.mxu0
        %4582 = vmatprep.mubr.bf16.mxu0 %v4175
        %4583 = vmatmul.mubr.bf16.gmra.mxu0 %v4174
        %v4584 = vpop.f32.mrf.mxu0
        %v4585 = vadd.f32 0.0, %v4584
        %v4586 = vpop.f32.mrf.mxu0
        %v4587 = vpop.f32.mrf.mxu0
        %v4588 = vadd.f32 0.0, %v4587
        %v4589 = vpop.f32.mrf.mxu0
        %4590 = vmatprep.mubr.bf16.mxu0 %v4179
        %4591 = vmatmul.mubr.bf16.gmra.mxu0 %v4178
        %v4592 = vpop.f32.mrf.mxu0
        %v4593 = vadd.f32 0.0, %v4592
        %v4594 = vpop.f32.mrf.mxu0
        %v4595 = vpop.f32.mrf.mxu0
        %v4596 = vadd.f32 0.0, %v4595
        %v4597 = vpop.f32.mrf.mxu0
        %4598 = vdwg.mxu0
        %4599 = vmatprep.subr.bf16.mxu0 0
        %4600 = vmatpush1.bf16.msra.mxu0 %v4397
        %4601 = vmatprep.subr.bf16.mxu0 0
        %4602 = vmatpush1.bf16.msra.mxu0 %v4396
        %4603 = vmatprep.subr.bf16.mxu0 0
        %4604 = vmatpush1.bf16.msra.mxu0 %v4395
        %4605 = vmatprep.subr.bf16.mxu0 0
        %4606 = vmatpush1.bf16.msra.mxu0 %v4394
        %4607 = vmatprep.subr.bf16.mxu0 0
        %4608 = vmatpush1.bf16.msra.mxu0 %v4393
        %4609 = vmatprep.subr.bf16.mxu0 0
        %4610 = vmatpush1.bf16.msra.mxu0 %v4392
        %4611 = vmatprep.subr.bf16.mxu0 0
        %4612 = vmatpush1.bf16.msra.mxu0 %v4391
        %4613 = vmatprep.subr.bf16.mxu0 0
        %4614 = vmatpush1.bf16.msra.mxu0 %v4390
        %4615 = vmatprep.subr.bf16.mxu0 0
        %4616 = vmatpush2.bf16.msra.mxu0 %v4405
        %4617 = vmatprep.subr.bf16.mxu0 0
        %4618 = vmatpush2.bf16.msra.mxu0 %v4404
        %4619 = vmatprep.subr.bf16.mxu0 0
        %4620 = vmatpush2.bf16.msra.mxu0 %v4403
        %4621 = vmatprep.subr.bf16.mxu0 0
        %4622 = vmatpush2.bf16.msra.mxu0 %v4402
        %4623 = vmatprep.subr.bf16.mxu0 0
        %4624 = vmatpush2.bf16.msra.mxu0 %v4401
        %4625 = vmatprep.subr.bf16.mxu0 0
        %4626 = vmatpush2.bf16.msra.mxu0 %v4400
        %4627 = vmatprep.subr.bf16.mxu0 0
        %4628 = vmatpush2.bf16.msra.mxu0 %v4399
        %4629 = vmatprep.subr.bf16.mxu0 0
        %4630 = vmatpush2.bf16.msra.mxu0 %v4398
        %4631 = vmatprep.mubr.bf16.mxu0 %v4121
        %4632 = vmatmul.mubr.bf16.gmra.mxu0 %v4120
        %v4633 = vpop.f32.mrf.mxu0
        %v4634 = vadd.f32 %v4473, %v4633
        %v4635 = vpop.f32.mrf.mxu0
        %v4636 = vpop.f32.mrf.mxu0
        %v4637 = vadd.f32 %v4476, %v4636
        %v4638 = vpop.f32.mrf.mxu0
        %4639 = vmatprep.mubr.bf16.mxu0 %v4125
        %4640 = vmatmul.mubr.bf16.gmra.mxu0 %v4124
        %v4641 = vpop.f32.mrf.mxu0
        %v4642 = vadd.f32 %v4481, %v4641
        %v4643 = vpop.f32.mrf.mxu0
        %v4644 = vpop.f32.mrf.mxu0
        %v4645 = vadd.f32 %v4484, %v4644
        %v4646 = vpop.f32.mrf.mxu0
        %4647 = vmatprep.mubr.bf16.mxu0 %v4129
        %4648 = vmatmul.mubr.bf16.gmra.mxu0 %v4128
        %v4649 = vpop.f32.mrf.mxu0
        %v4650 = vadd.f32 %v4489, %v4649
        %v4651 = vpop.f32.mrf.mxu0
        %v4652 = vpop.f32.mrf.mxu0
        %v4653 = vadd.f32 %v4492, %v4652
        %v4654 = vpop.f32.mrf.mxu0
        %4655 = vmatprep.mubr.bf16.mxu0 %v4133
        %4656 = vmatmul.mubr.bf16.gmra.mxu0 %v4132
        %v4657 = vpop.f32.mrf.mxu0
        %v4658 = vadd.f32 %v4497, %v4657
        %v4659 = vpop.f32.mrf.mxu0
        %v4660 = vpop.f32.mrf.mxu0
        %v4661 = vadd.f32 %v4500, %v4660
        %v4662 = vpop.f32.mrf.mxu0
        %4663 = vmatprep.mubr.bf16.mxu0 %v4137
        %4664 = vmatmul.mubr.bf16.gmra.mxu0 %v4136
        %v4665 = vpop.f32.mrf.mxu0
        %v4666 = vadd.f32 %v4505, %v4665
        %v4667 = vpop.f32.mrf.mxu0
        %v4668 = vpop.f32.mrf.mxu0
        %v4669 = vadd.f32 %v4508, %v4668
        %v4670 = vpop.f32.mrf.mxu0
        %4671 = vmatprep.mubr.bf16.mxu0 %v4141
        %4672 = vmatmul.mubr.bf16.gmra.mxu0 %v4140
        %v4673 = vpop.f32.mrf.mxu0
        %v4674 = vadd.f32 %v4513, %v4673
        %v4675 = vpop.f32.mrf.mxu0
        %v4676 = vpop.f32.mrf.mxu0
        %v4677 = vadd.f32 %v4516, %v4676
        %v4678 = vpop.f32.mrf.mxu0
        %4679 = vmatprep.mubr.bf16.mxu0 %v4145
        %4680 = vmatmul.mubr.bf16.gmra.mxu0 %v4144
        %v4681 = vpop.f32.mrf.mxu0
        %v4682 = vadd.f32 %v4521, %v4681
        %v4683 = vpop.f32.mrf.mxu0
        %v4684 = vpop.f32.mrf.mxu0
        %v4685 = vadd.f32 %v4524, %v4684
        %v4686 = vpop.f32.mrf.mxu0
        %4687 = vmatprep.mubr.bf16.mxu0 %v4149
        %4688 = vmatmul.mubr.bf16.gmra.mxu0 %v4148
        %v4689 = vpop.f32.mrf.mxu0
        %v4690 = vadd.f32 %v4529, %v4689
        %v4691 = vpop.f32.mrf.mxu0
        %v4692 = vpop.f32.mrf.mxu0
        %v4693 = vadd.f32 %v4532, %v4692
        %v4694 = vpop.f32.mrf.mxu0
        %4695 = vmatprep.mubr.bf16.mxu0 %v4153
        %4696 = vmatmul.mubr.bf16.gmra.mxu0 %v4152
        %v4697 = vpop.f32.mrf.mxu0
        %v4698 = vadd.f32 %v4537, %v4697
        %v4699 = vpop.f32.mrf.mxu0
        %v4700 = vpop.f32.mrf.mxu0
        %v4701 = vadd.f32 %v4540, %v4700
        %v4702 = vpop.f32.mrf.mxu0
        %4703 = vmatprep.mubr.bf16.mxu0 %v4157
        %4704 = vmatmul.mubr.bf16.gmra.mxu0 %v4156
        %v4705 = vpop.f32.mrf.mxu0
        %v4706 = vadd.f32 %v4545, %v4705
        %v4707 = vpop.f32.mrf.mxu0
        %v4708 = vpop.f32.mrf.mxu0
        %v4709 = vadd.f32 %v4548, %v4708
        %v4710 = vpop.f32.mrf.mxu0
        %4711 = vmatprep.mubr.bf16.mxu0 %v4161
        %4712 = vmatmul.mubr.bf16.gmra.mxu0 %v4160
        %v4713 = vpop.f32.mrf.mxu0
        %v4714 = vadd.f32 %v4553, %v4713
        %v4715 = vpop.f32.mrf.mxu0
        %v4716 = vpop.f32.mrf.mxu0
        %v4717 = vadd.f32 %v4556, %v4716
        %v4718 = vpop.f32.mrf.mxu0
        %4719 = vmatprep.mubr.bf16.mxu0 %v4165
        %4720 = vmatmul.mubr.bf16.gmra.mxu0 %v4164
        %v4721 = vpop.f32.mrf.mxu0
        %v4722 = vadd.f32 %v4561, %v4721
        %v4723 = vpop.f32.mrf.mxu0
        %v4724 = vpop.f32.mrf.mxu0
        %v4725 = vadd.f32 %v4564, %v4724
        %v4726 = vpop.f32.mrf.mxu0
        %4727 = vmatprep.mubr.bf16.mxu0 %v4169
        %4728 = vmatmul.mubr.bf16.gmra.mxu0 %v4168
        %v4729 = vpop.f32.mrf.mxu0
        %v4730 = vadd.f32 %v4569, %v4729
        %v4731 = vpop.f32.mrf.mxu0
        %v4732 = vpop.f32.mrf.mxu0
        %v4733 = vadd.f32 %v4572, %v4732
        %v4734 = vpop.f32.mrf.mxu0
        %4735 = vmatprep.mubr.bf16.mxu0 %v4173
        %4736 = vmatmul.mubr.bf16.gmra.mxu0 %v4172
        %v4737 = vpop.f32.mrf.mxu0
        %v4738 = vadd.f32 %v4577, %v4737
        %v4739 = vpop.f32.mrf.mxu0
        %v4740 = vpop.f32.mrf.mxu0
        %v4741 = vadd.f32 %v4580, %v4740
        %v4742 = vpop.f32.mrf.mxu0
        %4743 = vmatprep.mubr.bf16.mxu0 %v4177
        %4744 = vmatmul.mubr.bf16.gmra.mxu0 %v4176
        %v4745 = vpop.f32.mrf.mxu0
        %v4746 = vadd.f32 %v4585, %v4745
        %v4747 = vpop.f32.mrf.mxu0
        %v4748 = vpop.f32.mrf.mxu0
        %v4749 = vadd.f32 %v4588, %v4748
        %v4750 = vpop.f32.mrf.mxu0
        %4751 = vmatprep.mubr.bf16.mxu0 %v4181
        %4752 = vmatmul.mubr.bf16.gmra.mxu0 %v4180
        %v4753 = vpop.f32.mrf.mxu0
        %v4754 = vadd.f32 %v4593, %v4753
        %v4755 = vpop.f32.mrf.mxu0
        %v4756 = vpop.f32.mrf.mxu0
        %v4757 = vadd.f32 %v4596, %v4756
        %v4758 = vpop.f32.mrf.mxu0
        %4759 = vdwg.mxu0
        %v4760 = vadd.f32 %v3647, %v4634
        %v4761 = vadd.f32 %v3648, %v4637
        %v4762 = vadd.f32 %v3649, %v4642
        %v4763 = vadd.f32 %v3650, %v4645
        %v4764 = vadd.f32 %v3651, %v4650
        %v4765 = vadd.f32 %v3652, %v4653
        %v4766 = vadd.f32 %v3653, %v4658
        %v4767 = vadd.f32 %v3654, %v4661
        %v4768 = vadd.f32 %v3655, %v4666
        %v4769 = vadd.f32 %v3656, %v4669
        %v4770 = vadd.f32 %v3657, %v4674
        %v4771 = vadd.f32 %v3658, %v4677
        %v4772 = vadd.f32 %v3659, %v4682
        %v4773 = vadd.f32 %v3660, %v4685
        %v4774 = vadd.f32 %v3661, %v4690
        %v4775 = vadd.f32 %v3662, %v4693
        %v4776 = vadd.f32 %v3663, %v4698
        %v4777 = vadd.f32 %v3664, %v4701
        %v4778 = vadd.f32 %v3665, %v4706
        %v4779 = vadd.f32 %v3666, %v4709
        %v4780 = vadd.f32 %v3667, %v4714
        %v4781 = vadd.f32 %v3668, %v4717
        %v4782 = vadd.f32 %v3669, %v4722
        %v4783 = vadd.f32 %v3670, %v4725
        %v4784 = vadd.f32 %v3671, %v4730
        %v4785 = vadd.f32 %v3672, %v4733
        %v4786 = vadd.f32 %v3673, %v4738
        %v4787 = vadd.f32 %v3674, %v4741
        %v4788 = vadd.f32 %v3675, %v4746
        %v4789 = vadd.f32 %v3676, %v4749
        %v4790 = vadd.f32 %v3677, %v4754
        %v4791 = vadd.f32 %v3678, %v4757
        %v4792 = vld [vmem:[%s4] sm:$0x1]
        %v4794 = vlaneseq
        %v4795 = vshrl.u32 %v4794, 7
        %v4796 = vsub.s32 0, %v4795
        %v4797 = vrot.slane %v4792, %v4796
        %v4799 = vadd.f32 %v4760, %v4797
        %v4800 = vadd.f32 %v4761, %v4797
        %v4801 = vadd.f32 %v4762, %v4797
        %v4802 = vadd.f32 %v4763, %v4797
        %v4803 = vadd.f32 %v4764, %v4797
        %v4804 = vadd.f32 %v4765, %v4797
        %v4805 = vadd.f32 %v4766, %v4797
        %v4806 = vadd.f32 %v4767, %v4797
        %v4807 = vadd.f32 %v4768, %v4797
        %v4808 = vadd.f32 %v4769, %v4797
        %v4809 = vadd.f32 %v4770, %v4797
        %v4810 = vadd.f32 %v4771, %v4797
        %v4811 = vadd.f32 %v4772, %v4797
        %v4812 = vadd.f32 %v4773, %v4797
        %v4813 = vadd.f32 %v4774, %v4797
        %v4814 = vadd.f32 %v4775, %v4797
        %v4815 = vadd.f32 %v4776, %v4797
        %v4816 = vadd.f32 %v4777, %v4797
        %v4817 = vadd.f32 %v4778, %v4797
        %v4818 = vadd.f32 %v4779, %v4797
        %v4819 = vadd.f32 %v4780, %v4797
        %v4820 = vadd.f32 %v4781, %v4797
        %v4821 = vadd.f32 %v4782, %v4797
        %v4822 = vadd.f32 %v4783, %v4797
        %v4823 = vadd.f32 %v4784, %v4797
        %v4824 = vadd.f32 %v4785, %v4797
        %v4825 = vadd.f32 %v4786, %v4797
        %v4826 = vadd.f32 %v4787, %v4797
        %v4827 = vadd.f32 %v4788, %v4797
        %v4828 = vadd.f32 %v4789, %v4797
        %v4829 = vadd.f32 %v4790, %v4797
        %v4830 = vadd.f32 %v4791, %v4797
        %4831 = vst [vmem:[%s233] sm:$0xff] %v4799
        %4832 = vst [vmem:[%s233 + $0x8] sm:$0xff] %v4800
        %4833 = vst [vmem:[%s233 + $0x10] sm:$0xff] %v4801
        %4834 = vst [vmem:[%s233 + $0x18] sm:$0xff] %v4802
        %4835 = vst [vmem:[%s233 + $0x20] sm:$0xff] %v4803
        %4836 = vst [vmem:[%s233 + $0x28] sm:$0xff] %v4804
        %4837 = vst [vmem:[%s233 + $0x30] sm:$0xff] %v4805
        %4838 = vst [vmem:[%s233 + $0x38] sm:$0xff] %v4806
        %4839 = vst [vmem:[%s233 + $0x40] sm:$0xff] %v4807
        %4840 = vst [vmem:[%s233 + $0x48] sm:$0xff] %v4808
        %4841 = vst [vmem:[%s233 + $0x50] sm:$0xff] %v4809
        %4842 = vst [vmem:[%s233 + $0x58] sm:$0xff] %v4810
        %4843 = vst [vmem:[%s233 + $0x60] sm:$0xff] %v4811
        %4844 = vst [vmem:[%s233 + $0x68] sm:$0xff] %v4812
        %4845 = vst [vmem:[%s233 + $0x70] sm:$0xff] %v4813
        %4846 = vst [vmem:[%s233 + $0x78] sm:$0xff] %v4814
        %4847 = vst [vmem:[%s233 + $0x80] sm:$0xff] %v4815
        %4848 = vst [vmem:[%s233 + $0x88] sm:$0xff] %v4816
        %4849 = vst [vmem:[%s233 + $0x90] sm:$0xff] %v4817
        %4850 = vst [vmem:[%s233 + $0x98] sm:$0xff] %v4818
        %4851 = vst [vmem:[%s233 + $0xa0] sm:$0xff] %v4819
        %4852 = vst [vmem:[%s233 + $0xa8] sm:$0xff] %v4820
        %4853 = vst [vmem:[%s233 + $0xb0] sm:$0xff] %v4821
        %4854 = vst [vmem:[%s233 + $0xb8] sm:$0xff] %v4822
        %4855 = vst [vmem:[%s233 + $0xc0] sm:$0xff] %v4823
        %4856 = vst [vmem:[%s233 + $0xc8] sm:$0xff] %v4824
        %4857 = vst [vmem:[%s233 + $0xd0] sm:$0xff] %v4825
        %4858 = vst [vmem:[%s233 + $0xd8] sm:$0xff] %v4826
        %4859 = vst [vmem:[%s233 + $0xe0] sm:$0xff] %v4827
        %4860 = vst [vmem:[%s233 + $0xe8] sm:$0xff] %v4828
        %4861 = vst [vmem:[%s233 + $0xf0] sm:$0xff] %v4829
        %4862 = vst [vmem:[%s233 + $0xf8] sm:$0xff] %v4830
        %s4863 = sand.u32 %s138, 1
        %s4864 = scalar_lea.sflag [#allocation4], %s4863
        %s4865 = sand.u32 %s138, 1
        %s4866 = smul.addr %s4865, 256
        %s4867 = scalar_lea.vmem [#allocation5], %s4866
        // Predicated region
        $region45: #{_feature_extractor_v2_forward.1} parent=39 // pred_check
          %p4868 = pneg %p148
        $region46: #{_feature_extractor_v2_forward.1} parent=39 // pred_check_branch
          %4870 = sbr.rel (%p4868) target = $region48
        $region47: #{_feature_extractor_v2_forward.1} parent=39 // pred_region
          %s4871 = smul.u32 32, %s20
          %s4873 = ssub.s32 4096, 4096
          %4874 = vsyncadd %s4864, %s4873
          %s4875 = smul.addr %s4871, 128
          %s4876 = scalar_lea.hbm %s5, %s4875
          %s4877 = sshll.u32 %s4867, 4
          %s4878 = int_to_ptr.vmem [resolvable:$true] %s4877
          %4883 = dma.vmem_to_hbm [thread:$0]  %s4878, 4096, %s4876, %s4864, 128, 128, 8
        $region48: #{_feature_extractor_v2_forward.1} parent=39 // pred_fallthru
          _
      $region40: #{_feature_extractor_v2_forward.1} parent=5 // pred_fallthru
        _
      %p4884 = scmp.le.s32.totalorder 2, %s15
      // Predicated region
      $region49: #{_feature_extractor_v2_forward.1} parent=5 // pred_check
        %p4885 = pneg %p4884
      $region50: #{_feature_extractor_v2_forward.1} parent=5 // pred_check_branch
        %4887 = sbr.rel (%p4885) target = $region52
      $region51: #{_feature_extractor_v2_forward.1} parent=5 // pred_region
        %s4888 = ssub.s32 %s15, 2
        // Predicated region
        $region53: #{_feature_extractor_v2_forward.1} parent=51 // pred_check
          %p4889 = pneg %p154
        $region54: #{_feature_extractor_v2_forward.1} parent=51 // pred_check_branch
          %4891 = sbr.rel (%p4889) target = $region56
        $region55: #{_feature_extractor_v2_forward.1} parent=51 // pred_region
          %s4892 = sand.u32 %s139, 1
          %s4893 = scalar_lea.sflag [#allocation4], %s4892
          %s4894 = sand.u32 %s139, 1
          %s4895 = smul.addr %s4894, 256
          %s4896 = scalar_lea.vmem [#allocation5], %s4895
          %4897 = dma.done %s4893, 4096
        $region56: #{_feature_extractor_v2_forward.1} parent=51 // pred_fallthru
          _
      $region52: #{_feature_extractor_v2_forward.1} parent=5 // pred_fallthru
        _
    $region6: #{_feature_extractor_v2_forward.1} parent=1 // loop_footer
      %s19 = sadd.s32 1, %s15
    $region7: #{_feature_extractor_v2_forward.1} parent=1 // loop_footer_branch
      %14 = sbr.rel target = $region3
    $region8: #{_feature_extractor_v2_forward.1} parent=1 // loop_exit
      _
    %4898 = vsyncpa [#allocation3], 1
    %s4899 = scalar_lea.sflag [#allocation3], 1
    %4900 = vsyncpa %s4899, 1
    %4901 = vsyncpa [#allocation4], 1
    %s4902 = scalar_lea.sflag [#allocation4], 1
    %4903 = vsyncpa %s4902, 1

</llo_original>
